<compile_context>
chip_gen: v7x
topology: tpu7x:2x2x1
jax: 0.10.0
libtpu: 0.0.40
codegen_flags: <defaults>
</compile_context>

<pallas_src>
import functools

import numpy as np
import jax
import jax.numpy as jnp
from jax.experimental import pallas as pl
from jax.experimental.pallas import tpu as pltpu

# Flip to jnp.bfloat16 on v6e/v7x to halve HBM/VMEM traffic and hit the fast MXU
# path (accumulation stays f32).  Kept at f32 so numerics match the PyTorch module.
COMPUTE_DTYPE = jnp.float32

_LANE = 128                      # TPU lane width; all channel dims padded to this
_K = 5                           # conv kernel size
_GROUP = 32                      # output-lane group per pooling corner (4 * 32 = 128)
_VMEM_LIMIT = 32 * 1024 * 1024


def _round_up(x, m):
    return ((x + m - 1) // m) * m


# ----------------------------- Pallas kernels ------------------------------ #

def _conv_relu_pool_kernel(x_ref, m_ref, b_ref, o_ref, *, ws, r_out):
    """Fused 5x5 valid conv + bias + ReLU + 2x2/2 max-pool for one image.

    x_ref: (1, r_store, 128) space-to-depth input, flattened row-major over the
           half-resolution grid of width `ws`; lanes hold (rh, rw, cin), zero
           padded to 128.
    m_ref: (9, 128, 128)     packed weights, index = sh*3 + sw.  Output lanes are
           split into four 32-lane groups, one per pooling corner (dh, dw), so a
           single matmul per tap evaluates all four corners.
    b_ref: (1, 128)          bias (zero padded, f32).
    o_ref: (1, r_out, 128)   pooled output rows p = ho2*ws + wo2; lanes [0, cout)
           hold the result, the rest is don't-care (sliced away downstream).
    """
    acc = None
    for sh in range(3):                      # vertical tap on the s2d grid
        for sw in range(3):                  # horizontal tap on the s2d grid
            shift = sh * ws + sw
            part = jnp.dot(
                x_ref[0, shift:shift + r_out, :],
                m_ref[sh * 3 + sw],
                preferred_element_type=jnp.float32,
            )
            acc = part if acc is None else acc + part
    # 2x2 max-pool == max across the four 32-lane corner groups: two XLU lane
    # rotations (+32, +64 lanes) + two VPU maxes.  Group offsets are cyclic with
    # period 128, so the rotation direction does not matter.
    m1 = jnp.maximum(acc, pltpu.roll(acc, shift=_GROUP, axis=1))
    m2 = jnp.maximum(m1, pltpu.roll(m1, shift=2 * _GROUP, axis=1))
    # Bias + ReLU once, after the pooling max (commutes with max; broadcast
    # hoisted out of the tap loop).  Full 128-lane dense store.
    o_ref[0] = jnp.maximum(m2 + b_ref[...], 0.0).astype(o_ref.dtype)


def _mlp_kernel(x_ref, w1_ref, b1_ref, w2_ref, b2_ref, w3_ref, b3_ref, o_ref):
    """Fused fc1 -> ReLU -> fc2 -> ReLU -> fc3 on one row tile (dims padded to 128)."""
    h = jnp.dot(x_ref[...], w1_ref[...], preferred_element_type=jnp.float32)
    h = jnp.maximum(h + b1_ref[...], 0.0)
    h = jnp.dot(h.astype(w2_ref.dtype), w2_ref[...], preferred_element_type=jnp.float32)
    h = jnp.maximum(h + b2_ref[...], 0.0)
    h = jnp.dot(h.astype(w3_ref.dtype), w3_ref[...], preferred_element_type=jnp.float32)
    o_ref[...] = (h + b3_ref[...]).astype(o_ref.dtype)


# ------------------------------ kernel wrappers ----------------------------- #

def conv_relu_pool_stage(x2, m, b, *, ws, r_out):
    """x2: (N, r_store, 128) s2d input; returns (N, r_out, 128) pooled activations."""
    n, r_store, lanes = x2.shape
    kernel = functools.partial(_conv_relu_pool_kernel, ws=ws, r_out=r_out)
    return pl.pallas_call(
        kernel,
        out_shape=jax.ShapeDtypeStruct((n, r_out, lanes), x2.dtype),
        grid_spec=pltpu.PrefetchScalarGridSpec(
            num_scalar_prefetch=0,
            grid=(n,),
            in_specs=[
                pl.BlockSpec((1, r_store, lanes), lambda i: (i, 0, 0)),
                pl.BlockSpec(m.shape, lambda i: (0, 0, 0)),   # weights: VMEM resident
                pl.BlockSpec(b.shape, lambda i: (0, 0)),
            ],
            out_specs=pl.BlockSpec((1, r_out, lanes), lambda i: (i, 0, 0)),
        ),
        compiler_params=pltpu.CompilerParams(
            dimension_semantics=("parallel",),
            vmem_limit_bytes=_VMEM_LIMIT,
        ),
    )(x2, m, b)


def mlp_fused(feats, w1, b1, w2, b2, w3, b3, *, tm):
    rows, k = feats.shape
    return pl.pallas_call(
        _mlp_kernel,
        out_shape=jax.ShapeDtypeStruct((rows, _LANE), jnp.float32),
        grid_spec=pltpu.PrefetchScalarGridSpec(
            num_scalar_prefetch=0,
            grid=(rows // tm,),
            in_specs=[
                pl.BlockSpec((tm, k), lambda i: (i, 0)),
                pl.BlockSpec(w1.shape, lambda i: (0, 0)),
                pl.BlockSpec(b1.shape, lambda i: (0, 0)),
                pl.BlockSpec(w2.shape, lambda i: (0, 0)),
                pl.BlockSpec(b2.shape, lambda i: (0, 0)),
                pl.BlockSpec(w3.shape, lambda i: (0, 0)),
                pl.BlockSpec(b3.shape, lambda i: (0, 0)),
            ],
            out_specs=pl.BlockSpec((tm, _LANE), lambda i: (i, 0)),
        ),
        compiler_params=pltpu.CompilerParams(
            dimension_semantics=("parallel",),
            vmem_limit_bytes=_VMEM_LIMIT,
        ),
    )(feats, w1, b1, w2, b2, w3, b3)


# ------------------------------- layout glue -------------------------------- #

def _stage_geometry(h, w):
    """Geometry of one conv(5x5, valid) + pool(2x2) stage on an h x w input."""
    hs, ws = h // 2, w // 2                           # space-to-depth grid
    hp, wp = (h - _K + 1) // 2, (w - _K + 1) // 2     # pooled output spatial dims
    r_out = _round_up(hp * ws, 8)                     # output rows p = ho2*ws + wo2
    r_store = _round_up(max(hs * ws, r_out + 2 * ws + 2), 8)  # input rows incl. pad
    return hs, ws, hp, wp, r_out, r_store


def _space_to_depth(x_nhwc, r_store, dtype):
    """(N, H, W, C) -> (N, r_store, 128): fold 2x2 pixel blocks into lanes, pad."""
    n, h, w, c = x_nhwc.shape
    hs, ws = h // 2, w // 2
    x = x_nhwc.reshape(n, hs, 2, ws, 2, c).transpose(0, 1, 3, 2, 4, 5)
    x = x.reshape(n, hs * ws, 4 * c).astype(dtype)
    return jnp.pad(x, ((0, 0), (0, r_store - hs * ws), (0, _LANE - 4 * c)))


# --------------------------- parameter preparation --------------------------- #

def _pack_conv_pool_weights(w_oikk):
    """Torch conv weight (Cout, Cin, 5, 5) -> (9, 128, 128) fused conv+pool matrices.

    corner(dh,dw)[ho2,wo2,co] = sum_{sh,sw} x2[ho2+sh, wo2+sw, :] @ M[sh,sw][:, g*32+co]
    with x2 the space-to-depth input (lane ch = (rh*2+rw)*Cin + ci), pooling-corner
    group g = dh*2 + dw, and M[sh,sw][ch, g*32+co] = w[co, ci, kh, kw] where
    kh = 2*sh + rh - dh, kw = 2*sw + rw - dw (zero when out of the 5x5 window).
    """
    w = np.asarray(jax.device_get(w_oikk), np.float32)
    cout, cin = w.shape[0], w.shape[1]
    assert cout <= _GROUP and 4 * cin <= _LANE
    m = np.zeros((9, _LANE, _LANE), np.float32)
    for sh in range(3):
        for sw in range(3):
            tap = sh * 3 + sw
            for dh in range(2):
                for dw in range(2):
                    g = dh * 2 + dw
                    for rh in range(2):
                        for rw in range(2):
                            kh = 2 * sh + rh - dh
                            kw = 2 * sw + rw - dw
                            if 0 <= kh < _K and 0 <= kw < _K:
                                c0 = (rh * 2 + rw) * cin
                                m[tap, c0:c0 + cin,
                                  g * _GROUP:g * _GROUP + cout] = w[:, :, kh, kw].T
    return m


def _pad_bias(b):
    b = np.asarray(jax.device_get(b), np.float32).reshape(-1)
    out = np.zeros((1, _LANE), np.float32)
    out[0, :b.shape[0]] = b
    return jnp.asarray(out)


def _pad2d(w, rows, cols):
    w = np.asarray(jax.device_get(w), np.float32)
    out = np.zeros((rows, cols), np.float32)
    out[:w.shape[0], :w.shape[1]] = w
    return out


def prepare_pallas_params(params, compute_dtype=COMPUTE_DTYPE):
    """One-time packing: fold pooling into conv weights, pad all output dims to 128."""
    # fc1 expects torch flatten order (c, h, w); our features are (h, w, c): permute rows.
    o = np.arange(16 * 5 * 5)
    src = (o % 16) * 25 + (o // 16)
    w1 = np.asarray(jax.device_get(params["fc1_w"]), np.float32)[src]
    return {
        "m1": jnp.asarray(_pack_conv_pool_weights(params["conv1_w"]), compute_dtype),
        "b1": _pad_bias(params["conv1_b"]),
        "m2": jnp.asarray(_pack_conv_pool_weights(params["conv2_w"]), compute_dtype),
        "b2": _pad_bias(params["conv2_b"]),
        "w1": jnp.asarray(_pad2d(w1, 400, _LANE), compute_dtype),
        "fb1": _pad_bias(params["fc1_b"]),
        "w2": jnp.asarray(_pad2d(params["fc2_w"], _LANE, _LANE), compute_dtype),
        "fb2": _pad_bias(params["fc2_b"]),
        "w3": jnp.asarray(_pad2d(params["fc3_w"], _LANE, _LANE), compute_dtype),
        "fb3": _pad_bias(params["fc3_b"]),
    }


# ------------------------------ CNN_WEB forward ------------------------------ #

@jax.jit
def cnn_web_forward(packed, x):
    """x: (N, 3, 32, 32) NCHW float32 -> logits (N, 10) float32."""
    n = x.shape[0]
    dt = packed["m1"].dtype

    # ---- stage 1: conv1(3->6, 5x5) + ReLU + 2x2 max-pool (one fused kernel) ----
    _, ws1, hp1, wp1, r_out1, r_store1 = _stage_geometry(32, 32)
    x2 = _space_to_depth(x.transpose(0, 2, 3, 1), r_store1, dt)          # (n, 264, 128)
    y1 = conv_relu_pool_stage(x2, packed["m1"], packed["b1"], ws=ws1, r_out=r_out1)

    # tiny layout glue: extract valid (n, 14, 14, 6) and re-space-to-depth
    a1 = y1[:, :hp1 * ws1, :].reshape(n, hp1, ws1, _LANE)[:, :, :wp1, :6]
    _, ws2, hp2, wp2, r_out2, r_store2 = _stage_geometry(hp1, wp1)
    x2b = _space_to_depth(a1, r_store2, dt)                              # (n, 56, 128)

    # ---- stage 2: conv2(6->16, 5x5) + ReLU + 2x2 max-pool (one fused kernel) ----
    y2 = conv_relu_pool_stage(x2b, packed["m2"], packed["b2"], ws=ws2, r_out=r_out2)

    # ---- flatten (h, w, c) and fused fc1 -> fc2 -> fc3 ----
    feats = y2[:, :hp2 * ws2, :].reshape(n, hp2, ws2, _LANE)[:, :, :wp2, :16]
    feats = feats.reshape(n, hp2 * wp2 * 16).astype(dt)                  # (n, 400)
    tm = min(256, _round_up(n, 8))
    rows = _round_up(n, tm)
    feats = jnp.pad(feats, ((0, rows - n), (0, 0)))
    logits = mlp_fused(feats, packed["w1"], packed["fb1"], packed["w2"],
                       packed["fb2"], packed["w3"], packed["fb3"], tm=tm)
    return logits[:n, :10]


# ------------------------------ init + reference ----------------------------- #

def init_params(key):
    def uniform(key, shape, fan_in):
        bound = 1.0 / jnp.sqrt(jnp.float32(fan_in))
        return jax.random.uniform(key, shape, jnp.float32, -bound, bound)

    ks = jax.random.split(key, 10)
    return {
        "conv1_w": uniform(ks[0], (6, 3, 5, 5), 3 * 5 * 5),
        "conv1_b": uniform(ks[1], (6,), 3 * 5 * 5),
        "conv2_w": uniform(ks[2], (16, 6, 5, 5), 6 * 5 * 5),
        "conv2_b": uniform(ks[3], (16,), 6 * 5 * 5),
        "fc1_w": uniform(ks[4], (400, 120), 400),
        "fc1_b": uniform(ks[5], (120,), 400),
        "fc2_w": uniform(ks[6], (120, 84), 120),
        "fc2_b": uniform(ks[7], (84,), 120),
        "fc3_w": uniform(ks[8], (84, 10), 84),
        "fc3_b": uniform(ks[9], (10,), 84),
    }


def cnn_web_reference(params, x):
    """Plain-JAX (XLA) reference of the PyTorch module, f32."""
    hi = jax.lax.Precision.HIGHEST

    def conv(x, w, b):
        y = jax.lax.conv_general_dilated(
            x, w, window_strides=(1, 1), padding="VALID",
            dimension_numbers=("NCHW", "OIHW", "NCHW"), precision=hi)
        return y + b.reshape(1, -1, 1, 1)

    def pool(x):
        return jax.lax.reduce_window(
            x, -jnp.inf, jax.lax.max, (1, 1, 2, 2), (1, 1, 2, 2), "VALID")

    x = pool(jax.nn.relu(conv(x, params["conv1_w"], params["conv1_b"])))
    x = pool(jax.nn.relu(conv(x, params["conv2_w"], params["conv2_b"])))
    x = x.reshape(x.shape[0], -1)
    x = jax.nn.relu(jnp.dot(x, params["fc1_w"], precision=hi) + params["fc1_b"])
    x = jax.nn.relu(jnp.dot(x, params["fc2_w"], precision=hi) + params["fc2_b"])
    return jnp.dot(x, params["fc3_w"], precision=hi) + params["fc3_b"]


if __name__ == "__main__":
    key = jax.random.PRNGKey(0)
    pkey, xkey = jax.random.split(key)
    params = init_params(pkey)
    packed = prepare_pallas_params(params)

    # 32x32 input is required so that flatten yields 16*5*5 = 400 features.
    x = jax.random.normal(xkey, (2, 3, 32, 32), jnp.float32)

    out = jax.block_until_ready(cnn_web_forward(packed, x))
    assert out.shape == (2, 10) and out.dtype == jnp.float32

    ref = jax.block_until_ready(cnn_web_reference(params, x))
    np.testing.assert_allclose(np.asarray(out), np.asarray(ref), rtol=5e-2, atol=5e-2)
    print("KERNEL_OK")
</pallas_src>

<mosaic_0001>
module attributes {stable_mosaic.version = 11 : i64} {
  func.func @_conv_relu_pool_kernel(%arg0: i32, %arg1: memref<1x264x128xf32, #tpu.memory_space<vmem>>, %arg2: memref<9x128x128xf32, #tpu.memory_space<vmem>>, %arg3: memref<1x128xf32, #tpu.memory_space<vmem>>, %arg4: memref<1x224x128xf32, #tpu.memory_space<vmem>>) attributes {dimension_semantics = [#tpu.dimension_semantics<parallel>], iteration_bounds = array<i64: 2>, scalar_prefetch = 0 : i64, scratch_operands = 0 : i64, tpu.core_type = #tpu.core_type<tc>, window_params = [{transform_indices = @transform_0, window_bounds = array<i64: 1, 264, 128>}, {pipeline_mode = #tpu.pipeline_mode<synchronous>, transform_indices = @transform_1, window_bounds = array<i64: 9, 128, 128>}, {pipeline_mode = #tpu.pipeline_mode<synchronous>, transform_indices = @transform_2, window_bounds = array<i64: 1, 128>}, {transform_indices = @transform_3, window_bounds = array<i64: 1, 224, 128>}]} {
    %c0 = arith.constant 0 : index
    %c0_0 = arith.constant 0 : index
    %c0_1 = arith.constant 0 : index
    %0 = vector.load %arg1[%c0, %c0_0, %c0_1] : memref<1x264x128xf32, #tpu.memory_space<vmem>>, vector<1x224x128xf32>
    %1 = vector.shape_cast %0 : vector<1x224x128xf32> to vector<224x128xf32>
    %c0_2 = arith.constant 0 : index
    %c0_3 = arith.constant 0 : index
    %c0_4 = arith.constant 0 : index
    %2 = vector.load %arg2[%c0_2, %c0_3, %c0_4] : memref<9x128x128xf32, #tpu.memory_space<vmem>>, vector<1x128x128xf32>
    %3 = vector.shape_cast %2 : vector<1x128x128xf32> to vector<128x128xf32>
    %cst = arith.constant dense<0.000000e+00> : vector<224x128xf32>
    %4 = tpu.matmul %1, %3, %cst {dimension_numbers = #tpu.dot_dimension_numbers<[1], [0], [0], [1], [0, 0, 1, 1], [], []>} : vector<224x128xf32>, vector<128x128xf32>, vector<224x128xf32> -> vector<224x128xf32>
    %c0_5 = arith.constant 0 : index
    %c1 = arith.constant 1 : index
    %c0_6 = arith.constant 0 : index
    %5 = vector.load %arg1[%c0_5, %c1, %c0_6] : memref<1x264x128xf32, #tpu.memory_space<vmem>>, vector<1x224x128xf32>
    %6 = vector.shape_cast %5 : vector<1x224x128xf32> to vector<224x128xf32>
    %c1_7 = arith.constant 1 : index
    %c0_8 = arith.constant 0 : index
    %c0_9 = arith.constant 0 : index
    %7 = vector.load %arg2[%c1_7, %c0_8, %c0_9] : memref<9x128x128xf32, #tpu.memory_space<vmem>>, vector<1x128x128xf32>
    %8 = vector.shape_cast %7 : vector<1x128x128xf32> to vector<128x128xf32>
    %cst_10 = arith.constant dense<0.000000e+00> : vector<224x128xf32>
    %9 = tpu.matmul %6, %8, %cst_10 {dimension_numbers = #tpu.dot_dimension_numbers<[1], [0], [0], [1], [0, 0, 1, 1], [], []>} : vector<224x128xf32>, vector<128x128xf32>, vector<224x128xf32> -> vector<224x128xf32>
    %10 = arith.addf %4, %9 : vector<224x128xf32>
    %c0_11 = arith.constant 0 : index
    %c2 = arith.constant 2 : index
    %c0_12 = arith.constant 0 : index
    %11 = vector.load %arg1[%c0_11, %c2, %c0_12] : memref<1x264x128xf32, #tpu.memory_space<vmem>>, vector<1x224x128xf32>
    %12 = vector.shape_cast %11 : vector<1x224x128xf32> to vector<224x128xf32>
    %c2_13 = arith.constant 2 : index
    %c0_14 = arith.constant 0 : index
    %c0_15 = arith.constant 0 : index
    %13 = vector.load %arg2[%c2_13, %c0_14, %c0_15] : memref<9x128x128xf32, #tpu.memory_space<vmem>>, vector<1x128x128xf32>
    %14 = vector.shape_cast %13 : vector<1x128x128xf32> to vector<128x128xf32>
    %cst_16 = arith.constant dense<0.000000e+00> : vector<224x128xf32>
    %15 = tpu.matmul %12, %14, %cst_16 {dimension_numbers = #tpu.dot_dimension_numbers<[1], [0], [0], [1], [0, 0, 1, 1], [], []>} : vector<224x128xf32>, vector<128x128xf32>, vector<224x128xf32> -> vector<224x128xf32>
    %16 = arith.addf %10, %15 : vector<224x128xf32>
    %c0_17 = arith.constant 0 : index
    %c16 = arith.constant 16 : index
    %c0_18 = arith.constant 0 : index
    %17 = vector.load %arg1[%c0_17, %c16, %c0_18] : memref<1x264x128xf32, #tpu.memory_space<vmem>>, vector<1x224x128xf32>
    %18 = vector.shape_cast %17 : vector<1x224x128xf32> to vector<224x128xf32>
    %c3 = arith.constant 3 : index
    %c0_19 = arith.constant 0 : index
    %c0_20 = arith.constant 0 : index
    %19 = vector.load %arg2[%c3, %c0_19, %c0_20] : memref<9x128x128xf32, #tpu.memory_space<vmem>>, vector<1x128x128xf32>
    %20 = vector.shape_cast %19 : vector<1x128x128xf32> to vector<128x128xf32>
    %cst_21 = arith.constant dense<0.000000e+00> : vector<224x128xf32>
    %21 = tpu.matmul %18, %20, %cst_21 {dimension_numbers = #tpu.dot_dimension_numbers<[1], [0], [0], [1], [0, 0, 1, 1], [], []>} : vector<224x128xf32>, vector<128x128xf32>, vector<224x128xf32> -> vector<224x128xf32>
    %22 = arith.addf %16, %21 : vector<224x128xf32>
    %c0_22 = arith.constant 0 : index
    %c17 = arith.constant 17 : index
    %c0_23 = arith.constant 0 : index
    %23 = vector.load %arg1[%c0_22, %c17, %c0_23] : memref<1x264x128xf32, #tpu.memory_space<vmem>>, vector<1x224x128xf32>
    %24 = vector.shape_cast %23 : vector<1x224x128xf32> to vector<224x128xf32>
    %c4 = arith.constant 4 : index
    %c0_24 = arith.constant 0 : index
    %c0_25 = arith.constant 0 : index
    %25 = vector.load %arg2[%c4, %c0_24, %c0_25] : memref<9x128x128xf32, #tpu.memory_space<vmem>>, vector<1x128x128xf32>
    %26 = vector.shape_cast %25 : vector<1x128x128xf32> to vector<128x128xf32>
    %cst_26 = arith.constant dense<0.000000e+00> : vector<224x128xf32>
    %27 = tpu.matmul %24, %26, %cst_26 {dimension_numbers = #tpu.dot_dimension_numbers<[1], [0], [0], [1], [0, 0, 1, 1], [], []>} : vector<224x128xf32>, vector<128x128xf32>, vector<224x128xf32> -> vector<224x128xf32>
    %28 = arith.addf %22, %27 : vector<224x128xf32>
    %c0_27 = arith.constant 0 : index
    %c18 = arith.constant 18 : index
    %c0_28 = arith.constant 0 : index
    %29 = vector.load %arg1[%c0_27, %c18, %c0_28] : memref<1x264x128xf32, #tpu.memory_space<vmem>>, vector<1x224x128xf32>
    %30 = vector.shape_cast %29 : vector<1x224x128xf32> to vector<224x128xf32>
    %c5 = arith.constant 5 : index
    %c0_29 = arith.constant 0 : index
    %c0_30 = arith.constant 0 : index
    %31 = vector.load %arg2[%c5, %c0_29, %c0_30] : memref<9x128x128xf32, #tpu.memory_space<vmem>>, vector<1x128x128xf32>
    %32 = vector.shape_cast %31 : vector<1x128x128xf32> to vector<128x128xf32>
    %cst_31 = arith.constant dense<0.000000e+00> : vector<224x128xf32>
    %33 = tpu.matmul %30, %32, %cst_31 {dimension_numbers = #tpu.dot_dimension_numbers<[1], [0], [0], [1], [0, 0, 1, 1], [], []>} : vector<224x128xf32>, vector<128x128xf32>, vector<224x128xf32> -> vector<224x128xf32>
    %34 = arith.addf %28, %33 : vector<224x128xf32>
    %c0_32 = arith.constant 0 : index
    %c32 = arith.constant 32 : index
    %c0_33 = arith.constant 0 : index
    %35 = vector.load %arg1[%c0_32, %c32, %c0_33] : memref<1x264x128xf32, #tpu.memory_space<vmem>>, vector<1x224x128xf32>
    %36 = vector.shape_cast %35 : vector<1x224x128xf32> to vector<224x128xf32>
    %c6 = arith.constant 6 : index
    %c0_34 = arith.constant 0 : index
    %c0_35 = arith.constant 0 : index
    %37 = vector.load %arg2[%c6, %c0_34, %c0_35] : memref<9x128x128xf32, #tpu.memory_space<vmem>>, vector<1x128x128xf32>
    %38 = vector.shape_cast %37 : vector<1x128x128xf32> to vector<128x128xf32>
    %cst_36 = arith.constant dense<0.000000e+00> : vector<224x128xf32>
    %39 = tpu.matmul %36, %38, %cst_36 {dimension_numbers = #tpu.dot_dimension_numbers<[1], [0], [0], [1], [0, 0, 1, 1], [], []>} : vector<224x128xf32>, vector<128x128xf32>, vector<224x128xf32> -> vector<224x128xf32>
    %40 = arith.addf %34, %39 : vector<224x128xf32>
    %c0_37 = arith.constant 0 : index
    %c33 = arith.constant 33 : index
    %c0_38 = arith.constant 0 : index
    %41 = vector.load %arg1[%c0_37, %c33, %c0_38] : memref<1x264x128xf32, #tpu.memory_space<vmem>>, vector<1x224x128xf32>
    %42 = vector.shape_cast %41 : vector<1x224x128xf32> to vector<224x128xf32>
    %c7 = arith.constant 7 : index
    %c0_39 = arith.constant 0 : index
    %c0_40 = arith.constant 0 : index
    %43 = vector.load %arg2[%c7, %c0_39, %c0_40] : memref<9x128x128xf32, #tpu.memory_space<vmem>>, vector<1x128x128xf32>
    %44 = vector.shape_cast %43 : vector<1x128x128xf32> to vector<128x128xf32>
    %cst_41 = arith.constant dense<0.000000e+00> : vector<224x128xf32>
    %45 = tpu.matmul %42, %44, %cst_41 {dimension_numbers = #tpu.dot_dimension_numbers<[1], [0], [0], [1], [0, 0, 1, 1], [], []>} : vector<224x128xf32>, vector<128x128xf32>, vector<224x128xf32> -> vector<224x128xf32>
    %46 = arith.addf %40, %45 : vector<224x128xf32>
    %c0_42 = arith.constant 0 : index
    %c34 = arith.constant 34 : index
    %c0_43 = arith.constant 0 : index
    %47 = vector.load %arg1[%c0_42, %c34, %c0_43] : memref<1x264x128xf32, #tpu.memory_space<vmem>>, vector<1x224x128xf32>
    %48 = vector.shape_cast %47 : vector<1x224x128xf32> to vector<224x128xf32>
    %c8 = arith.constant 8 : index
    %c0_44 = arith.constant 0 : index
    %c0_45 = arith.constant 0 : index
    %49 = vector.load %arg2[%c8, %c0_44, %c0_45] : memref<9x128x128xf32, #tpu.memory_space<vmem>>, vector<1x128x128xf32>
    %50 = vector.shape_cast %49 : vector<1x128x128xf32> to vector<128x128xf32>
    %cst_46 = arith.constant dense<0.000000e+00> : vector<224x128xf32>
    %51 = tpu.matmul %48, %50, %cst_46 {dimension_numbers = #tpu.dot_dimension_numbers<[1], [0], [0], [1], [0, 0, 1, 1], [], []>} : vector<224x128xf32>, vector<128x128xf32>, vector<224x128xf32> -> vector<224x128xf32>
    %52 = arith.addf %46, %51 : vector<224x128xf32>
    %c32_i32 = arith.constant 32 : i32
    %53 = tpu.dynamic_rotate %52 by %c32_i32 dim 1 : vector<224x128xf32>, i32 -> vector<224x128xf32>
    %54 = arith.maximumf %52, %53 : vector<224x128xf32>
    %c64_i32 = arith.constant 64 : i32
    %55 = tpu.dynamic_rotate %54 by %c64_i32 dim 1 : vector<224x128xf32>, i32 -> vector<224x128xf32>
    %56 = arith.maximumf %54, %55 : vector<224x128xf32>
    %c0_47 = arith.constant 0 : index
    %c0_48 = arith.constant 0 : index
    %57 = vector.load %arg3[%c0_47, %c0_48] : memref<1x128xf32, #tpu.memory_space<vmem>>, vector<1x128xf32>
    %58 = vector.broadcast %57 : vector<1x128xf32> to vector<224x128xf32>
    %59 = arith.addf %56, %58 : vector<224x128xf32>
    %cst_49 = arith.constant 0.000000e+00 : f32
    %60 = vector.broadcast %cst_49 : f32 to vector<224x128xf32>
    %61 = arith.maximumf %59, %60 : vector<224x128xf32>
    %c0_50 = arith.constant 0 : index
    %c0_51 = arith.constant 0 : index
    %c0_52 = arith.constant 0 : index
    %62 = vector.load %arg4[%c0_50, %c0_51, %c0_52] : memref<1x224x128xf32, #tpu.memory_space<vmem>>, vector<1x224x128xf32>
    %63 = vector.shape_cast %62 : vector<1x224x128xf32> to vector<224x128xf32>
    %64 = vector.shape_cast %61 : vector<224x128xf32> to vector<1x224x128xf32>
    tpu.vector_store %arg4[%c0_50, %c0_51, %c0_52], %64 {strides = array<i32>} : memref<1x224x128xf32, #tpu.memory_space<vmem>>, vector<1x224x128xf32>,
    return
  }
  func.func @transform_0(%arg0: i32) -> (i32, i32, i32) {
    %c0_i32 = arith.constant 0 : i32
    %c0_i32_0 = arith.constant 0 : i32
    %c0_i32_1 = arith.constant 0 : i32
    return %arg0, %c0_i32, %c0_i32_0 : i32, i32, i32
  }
  func.func @transform_1(%arg0: i32) -> (i32, i32, i32) {
    %c0_i32 = arith.constant 0 : i32
    %c0_i32_0 = arith.constant 0 : i32
    %c0_i32_1 = arith.constant 0 : i32
    %c0_i32_2 = arith.constant 0 : i32
    return %c0_i32, %c0_i32_0, %c0_i32_1 : i32, i32, i32
  }
  func.func @transform_2(%arg0: i32) -> (i32, i32) {
    %c0_i32 = arith.constant 0 : i32
    %c0_i32_0 = arith.constant 0 : i32
    %c0_i32_1 = arith.constant 0 : i32
    return %c0_i32, %c0_i32_0 : i32, i32
  }
  func.func @transform_3(%arg0: i32) -> (i32, i32, i32) {
    %c0_i32 = arith.constant 0 : i32
    %c0_i32_0 = arith.constant 0 : i32
    %c0_i32_1 = arith.constant 0 : i32
    return %arg0, %c0_i32, %c0_i32_0 : i32, i32, i32
  }
}

module attributes {stable_mosaic.version = 11 : i64} {
  func.func @_conv_relu_pool_kernel(%arg0: i32, %arg1: memref<1x56x128xf32, #tpu.memory_space<vmem>>, %arg2: memref<9x128x128xf32, #tpu.memory_space<vmem>>, %arg3: memref<1x128xf32, #tpu.memory_space<vmem>>, %arg4: memref<1x40x128xf32, #tpu.memory_space<vmem>>) attributes {dimension_semantics = [#tpu.dimension_semantics<parallel>], iteration_bounds = array<i64: 2>, scalar_prefetch = 0 : i64, scratch_operands = 0 : i64, tpu.core_type = #tpu.core_type<tc>, window_params = [{transform_indices = @transform_0, window_bounds = array<i64: 1, 56, 128>}, {pipeline_mode = #tpu.pipeline_mode<synchronous>, transform_indices = @transform_1, window_bounds = array<i64: 9, 128, 128>}, {pipeline_mode = #tpu.pipeline_mode<synchronous>, transform_indices = @transform_2, window_bounds = array<i64: 1, 128>}, {transform_indices = @transform_3, window_bounds = array<i64: 1, 40, 128>}]} {
    %c0 = arith.constant 0 : index
    %c0_0 = arith.constant 0 : index
    %c0_1 = arith.constant 0 : index
    %0 = vector.load %arg1[%c0, %c0_0, %c0_1] : memref<1x56x128xf32, #tpu.memory_space<vmem>>, vector<1x40x128xf32>
    %1 = vector.shape_cast %0 : vector<1x40x128xf32> to vector<40x128xf32>
    %c0_2 = arith.constant 0 : index
    %c0_3 = arith.constant 0 : index
    %c0_4 = arith.constant 0 : index
    %2 = vector.load %arg2[%c0_2, %c0_3, %c0_4] : memref<9x128x128xf32, #tpu.memory_space<vmem>>, vector<1x128x128xf32>
    %3 = vector.shape_cast %2 : vector<1x128x128xf32> to vector<128x128xf32>
    %cst = arith.constant dense<0.000000e+00> : vector<40x128xf32>
    %4 = tpu.matmul %1, %3, %cst {dimension_numbers = #tpu.dot_dimension_numbers<[1], [0], [0], [1], [0, 0, 1, 1], [], []>} : vector<40x128xf32>, vector<128x128xf32>, vector<40x128xf32> -> vector<40x128xf32>
    %c0_5 = arith.constant 0 : index
    %c1 = arith.constant 1 : index
    %c0_6 = arith.constant 0 : index
    %5 = vector.load %arg1[%c0_5, %c1, %c0_6] : memref<1x56x128xf32, #tpu.memory_space<vmem>>, vector<1x40x128xf32>
    %6 = vector.shape_cast %5 : vector<1x40x128xf32> to vector<40x128xf32>
    %c1_7 = arith.constant 1 : index
    %c0_8 = arith.constant 0 : index
    %c0_9 = arith.constant 0 : index
    %7 = vector.load %arg2[%c1_7, %c0_8, %c0_9] : memref<9x128x128xf32, #tpu.memory_space<vmem>>, vector<1x128x128xf32>
    %8 = vector.shape_cast %7 : vector<1x128x128xf32> to vector<128x128xf32>
    %cst_10 = arith.constant dense<0.000000e+00> : vector<40x128xf32>
    %9 = tpu.matmul %6, %8, %cst_10 {dimension_numbers = #tpu.dot_dimension_numbers<[1], [0], [0], [1], [0, 0, 1, 1], [], []>} : vector<40x128xf32>, vector<128x128xf32>, vector<40x128xf32> -> vector<40x128xf32>
    %10 = arith.addf %4, %9 : vector<40x128xf32>
    %c0_11 = arith.constant 0 : index
    %c2 = arith.constant 2 : index
    %c0_12 = arith.constant 0 : index
    %11 = vector.load %arg1[%c0_11, %c2, %c0_12] : memref<1x56x128xf32, #tpu.memory_space<vmem>>, vector<1x40x128xf32>
    %12 = vector.shape_cast %11 : vector<1x40x128xf32> to vector<40x128xf32>
    %c2_13 = arith.constant 2 : index
    %c0_14 = arith.constant 0 : index
    %c0_15 = arith.constant 0 : index
    %13 = vector.load %arg2[%c2_13, %c0_14, %c0_15] : memref<9x128x128xf32, #tpu.memory_space<vmem>>, vector<1x128x128xf32>
    %14 = vector.shape_cast %13 : vector<1x128x128xf32> to vector<128x128xf32>
    %cst_16 = arith.constant dense<0.000000e+00> : vector<40x128xf32>
    %15 = tpu.matmul %12, %14, %cst_16 {dimension_numbers = #tpu.dot_dimension_numbers<[1], [0], [0], [1], [0, 0, 1, 1], [], []>} : vector<40x128xf32>, vector<128x128xf32>, vector<40x128xf32> -> vector<40x128xf32>
    %16 = arith.addf %10, %15 : vector<40x128xf32>
    %c0_17 = arith.constant 0 : index
    %c7 = arith.constant 7 : index
    %c0_18 = arith.constant 0 : index
    %17 = vector.load %arg1[%c0_17, %c7, %c0_18] : memref<1x56x128xf32, #tpu.memory_space<vmem>>, vector<1x40x128xf32>
    %18 = vector.shape_cast %17 : vector<1x40x128xf32> to vector<40x128xf32>
    %c3 = arith.constant 3 : index
    %c0_19 = arith.constant 0 : index
    %c0_20 = arith.constant 0 : index
    %19 = vector.load %arg2[%c3, %c0_19, %c0_20] : memref<9x128x128xf32, #tpu.memory_space<vmem>>, vector<1x128x128xf32>
    %20 = vector.shape_cast %19 : vector<1x128x128xf32> to vector<128x128xf32>
    %cst_21 = arith.constant dense<0.000000e+00> : vector<40x128xf32>
    %21 = tpu.matmul %18, %20, %cst_21 {dimension_numbers = #tpu.dot_dimension_numbers<[1], [0], [0], [1], [0, 0, 1, 1], [], []>} : vector<40x128xf32>, vector<128x128xf32>, vector<40x128xf32> -> vector<40x128xf32>
    %22 = arith.addf %16, %21 : vector<40x128xf32>
    %c0_22 = arith.constant 0 : index
    %c8 = arith.constant 8 : index
    %c0_23 = arith.constant 0 : index
    %23 = vector.load %arg1[%c0_22, %c8, %c0_23] : memref<1x56x128xf32, #tpu.memory_space<vmem>>, vector<1x40x128xf32>
    %24 = vector.shape_cast %23 : vector<1x40x128xf32> to vector<40x128xf32>
    %c4 = arith.constant 4 : index
    %c0_24 = arith.constant 0 : index
    %c0_25 = arith.constant 0 : index
    %25 = vector.load %arg2[%c4, %c0_24, %c0_25] : memref<9x128x128xf32, #tpu.memory_space<vmem>>, vector<1x128x128xf32>
    %26 = vector.shape_cast %25 : vector<1x128x128xf32> to vector<128x128xf32>
    %cst_26 = arith.constant dense<0.000000e+00> : vector<40x128xf32>
    %27 = tpu.matmul %24, %26, %cst_26 {dimension_numbers = #tpu.dot_dimension_numbers<[1], [0], [0], [1], [0, 0, 1, 1], [], []>} : vector<40x128xf32>, vector<128x128xf32>, vector<40x128xf32> -> vector<40x128xf32>
    %28 = arith.addf %22, %27 : vector<40x128xf32>
    %c0_27 = arith.constant 0 : index
    %c9 = arith.constant 9 : index
    %c0_28 = arith.constant 0 : index
    %29 = vector.load %arg1[%c0_27, %c9, %c0_28] : memref<1x56x128xf32, #tpu.memory_space<vmem>>, vector<1x40x128xf32>
    %30 = vector.shape_cast %29 : vector<1x40x128xf32> to vector<40x128xf32>
    %c5 = arith.constant 5 : index
    %c0_29 = arith.constant 0 : index
    %c0_30 = arith.constant 0 : index
    %31 = vector.load %arg2[%c5, %c0_29, %c0_30] : memref<9x128x128xf32, #tpu.memory_space<vmem>>, vector<1x128x128xf32>
    %32 = vector.shape_cast %31 : vector<1x128x128xf32> to vector<128x128xf32>
    %cst_31 = arith.constant dense<0.000000e+00> : vector<40x128xf32>
    %33 = tpu.matmul %30, %32, %cst_31 {dimension_numbers = #tpu.dot_dimension_numbers<[1], [0], [0], [1], [0, 0, 1, 1], [], []>} : vector<40x128xf32>, vector<128x128xf32>, vector<40x128xf32> -> vector<40x128xf32>
    %34 = arith.addf %28, %33 : vector<40x128xf32>
    %c0_32 = arith.constant 0 : index
    %c14 = arith.constant 14 : index
    %c0_33 = arith.constant 0 : index
    %35 = vector.load %arg1[%c0_32, %c14, %c0_33] : memref<1x56x128xf32, #tpu.memory_space<vmem>>, vector<1x40x128xf32>
    %36 = vector.shape_cast %35 : vector<1x40x128xf32> to vector<40x128xf32>
    %c6 = arith.constant 6 : index
    %c0_34 = arith.constant 0 : index
    %c0_35 = arith.constant 0 : index
    %37 = vector.load %arg2[%c6, %c0_34, %c0_35] : memref<9x128x128xf32, #tpu.memory_space<vmem>>, vector<1x128x128xf32>
    %38 = vector.shape_cast %37 : vector<1x128x128xf32> to vector<128x128xf32>
    %cst_36 = arith.constant dense<0.000000e+00> : vector<40x128xf32>
    %39 = tpu.matmul %36, %38, %cst_36 {dimension_numbers = #tpu.dot_dimension_numbers<[1], [0], [0], [1], [0, 0, 1, 1], [], []>} : vector<40x128xf32>, vector<128x128xf32>, vector<40x128xf32> -> vector<40x128xf32>
    %40 = arith.addf %34, %39 : vector<40x128xf32>
    %c0_37 = arith.constant 0 : index
    %c15 = arith.constant 15 : index
    %c0_38 = arith.constant 0 : index
    %41 = vector.load %arg1[%c0_37, %c15, %c0_38] : memref<1x56x128xf32, #tpu.memory_space<vmem>>, vector<1x40x128xf32>
    %42 = vector.shape_cast %41 : vector<1x40x128xf32> to vector<40x128xf32>
    %c7_39 = arith.constant 7 : index
    %c0_40 = arith.constant 0 : index
    %c0_41 = arith.constant 0 : index
    %43 = vector.load %arg2[%c7_39, %c0_40, %c0_41] : memref<9x128x128xf32, #tpu.memory_space<vmem>>, vector<1x128x128xf32>
    %44 = vector.shape_cast %43 : vector<1x128x128xf32> to vector<128x128xf32>
    %cst_42 = arith.constant dense<0.000000e+00> : vector<40x128xf32>
    %45 = tpu.matmul %42, %44, %cst_42 {dimension_numbers = #tpu.dot_dimension_numbers<[1], [0], [0], [1], [0, 0, 1, 1], [], []>} : vector<40x128xf32>, vector<128x128xf32>, vector<40x128xf32> -> vector<40x128xf32>
    %46 = arith.addf %40, %45 : vector<40x128xf32>
    %c0_43 = arith.constant 0 : index
    %c16 = arith.constant 16 : index
    %c0_44 = arith.constant 0 : index
    %47 = vector.load %arg1[%c0_43, %c16, %c0_44] : memref<1x56x128xf32, #tpu.memory_space<vmem>>, vector<1x40x128xf32>
    %48 = vector.shape_cast %47 : vector<1x40x128xf32> to vector<40x128xf32>
    %c8_45 = arith.constant 8 : index
    %c0_46 = arith.constant 0 : index
    %c0_47 = arith.constant 0 : index
    %49 = vector.load %arg2[%c8_45, %c0_46, %c0_47] : memref<9x128x128xf32, #tpu.memory_space<vmem>>, vector<1x128x128xf32>
    %50 = vector.shape_cast %49 : vector<1x128x128xf32> to vector<128x128xf32>
    %cst_48 = arith.constant dense<0.000000e+00> : vector<40x128xf32>
    %51 = tpu.matmul %48, %50, %cst_48 {dimension_numbers = #tpu.dot_dimension_numbers<[1], [0], [0], [1], [0, 0, 1, 1], [], []>} : vector<40x128xf32>, vector<128x128xf32>, vector<40x128xf32> -> vector<40x128xf32>
    %52 = arith.addf %46, %51 : vector<40x128xf32>
    %c32_i32 = arith.constant 32 : i32
    %53 = tpu.dynamic_rotate %52 by %c32_i32 dim 1 : vector<40x128xf32>, i32 -> vector<40x128xf32>
    %54 = arith.maximumf %52, %53 : vector<40x128xf32>
    %c64_i32 = arith.constant 64 : i32
    %55 = tpu.dynamic_rotate %54 by %c64_i32 dim 1 : vector<40x128xf32>, i32 -> vector<40x128xf32>
    %56 = arith.maximumf %54, %55 : vector<40x128xf32>
    %c0_49 = arith.constant 0 : index
    %c0_50 = arith.constant 0 : index
    %57 = vector.load %arg3[%c0_49, %c0_50] : memref<1x128xf32, #tpu.memory_space<vmem>>, vector<1x128xf32>
    %58 = vector.broadcast %57 : vector<1x128xf32> to vector<40x128xf32>
    %59 = arith.addf %56, %58 : vector<40x128xf32>
    %cst_51 = arith.constant 0.000000e+00 : f32
    %60 = vector.broadcast %cst_51 : f32 to vector<40x128xf32>
    %61 = arith.maximumf %59, %60 : vector<40x128xf32>
    %c0_52 = arith.constant 0 : index
    %c0_53 = arith.constant 0 : index
    %c0_54 = arith.constant 0 : index
    %62 = vector.load %arg4[%c0_52, %c0_53, %c0_54] : memref<1x40x128xf32, #tpu.memory_space<vmem>>, vector<1x40x128xf32>
    %63 = vector.shape_cast %62 : vector<1x40x128xf32> to vector<40x128xf32>
    %64 = vector.shape_cast %61 : vector<40x128xf32> to vector<1x40x128xf32>
    tpu.vector_store %arg4[%c0_52, %c0_53, %c0_54], %64 {strides = array<i32>} : memref<1x40x128xf32, #tpu.memory_space<vmem>>, vector<1x40x128xf32>,
    return
  }
  func.func @transform_0(%arg0: i32) -> (i32, i32, i32) {
    %c0_i32 = arith.constant 0 : i32
    %c0_i32_0 = arith.constant 0 : i32
    %c0_i32_1 = arith.constant 0 : i32
    return %arg0, %c0_i32, %c0_i32_0 : i32, i32, i32
  }
  func.func @transform_1(%arg0: i32) -> (i32, i32, i32) {
    %c0_i32 = arith.constant 0 : i32
    %c0_i32_0 = arith.constant 0 : i32
    %c0_i32_1 = arith.constant 0 : i32
    %c0_i32_2 = arith.constant 0 : i32
    return %c0_i32, %c0_i32_0, %c0_i32_1 : i32, i32, i32
  }
  func.func @transform_2(%arg0: i32) -> (i32, i32) {
    %c0_i32 = arith.constant 0 : i32
    %c0_i32_0 = arith.constant 0 : i32
    %c0_i32_1 = arith.constant 0 : i32
    return %c0_i32, %c0_i32_0 : i32, i32
  }
  func.func @transform_3(%arg0: i32) -> (i32, i32, i32) {
    %c0_i32 = arith.constant 0 : i32
    %c0_i32_0 = arith.constant 0 : i32
    %c0_i32_1 = arith.constant 0 : i32
    return %arg0, %c0_i32, %c0_i32_0 : i32, i32, i32
  }
}

module attributes {stable_mosaic.version = 11 : i64} {
  func.func @_mlp_kernel(%arg0: i32, %arg1: memref<8x400xf32, #tpu.memory_space<vmem>>, %arg2: memref<400x128xf32, #tpu.memory_space<vmem>>, %arg3: memref<1x128xf32, #tpu.memory_space<vmem>>, %arg4: memref<128x128xf32, #tpu.memory_space<vmem>>, %arg5: memref<1x128xf32, #tpu.memory_space<vmem>>, %arg6: memref<128x128xf32, #tpu.memory_space<vmem>>, %arg7: memref<1x128xf32, #tpu.memory_space<vmem>>, %arg8: memref<8x128xf32, #tpu.memory_space<vmem>>) attributes {dimension_semantics = [#tpu.dimension_semantics<parallel>], iteration_bounds = array<i64: 1>, scalar_prefetch = 0 : i64, scratch_operands = 0 : i64, tpu.core_type = #tpu.core_type<tc>, window_params = [{transform_indices = @transform_0, window_bounds = array<i64: 8, 400>}, {pipeline_mode = #tpu.pipeline_mode<synchronous>, transform_indices = @transform_1, window_bounds = array<i64: 400, 128>}, {pipeline_mode = #tpu.pipeline_mode<synchronous>, transform_indices = @transform_2, window_bounds = array<i64: 1, 128>}, {pipeline_mode = #tpu.pipeline_mode<synchronous>, transform_indices = @transform_3, window_bounds = array<i64: 128, 128>}, {pipeline_mode = #tpu.pipeline_mode<synchronous>, transform_indices = @transform_4, window_bounds = array<i64: 1, 128>}, {pipeline_mode = #tpu.pipeline_mode<synchronous>, transform_indices = @transform_5, window_bounds = array<i64: 128, 128>}, {pipeline_mode = #tpu.pipeline_mode<synchronous>, transform_indices = @transform_6, window_bounds = array<i64: 1, 128>}, {transform_indices = @transform_7, window_bounds = array<i64: 8, 128>}]} {
    %c0 = arith.constant 0 : index
    %c0_0 = arith.constant 0 : index
    %0 = vector.load %arg1[%c0, %c0_0] : memref<8x400xf32, #tpu.memory_space<vmem>>, vector<8x400xf32>
    %c0_1 = arith.constant 0 : index
    %c0_2 = arith.constant 0 : index
    %1 = vector.load %arg2[%c0_1, %c0_2] : memref<400x128xf32, #tpu.memory_space<vmem>>, vector<400x128xf32>
    %cst = arith.constant dense<0.000000e+00> : vector<8x128xf32>
    %2 = tpu.matmul %0, %1, %cst {dimension_numbers = #tpu.dot_dimension_numbers<[1], [0], [0], [1], [0, 0, 1, 1], [], []>} : vector<8x400xf32>, vector<400x128xf32>, vector<8x128xf32> -> vector<8x128xf32>
    %c0_3 = arith.constant 0 : index
    %c0_4 = arith.constant 0 : index
    %3 = vector.load %arg3[%c0_3, %c0_4] : memref<1x128xf32, #tpu.memory_space<vmem>>, vector<1x128xf32>
    %4 = vector.broadcast %3 : vector<1x128xf32> to vector<8x128xf32>
    %5 = arith.addf %2, %4 : vector<8x128xf32>
    %cst_5 = arith.constant 0.000000e+00 : f32
    %6 = vector.broadcast %cst_5 : f32 to vector<8x128xf32>
    %7 = arith.maximumf %5, %6 : vector<8x128xf32>
    %c0_6 = arith.constant 0 : index
    %c0_7 = arith.constant 0 : index
    %8 = vector.load %arg4[%c0_6, %c0_7] : memref<128x128xf32, #tpu.memory_space<vmem>>, vector<128x128xf32>
    %cst_8 = arith.constant dense<0.000000e+00> : vector<8x128xf32>
    %9 = tpu.matmul %7, %8, %cst_8 {dimension_numbers = #tpu.dot_dimension_numbers<[1], [0], [0], [1], [0, 0, 1, 1], [], []>} : vector<8x128xf32>, vector<128x128xf32>, vector<8x128xf32> -> vector<8x128xf32>
    %c0_9 = arith.constant 0 : index
    %c0_10 = arith.constant 0 : index
    %10 = vector.load %arg5[%c0_9, %c0_10] : memref<1x128xf32, #tpu.memory_space<vmem>>, vector<1x128xf32>
    %11 = vector.broadcast %10 : vector<1x128xf32> to vector<8x128xf32>
    %12 = arith.addf %9, %11 : vector<8x128xf32>
    %cst_11 = arith.constant 0.000000e+00 : f32
    %13 = vector.broadcast %cst_11 : f32 to vector<8x128xf32>
    %14 = arith.maximumf %12, %13 : vector<8x128xf32>
    %c0_12 = arith.constant 0 : index
    %c0_13 = arith.constant 0 : index
    %15 = vector.load %arg6[%c0_12, %c0_13] : memref<128x128xf32, #tpu.memory_space<vmem>>, vector<128x128xf32>
    %cst_14 = arith.constant dense<0.000000e+00> : vector<8x128xf32>
    %16 = tpu.matmul %14, %15, %cst_14 {dimension_numbers = #tpu.dot_dimension_numbers<[1], [0], [0], [1], [0, 0, 1, 1], [], []>} : vector<8x128xf32>, vector<128x128xf32>, vector<8x128xf32> -> vector<8x128xf32>
    %c0_15 = arith.constant 0 : index
    %c0_16 = arith.constant 0 : index
    %17 = vector.load %arg7[%c0_15, %c0_16] : memref<1x128xf32, #tpu.memory_space<vmem>>, vector<1x128xf32>
    %18 = vector.broadcast %17 : vector<1x128xf32> to vector<8x128xf32>
    %19 = arith.addf %16, %18 : vector<8x128xf32>
    %c0_17 = arith.constant 0 : index
    %c0_18 = arith.constant 0 : index
    %20 = vector.load %arg8[%c0_17, %c0_18] : memref<8x128xf32, #tpu.memory_space<vmem>>, vector<8x128xf32>
    tpu.vector_store %arg8[%c0_17, %c0_18], %19 {strides = array<i32>} : memref<8x128xf32, #tpu.memory_space<vmem>>, vector<8x128xf32>,
    return
  }
  func.func @transform_0(%arg0: i32) -> (i32, i32) {
    %c0_i32 = arith.constant 0 : i32
    %c0_i32_0 = arith.constant 0 : i32
    return %arg0, %c0_i32 : i32, i32
  }
  func.func @transform_1(%arg0: i32) -> (i32, i32) {
    %c0_i32 = arith.constant 0 : i32
    %c0_i32_0 = arith.constant 0 : i32
    %c0_i32_1 = arith.constant 0 : i32
    return %c0_i32, %c0_i32_0 : i32, i32
  }
  func.func @transform_2(%arg0: i32) -> (i32, i32) {
    %c0_i32 = arith.constant 0 : i32
    %c0_i32_0 = arith.constant 0 : i32
    %c0_i32_1 = arith.constant 0 : i32
    return %c0_i32, %c0_i32_0 : i32, i32
  }
  func.func @transform_3(%arg0: i32) -> (i32, i32) {
    %c0_i32 = arith.constant 0 : i32
    %c0_i32_0 = arith.constant 0 : i32
    %c0_i32_1 = arith.constant 0 : i32
    return %c0_i32, %c0_i32_0 : i32, i32
  }
  func.func @transform_4(%arg0: i32) -> (i32, i32) {
    %c0_i32 = arith.constant 0 : i32
    %c0_i32_0 = arith.constant 0 : i32
    %c0_i32_1 = arith.constant 0 : i32
    return %c0_i32, %c0_i32_0 : i32, i32
  }
  func.func @transform_5(%arg0: i32) -> (i32, i32) {
    %c0_i32 = arith.constant 0 : i32
    %c0_i32_0 = arith.constant 0 : i32
    %c0_i32_1 = arith.constant 0 : i32
    return %c0_i32, %c0_i32_0 : i32, i32
  }
  func.func @transform_6(%arg0: i32) -> (i32, i32) {
    %c0_i32 = arith.constant 0 : i32
    %c0_i32_0 = arith.constant 0 : i32
    %c0_i32_1 = arith.constant 0 : i32
    return %c0_i32, %c0_i32_0 : i32, i32
  }
  func.func @transform_7(%arg0: i32) -> (i32, i32) {
    %c0_i32 = arith.constant 0 : i32
    %c0_i32_0 = arith.constant 0 : i32
    return %arg0, %c0_i32 : i32, i32
  }
}

</mosaic_0001>

<llo_original>
// kernel: cnn_web_forward.3
$region0: #{cnn_web_forward.3}
  #allocation0 [shape = 'u32[]', space=smem, size = 0x4, offset = 0x4, fixed_abs, tag = 'smem constant byte address 0x4 - core index']
  #allocation1 [shape = 'u32[144,128]{1,0:T(1,128)}', space=vmem, size = 0x12000, scoped, tag = 'internal scratch']
  %s0 = inlined_call_operand.vmem [shape: f32[2,264,128], index: 0, kind: input, shape index: {}]
  %s1 = inlined_call_operand.vmem [shape: f32[9,128,128], index: 1, kind: input, shape index: {}]
  %s2 = inlined_call_operand.vmem [shape: f32[1,128], index: 2, kind: input, shape index: {}]
  %s3 = inlined_call_operand.vmem [shape: f32[2,224,128], index: 3, kind: output, shape index: {}]
  %s4 = sld [smem:[#allocation0]]
  $region45: #{cnn_web_forward.3} parent=0
    _
  %s6 = ssub.s32 1, %s4
  %s7 = scalar_select 0, %s6, %s4
  loop: start=0, step=1, limit=4
  $region2: #{cnn_web_forward.3} parent=0 // loop_pre_header
    _
  $region3: #{cnn_web_forward.3} parent=0 // loop_header
    %s9 = sphi 0, %s13
    %p10 = scmp.ge.s32.totalorder %s9, 4
    %s19 = sphi 0, %s21
    %s22 = sphi 0, %s19
    %s23 = sphi 0, %s22
    %s39 = sphi 0, %s23
    %s43 = sphi 0, %s43
    %s45 = sphi 0, %s43
    %s46 = sphi 0, %s45
    %s60 = sphi 0, %s46
    %s64 = sphi 0, %s64
    %s66 = sphi 0, %s64
    %s67 = sphi 0, %s66
    %s81 = sphi 0, %s67
    %s87 = sphi 0, %s89
    %s90 = sphi 0, %s87
    %s91 = sphi 0, %s90
    %s107 = sphi 0, %s91
  $region4: #{cnn_web_forward.3} parent=0 // loop_header_branch
    %12 = sbr.rel (%p10) target = $region8
  $region5: #{cnn_web_forward.3} parent=0 // loop_body
    %s14 = ssub.s32 %s9, 1
    %s15 = ssub.s32 %s9, 2
    %s16 = sadd.s32 %s9, 1
    %s17 = ssub.s32 %s9, %s16
    %p18 = scmp.eq.s32.totalorder %s17, 0
    %s20 = sadd.s32 %s19, 1
    %s21 = scalar_select %p18, %s19, %s20
    %p24 = pneg %p18
    %p25 = scmp.eq.s32.totalorder %s9, 1
    %p26 = por %p24, %p25
    %p27 = scmp.ne.s32.totalorder %s19, %s22
    %p28 = scmp.eq.s32.totalorder %s9, 0
    %p29 = por %p27, %p28
    %p30 = scmp.ne.s32.totalorder %s19, %s22
    %p31 = scmp.eq.s32.totalorder %s14, 1
    %p32 = por %p30, %p31
    %p33 = scmp.ne.s32.totalorder %s22, %s23
    %p34 = scmp.eq.s32.totalorder %s14, 0
    %p35 = por %p33, %p34
    %p36 = scmp.ne.s32.totalorder %s22, %s23
    %p37 = scmp.eq.s32.totalorder %s15, 1
    %p38 = por %p36, %p37
    %p40 = scmp.ne.s32.totalorder %s23, %s39
    %p41 = scmp.eq.s32.totalorder %s15, 0
    %p42 = por %p40, %p41
    %s44 = sadd.s32 %s43, 1
    %p47 = scmp.eq.s32.totalorder %s9, 1
    %p48 = scmp.ne.s32.totalorder %s43, %s45
    %p49 = scmp.eq.s32.totalorder %s9, 0
    %p50 = por %p48, %p49
    %p51 = scmp.ne.s32.totalorder %s43, %s45
    %p52 = scmp.eq.s32.totalorder %s14, 1
    %p53 = por %p51, %p52
    %p54 = scmp.ne.s32.totalorder %s45, %s46
    %p55 = scmp.eq.s32.totalorder %s14, 0
    %p56 = por %p54, %p55
    %p57 = scmp.ne.s32.totalorder %s45, %s46
    %p58 = scmp.eq.s32.totalorder %s15, 1
    %p59 = por %p57, %p58
    %p61 = scmp.ne.s32.totalorder %s46, %s60
    %p62 = scmp.eq.s32.totalorder %s15, 0
    %p63 = por %p61, %p62
    %s65 = sadd.s32 %s64, 1
    %p68 = scmp.eq.s32.totalorder %s9, 1
    %p69 = scmp.ne.s32.totalorder %s64, %s66
    %p70 = scmp.eq.s32.totalorder %s9, 0
    %p71 = por %p69, %p70
    %p72 = scmp.ne.s32.totalorder %s64, %s66
    %p73 = scmp.eq.s32.totalorder %s14, 1
    %p74 = por %p72, %p73
    %p75 = scmp.ne.s32.totalorder %s66, %s67
    %p76 = scmp.eq.s32.totalorder %s14, 0
    %p77 = por %p75, %p76
    %p78 = scmp.ne.s32.totalorder %s66, %s67
    %p79 = scmp.eq.s32.totalorder %s15, 1
    %p80 = por %p78, %p79
    %p82 = scmp.ne.s32.totalorder %s67, %s81
    %p83 = scmp.eq.s32.totalorder %s15, 0
    %p84 = por %p82, %p83
    %s85 = ssub.s32 %s9, %s16
    %p86 = scmp.eq.s32.totalorder %s85, 0
    %s88 = sadd.s32 %s87, 1
    %s89 = scalar_select %p86, %s87, %s88
    %p92 = pneg %p86
    %p93 = scmp.eq.s32.totalorder %s9, 1
    %p94 = por %p92, %p93
    %p95 = scmp.ne.s32.totalorder %s87, %s90
    %p96 = scmp.eq.s32.totalorder %s9, 0
    %p97 = por %p95, %p96
    %p98 = scmp.ne.s32.totalorder %s87, %s90
    %p99 = scmp.eq.s32.totalorder %s14, 1
    %p100 = por %p98, %p99
    %p101 = scmp.ne.s32.totalorder %s90, %s91
    %p102 = scmp.eq.s32.totalorder %s14, 0
    %p103 = por %p101, %p102
    %p104 = scmp.ne.s32.totalorder %s90, %s91
    %p105 = scmp.eq.s32.totalorder %s15, 1
    %p106 = por %p104, %p105
    %p108 = scmp.ne.s32.totalorder %s91, %s107
    %p109 = scmp.eq.s32.totalorder %s15, 0
    %p110 = por %p108, %p109
    %p111 = scmp.le.s32.totalorder 1, %s9
    %p112 = scmp.lt.s32.totalorder %s9, 3
    %p113 = pnand %p111, %p112
    %p114 = pneg %p113
    // Predicated region
    $region9: #{cnn_web_forward.3} parent=5 // pred_check
      _
    $region10: #{cnn_web_forward.3} parent=5 // pred_check_branch
      %116 = sbr.rel (%p113) target = $region12
    $region11: #{cnn_web_forward.3} parent=5 // pred_region
      %s117 = ssub.s32 %s9, 1
      // Predicated region
      $region13: #{cnn_web_forward.3} parent=11 // pred_check
        %p118 = pneg %p56
      $region14: #{cnn_web_forward.3} parent=11 // pred_check_branch
        %120 = sbr.rel (%p118) target = $region16
      $region15: #{cnn_web_forward.3} parent=11 // pred_region
        _
      $region16: #{cnn_web_forward.3} parent=11 // pred_fallthru
        _
      // Predicated region
      $region17: #{cnn_web_forward.3} parent=11 // pred_check
        %p121 = pneg %p77
      $region18: #{cnn_web_forward.3} parent=11 // pred_check_branch
        %123 = sbr.rel (%p121) target = $region20
      $region19: #{cnn_web_forward.3} parent=11 // pred_region
        _
      $region20: #{cnn_web_forward.3} parent=11 // pred_fallthru
        _
    $region12: #{cnn_web_forward.3} parent=5 // pred_fallthru
      _
    %p124 = scmp.lt.s32.totalorder %s9, 2
    // Predicated region
    $region21: #{cnn_web_forward.3} parent=5 // pred_check
      %p125 = pneg %p124
    $region22: #{cnn_web_forward.3} parent=5 // pred_check_branch
      %127 = sbr.rel (%p125) target = $region24
    $region23: #{cnn_web_forward.3} parent=5 // pred_region
      // Predicated region
      $region25: #{cnn_web_forward.3} parent=23 // pred_check
        %p128 = pneg %p29
      $region26: #{cnn_web_forward.3} parent=23 // pred_check_branch
        %130 = sbr.rel (%p128) target = $region28
      $region27: #{cnn_web_forward.3} parent=23 // pred_region
        %p131 = scmp.lt.s32.totalorder %s9, 1
        %s132 = scalar_select %p131, %s9, 1
        %s133 = smul.addr %s132, 33
        %s134 = smul.addr %s133, 8
        %s135 = scalar_lea.vmem %s0, %s134
      $region28: #{cnn_web_forward.3} parent=23 // pred_fallthru
        _
    $region24: #{cnn_web_forward.3} parent=5 // pred_fallthru
      _
    %p136 = scmp.le.s32.totalorder 1, %s9
    %p137 = scmp.lt.s32.totalorder %s9, 3
    %p138 = pnand %p136, %p137
    %p139 = pneg %p138
    // Predicated region
    $region29: #{cnn_web_forward.3} parent=5 // pred_check
      _
    $region30: #{cnn_web_forward.3} parent=5 // pred_check_branch
      %141 = sbr.rel (%p138) target = $region32
    $region31: #{cnn_web_forward.3} parent=5 // pred_region
      %s142 = ssub.s32 %s9, 1
      %p143 = scmp.lt.s32.totalorder %s14, 1
      %s144 = scalar_select %p143, %s14, 1
      %s145 = smul.addr %s144, 33
      %s146 = smul.addr %s145, 8
      %s147 = scalar_lea.vmem %s0, %s146
      %p148 = pneg %p35
      %p149 = pneg %p32
      %p150 = pneg %p56
      %p151 = pneg %p53
      %p152 = pneg %p77
      %p153 = pneg %p74
      %p154 = pneg %p103
      %p155 = pneg %p100
      %p156 = scmp.lt.s32.totalorder %s14, 1
      %s157 = scalar_select %p156, %s14, 1
      %s158 = smul.addr %s157, 28
      %s159 = smul.addr %s158, 8
      %s160 = scalar_lea.vmem %s3, %s159
      %p161 = scmp.lt.s32.totalorder %s14, 1
      %s162 = scalar_select %p161, %s14, 1
      %s163 = smul.addr %s162, 33
      %s164 = smul.addr %s163, 8
      %s165 = scalar_lea.vmem %s0, %s164
      %p166 = scmp.lt.s32.totalorder %s14, 1
      %s167 = scalar_select %p166, %s14, 1
      %s168 = smul.addr %s167, 28
      %s169 = smul.addr %s168, 8
      %s170 = scalar_lea.vmem %s3, %s169
      %v171 = vld [vmem:[%s165] sm:$0xff]
      %v172 = vld [vmem:[%s165 + $0x8] sm:$0xff]
      %v173 = vld [vmem:[%s165 + $0x10] sm:$0xff]
      %v174 = vld [vmem:[%s165 + $0x18] sm:$0xff]
      %v175 = vld [vmem:[%s165 + $0x20] sm:$0xff]
      %v176 = vld [vmem:[%s165 + $0x28] sm:$0xff]
      %v177 = vld [vmem:[%s165 + $0x30] sm:$0xff]
      %v178 = vld [vmem:[%s165 + $0x38] sm:$0xff]
      %v179 = vld [vmem:[%s165 + $0x40] sm:$0xff]
      %v180 = vld [vmem:[%s165 + $0x48] sm:$0xff]
      %v181 = vld [vmem:[%s165 + $0x50] sm:$0xff]
      %v182 = vld [vmem:[%s165 + $0x58] sm:$0xff]
      %v183 = vld [vmem:[%s165 + $0x60] sm:$0xff]
      %v184 = vld [vmem:[%s165 + $0x68] sm:$0xff]
      %v185 = vld [vmem:[%s165 + $0x70] sm:$0xff]
      %v186 = vld [vmem:[%s165 + $0x78] sm:$0xff]
      %v187 = vld [vmem:[%s165 + $0x80] sm:$0xff]
      %v188 = vld [vmem:[%s165 + $0x88] sm:$0xff]
      %v189 = vld [vmem:[%s165 + $0x90] sm:$0xff]
      %v190 = vld [vmem:[%s165 + $0x98] sm:$0xff]
      %v191 = vld [vmem:[%s165 + $0xa0] sm:$0xff]
      %v192 = vld [vmem:[%s165 + $0xa8] sm:$0xff]
      %v193 = vld [vmem:[%s165 + $0xb0] sm:$0xff]
      %v194 = vld [vmem:[%s165 + $0xb8] sm:$0xff]
      %v195 = vld [vmem:[%s165 + $0xc0] sm:$0xff]
      %v196 = vld [vmem:[%s165 + $0xc8] sm:$0xff]
      %v197 = vld [vmem:[%s165 + $0xd0] sm:$0xff]
      %v198 = vld [vmem:[%s165 + $0xd8] sm:$0xff]
      %v199 = vld [vmem:[%s1] sm:$0xff]
      %v200 = vld [vmem:[%s1 + $0x8] sm:$0xff]
      %v201 = vld [vmem:[%s1 + $0x10] sm:$0xff]
      %v202 = vld [vmem:[%s1 + $0x18] sm:$0xff]
      %v203 = vld [vmem:[%s1 + $0x20] sm:$0xff]
      %v204 = vld [vmem:[%s1 + $0x28] sm:$0xff]
      %v205 = vld [vmem:[%s1 + $0x30] sm:$0xff]
      %v206 = vld [vmem:[%s1 + $0x38] sm:$0xff]
      %v207 = vld [vmem:[%s1 + $0x40] sm:$0xff]
      %v208 = vld [vmem:[%s1 + $0x48] sm:$0xff]
      %v209 = vld [vmem:[%s1 + $0x50] sm:$0xff]
      %v210 = vld [vmem:[%s1 + $0x58] sm:$0xff]
      %v211 = vld [vmem:[%s1 + $0x60] sm:$0xff]
      %v212 = vld [vmem:[%s1 + $0x68] sm:$0xff]
      %v213 = vld [vmem:[%s1 + $0x70] sm:$0xff]
      %v214 = vld [vmem:[%s1 + $0x78] sm:$0xff]
      %v215 = vld [vmem:[%s165 + $0x1] sm:$0xff]
      %v216 = vld [vmem:[%s165 + $0x9] sm:$0xff]
      %v217 = vld [vmem:[%s165 + $0x11] sm:$0xff]
      %v218 = vld [vmem:[%s165 + $0x19] sm:$0xff]
      %v219 = vld [vmem:[%s165 + $0x21] sm:$0xff]
      %v220 = vld [vmem:[%s165 + $0x29] sm:$0xff]
      %v221 = vld [vmem:[%s165 + $0x31] sm:$0xff]
      %v222 = vld [vmem:[%s165 + $0x39] sm:$0xff]
      %v223 = vld [vmem:[%s165 + $0x41] sm:$0xff]
      %v224 = vld [vmem:[%s165 + $0x49] sm:$0xff]
      %v225 = vld [vmem:[%s165 + $0x51] sm:$0xff]
      %v226 = vld [vmem:[%s165 + $0x59] sm:$0xff]
      %v227 = vld [vmem:[%s165 + $0x61] sm:$0xff]
      %v228 = vld [vmem:[%s165 + $0x69] sm:$0xff]
      %v229 = vld [vmem:[%s165 + $0x71] sm:$0xff]
      %v230 = vld [vmem:[%s165 + $0x79] sm:$0xff]
      %v231 = vld [vmem:[%s165 + $0x81] sm:$0xff]
      %v232 = vld [vmem:[%s165 + $0x89] sm:$0xff]
      %v233 = vld [vmem:[%s165 + $0x91] sm:$0xff]
      %v234 = vld [vmem:[%s165 + $0x99] sm:$0xff]
      %v235 = vld [vmem:[%s165 + $0xa1] sm:$0xff]
      %v236 = vld [vmem:[%s165 + $0xa9] sm:$0xff]
      %v237 = vld [vmem:[%s165 + $0xb1] sm:$0xff]
      %v238 = vld [vmem:[%s165 + $0xb9] sm:$0xff]
      %v239 = vld [vmem:[%s165 + $0xc1] sm:$0xff]
      %v240 = vld [vmem:[%s165 + $0xc9] sm:$0xff]
      %v241 = vld [vmem:[%s165 + $0xd1] sm:$0xff]
      %v242 = vld [vmem:[%s165 + $0xd9] sm:$0xff]
      %s243 = scalar_lea.vmem %s1, 128
      %v244 = vld [vmem:[%s243] sm:$0xff]
      %v245 = vld [vmem:[%s243 + $0x8] sm:$0xff]
      %v246 = vld [vmem:[%s243 + $0x10] sm:$0xff]
      %v247 = vld [vmem:[%s243 + $0x18] sm:$0xff]
      %v248 = vld [vmem:[%s243 + $0x20] sm:$0xff]
      %v249 = vld [vmem:[%s243 + $0x28] sm:$0xff]
      %v250 = vld [vmem:[%s243 + $0x30] sm:$0xff]
      %v251 = vld [vmem:[%s243 + $0x38] sm:$0xff]
      %v252 = vld [vmem:[%s243 + $0x40] sm:$0xff]
      %v253 = vld [vmem:[%s243 + $0x48] sm:$0xff]
      %v254 = vld [vmem:[%s243 + $0x50] sm:$0xff]
      %v255 = vld [vmem:[%s243 + $0x58] sm:$0xff]
      %v256 = vld [vmem:[%s243 + $0x60] sm:$0xff]
      %v257 = vld [vmem:[%s243 + $0x68] sm:$0xff]
      %v258 = vld [vmem:[%s243 + $0x70] sm:$0xff]
      %v259 = vld [vmem:[%s243 + $0x78] sm:$0xff]
      %260 = vmatprep.subr.mxu0 0.0
      %261 = vmatpush1.msra.mxu0 %v244
      %262 = vmatprep.subr.mxu0 0.0
      %263 = vmatpush1.msra.mxu0 %v245
      %264 = vmatprep.subr.mxu0 0.0
      %265 = vmatpush1.msra.mxu0 %v246
      %266 = vmatprep.subr.mxu0 0.0
      %267 = vmatpush1.msra.mxu0 %v247
      %268 = vmatprep.subr.mxu0 0.0
      %269 = vmatpush1.msra.mxu0 %v248
      %270 = vmatprep.subr.mxu0 0.0
      %271 = vmatpush1.msra.mxu0 %v249
      %272 = vmatprep.subr.mxu0 0.0
      %273 = vmatpush1.msra.mxu0 %v250
      %274 = vmatprep.subr.mxu0 0.0
      %275 = vmatpush1.msra.mxu0 %v251
      %276 = vmatprep.subr.mxu0 0.0
      %277 = vmatpush1.msra.mxu0 %v252
      %278 = vmatprep.subr.mxu0 0.0
      %279 = vmatpush1.msra.mxu0 %v253
      %280 = vmatprep.subr.mxu0 0.0
      %281 = vmatpush1.msra.mxu0 %v254
      %282 = vmatprep.subr.mxu0 0.0
      %283 = vmatpush1.msra.mxu0 %v255
      %284 = vmatprep.subr.mxu0 0.0
      %285 = vmatpush1.msra.mxu0 %v256
      %286 = vmatprep.subr.mxu0 0.0
      %287 = vmatpush1.msra.mxu0 %v257
      %288 = vmatprep.subr.mxu0 0.0
      %289 = vmatpush1.msra.mxu0 %v258
      %290 = vmatprep.subr.mxu0 0.0
      %291 = vmatpush1.msra.mxu0 %v259
      %292 = vmatprep.subr.mxu0 0.0
      %293 = vmatpush1.msra.mxu0 0.0
      %294 = vmatprep.subr.mxu0 0.0
      %295 = vmatpush1.msra.mxu0 0.0
      %296 = vmatprep.subr.mxu0 0.0
      %297 = vmatpush1.msra.mxu0 0.0
      %298 = vmatprep.subr.mxu0 0.0
      %299 = vmatpush1.msra.mxu0 0.0
      %300 = vmatprep.subr.mxu0 0.0
      %301 = vmatpush1.msra.mxu0 0.0
      %302 = vmatprep.subr.mxu0 0.0
      %303 = vmatpush1.msra.mxu0 0.0
      %304 = vmatprep.subr.mxu0 0.0
      %305 = vmatpush1.msra.mxu0 0.0
      %306 = vmatprep.subr.mxu0 0.0
      %307 = vmatpush1.msra.mxu0 0.0
      %308 = vmatprep.subr.mxu0 0.0
      %309 = vmatpush1.msra.mxu0 0.0
      %310 = vmatprep.subr.mxu0 0.0
      %311 = vmatpush1.msra.mxu0 0.0
      %312 = vmatprep.subr.mxu0 0.0
      %313 = vmatpush1.msra.mxu0 0.0
      %314 = vmatprep.subr.mxu0 0.0
      %315 = vmatpush1.msra.mxu0 0.0
      %316 = vmatprep.subr.mxu0 0.0
      %317 = vmatpush1.msra.mxu0 0.0
      %318 = vmatprep.subr.mxu0 0.0
      %319 = vmatpush1.msra.mxu0 0.0
      %320 = vmatprep.subr.mxu0 0.0
      %321 = vmatpush1.msra.mxu0 0.0
      %322 = vmatprep.subr.mxu0 0.0
      %323 = vmatpush1.msra.mxu0 0.0
      %324 = vmatprep.mubr.f32.mxu0 0.0
      %325 = vmatmul.mubr.f32.gmra.mrb[0].mxu0 %v215
      %v326 = vpop.f32.mrb[0].mxu0
      %v327 = vadd.f32 0.0, %v326
      %v328 = vpop.f32.mrb[0].mxu0
      %329 = vmatprep.mubr.f32.mxu0 0.0
      %330 = vmatmul.mubr.f32.gmra.mrb[0].mxu0 %v216
      %v331 = vpop.f32.mrb[0].mxu0
      %v332 = vadd.f32 0.0, %v331
      %v333 = vpop.f32.mrb[0].mxu0
      %334 = vmatprep.mubr.f32.mxu0 0.0
      %335 = vmatmul.mubr.f32.gmra.mrb[0].mxu0 %v217
      %v336 = vpop.f32.mrb[0].mxu0
      %v337 = vadd.f32 0.0, %v336
      %v338 = vpop.f32.mrb[0].mxu0
      %339 = vmatprep.mubr.f32.mxu0 0.0
      %340 = vmatmul.mubr.f32.gmra.mrb[0].mxu0 %v218
      %v341 = vpop.f32.mrb[0].mxu0
      %v342 = vadd.f32 0.0, %v341
      %v343 = vpop.f32.mrb[0].mxu0
      %344 = vmatprep.mubr.f32.mxu0 0.0
      %345 = vmatmul.mubr.f32.gmra.mrb[0].mxu0 %v219
      %v346 = vpop.f32.mrb[0].mxu0
      %v347 = vadd.f32 0.0, %v346
      %v348 = vpop.f32.mrb[0].mxu0
      %349 = vmatprep.mubr.f32.mxu0 0.0
      %350 = vmatmul.mubr.f32.gmra.mrb[0].mxu0 %v220
      %v351 = vpop.f32.mrb[0].mxu0
      %v352 = vadd.f32 0.0, %v351
      %v353 = vpop.f32.mrb[0].mxu0
      %354 = vmatprep.mubr.f32.mxu0 0.0
      %355 = vmatmul.mubr.f32.gmra.mrb[0].mxu0 %v221
      %v356 = vpop.f32.mrb[0].mxu0
      %v357 = vadd.f32 0.0, %v356
      %v358 = vpop.f32.mrb[0].mxu0
      %359 = vmatprep.mubr.f32.mxu0 0.0
      %360 = vmatmul.mubr.f32.gmra.mrb[0].mxu0 %v222
      %v361 = vpop.f32.mrb[0].mxu0
      %v362 = vadd.f32 0.0, %v361
      %v363 = vpop.f32.mrb[0].mxu0
      %364 = vmatprep.mubr.f32.mxu0 0.0
      %365 = vmatmul.mubr.f32.gmra.mrb[0].mxu0 %v223
      %v366 = vpop.f32.mrb[0].mxu0
      %v367 = vadd.f32 0.0, %v366
      %v368 = vpop.f32.mrb[0].mxu0
      %369 = vmatprep.mubr.f32.mxu0 0.0
      %370 = vmatmul.mubr.f32.gmra.mrb[0].mxu0 %v224
      %v371 = vpop.f32.mrb[0].mxu0
      %v372 = vadd.f32 0.0, %v371
      %v373 = vpop.f32.mrb[0].mxu0
      %374 = vmatprep.mubr.f32.mxu0 0.0
      %375 = vmatmul.mubr.f32.gmra.mrb[0].mxu0 %v225
      %v376 = vpop.f32.mrb[0].mxu0
      %v377 = vadd.f32 0.0, %v376
      %v378 = vpop.f32.mrb[0].mxu0
      %379 = vmatprep.mubr.f32.mxu0 0.0
      %380 = vmatmul.mubr.f32.gmra.mrb[0].mxu0 %v226
      %v381 = vpop.f32.mrb[0].mxu0
      %v382 = vadd.f32 0.0, %v381
      %v383 = vpop.f32.mrb[0].mxu0
      %384 = vmatprep.mubr.f32.mxu0 0.0
      %385 = vmatmul.mubr.f32.gmra.mrb[0].mxu0 %v227
      %v386 = vpop.f32.mrb[0].mxu0
      %v387 = vadd.f32 0.0, %v386
      %v388 = vpop.f32.mrb[0].mxu0
      %389 = vmatprep.mubr.f32.mxu0 0.0
      %390 = vmatmul.mubr.f32.gmra.mrb[0].mxu0 %v228
      %v391 = vpop.f32.mrb[0].mxu0
      %v392 = vadd.f32 0.0, %v391
      %v393 = vpop.f32.mrb[0].mxu0
      %394 = vmatprep.mubr.f32.mxu0 0.0
      %395 = vmatmul.mubr.f32.gmra.mrb[0].mxu0 %v229
      %v396 = vpop.f32.mrb[0].mxu0
      %v397 = vadd.f32 0.0, %v396
      %v398 = vpop.f32.mrb[0].mxu0
      %399 = vmatprep.mubr.f32.mxu0 0.0
      %400 = vmatmul.mubr.f32.gmra.mrb[0].mxu0 %v230
      %v401 = vpop.f32.mrb[0].mxu0
      %v402 = vadd.f32 0.0, %v401
      %v403 = vpop.f32.mrb[0].mxu0
      %404 = vmatprep.mubr.f32.mxu0 0.0
      %405 = vmatmul.mubr.f32.gmra.mrb[0].mxu0 %v231
      %v406 = vpop.f32.mrb[0].mxu0
      %v407 = vadd.f32 0.0, %v406
      %v408 = vpop.f32.mrb[0].mxu0
      %409 = vmatprep.mubr.f32.mxu0 0.0
      %410 = vmatmul.mubr.f32.gmra.mrb[0].mxu0 %v232
      %v411 = vpop.f32.mrb[0].mxu0
      %v412 = vadd.f32 0.0, %v411
      %v413 = vpop.f32.mrb[0].mxu0
      %414 = vmatprep.mubr.f32.mxu0 0.0
      %415 = vmatmul.mubr.f32.gmra.mrb[0].mxu0 %v233
      %v416 = vpop.f32.mrb[0].mxu0
      %v417 = vadd.f32 0.0, %v416
      %v418 = vpop.f32.mrb[0].mxu0
      %419 = vmatprep.mubr.f32.mxu0 0.0
      %420 = vmatmul.mubr.f32.gmra.mrb[0].mxu0 %v234
      %v421 = vpop.f32.mrb[0].mxu0
      %v422 = vadd.f32 0.0, %v421
      %v423 = vpop.f32.mrb[0].mxu0
      %424 = vmatprep.mubr.f32.mxu0 0.0
      %425 = vmatmul.mubr.f32.gmra.mrb[0].mxu0 %v235
      %v426 = vpop.f32.mrb[0].mxu0
      %v427 = vadd.f32 0.0, %v426
      %v428 = vpop.f32.mrb[0].mxu0
      %429 = vmatprep.mubr.f32.mxu0 0.0
      %430 = vmatmul.mubr.f32.gmra.mrb[0].mxu0 %v236
      %v431 = vpop.f32.mrb[0].mxu0
      %v432 = vadd.f32 0.0, %v431
      %v433 = vpop.f32.mrb[0].mxu0
      %434 = vmatprep.mubr.f32.mxu0 0.0
      %435 = vmatmul.mubr.f32.gmra.mrb[0].mxu0 %v237
      %v436 = vpop.f32.mrb[0].mxu0
      %v437 = vadd.f32 0.0, %v436
      %v438 = vpop.f32.mrb[0].mxu0
      %439 = vmatprep.mubr.f32.mxu0 0.0
      %440 = vmatmul.mubr.f32.gmra.mrb[0].mxu0 %v238
      %v441 = vpop.f32.mrb[0].mxu0
      %v442 = vadd.f32 0.0, %v441
      %v443 = vpop.f32.mrb[0].mxu0
      %444 = vmatprep.mubr.f32.mxu0 0.0
      %445 = vmatmul.mubr.f32.gmra.mrb[0].mxu0 %v239
      %v446 = vpop.f32.mrb[0].mxu0
      %v447 = vadd.f32 0.0, %v446
      %v448 = vpop.f32.mrb[0].mxu0
      %449 = vmatprep.mubr.f32.mxu0 0.0
      %450 = vmatmul.mubr.f32.gmra.mrb[0].mxu0 %v240
      %v451 = vpop.f32.mrb[0].mxu0
      %v452 = vadd.f32 0.0, %v451
      %v453 = vpop.f32.mrb[0].mxu0
      %454 = vmatprep.mubr.f32.mxu0 0.0
      %455 = vmatmul.mubr.f32.gmra.mrb[0].mxu0 %v241
      %v456 = vpop.f32.mrb[0].mxu0
      %v457 = vadd.f32 0.0, %v456
      %v458 = vpop.f32.mrb[0].mxu0
      %459 = vmatprep.mubr.f32.mxu0 0.0
      %460 = vmatmul.mubr.f32.gmra.mrb[0].mxu0 %v242
      %v461 = vpop.f32.mrb[0].mxu0
      %v462 = vadd.f32 0.0, %v461
      %v463 = vpop.f32.mrb[0].mxu0
      %464 = vdwg.mxu0
      %465 = vmatprep.subr.mxu0 0.0
      %466 = vmatpush1.msra.mxu0 %v199
      %467 = vmatprep.subr.mxu0 0.0
      %468 = vmatpush1.msra.mxu0 %v200
      %469 = vmatprep.subr.mxu0 0.0
      %470 = vmatpush1.msra.mxu0 %v201
      %471 = vmatprep.subr.mxu0 0.0
      %472 = vmatpush1.msra.mxu0 %v202
      %473 = vmatprep.subr.mxu0 0.0
      %474 = vmatpush1.msra.mxu0 %v203
      %475 = vmatprep.subr.mxu0 0.0
      %476 = vmatpush1.msra.mxu0 %v204
      %477 = vmatprep.subr.mxu0 0.0
      %478 = vmatpush1.msra.mxu0 %v205
      %479 = vmatprep.subr.mxu0 0.0
      %480 = vmatpush1.msra.mxu0 %v206
      %481 = vmatprep.subr.mxu0 0.0
      %482 = vmatpush1.msra.mxu0 %v207
      %483 = vmatprep.subr.mxu0 0.0
      %484 = vmatpush1.msra.mxu0 %v208
      %485 = vmatprep.subr.mxu0 0.0
      %486 = vmatpush1.msra.mxu0 %v209
      %487 = vmatprep.subr.mxu0 0.0
      %488 = vmatpush1.msra.mxu0 %v210
      %489 = vmatprep.subr.mxu0 0.0
      %490 = vmatpush1.msra.mxu0 %v211
      %491 = vmatprep.subr.mxu0 0.0
      %492 = vmatpush1.msra.mxu0 %v212
      %493 = vmatprep.subr.mxu0 0.0
      %494 = vmatpush1.msra.mxu0 %v213
      %495 = vmatprep.subr.mxu0 0.0
      %496 = vmatpush1.msra.mxu0 %v214
      %497 = vmatprep.subr.mxu0 0.0
      %498 = vmatpush1.msra.mxu0 0.0
      %499 = vmatprep.subr.mxu0 0.0
      %500 = vmatpush1.msra.mxu0 0.0
      %501 = vmatprep.subr.mxu0 0.0
      %502 = vmatpush1.msra.mxu0 0.0
      %503 = vmatprep.subr.mxu0 0.0
      %504 = vmatpush1.msra.mxu0 0.0
      %505 = vmatprep.subr.mxu0 0.0
      %506 = vmatpush1.msra.mxu0 0.0
      %507 = vmatprep.subr.mxu0 0.0
      %508 = vmatpush1.msra.mxu0 0.0
      %509 = vmatprep.subr.mxu0 0.0
      %510 = vmatpush1.msra.mxu0 0.0
      %511 = vmatprep.subr.mxu0 0.0
      %512 = vmatpush1.msra.mxu0 0.0
      %513 = vmatprep.subr.mxu0 0.0
      %514 = vmatpush1.msra.mxu0 0.0
      %515 = vmatprep.subr.mxu0 0.0
      %516 = vmatpush1.msra.mxu0 0.0
      %517 = vmatprep.subr.mxu0 0.0
      %518 = vmatpush1.msra.mxu0 0.0
      %519 = vmatprep.subr.mxu0 0.0
      %520 = vmatpush1.msra.mxu0 0.0
      %521 = vmatprep.subr.mxu0 0.0
      %522 = vmatpush1.msra.mxu0 0.0
      %523 = vmatprep.subr.mxu0 0.0
      %524 = vmatpush1.msra.mxu0 0.0
      %525 = vmatprep.subr.mxu0 0.0
      %526 = vmatpush1.msra.mxu0 0.0
      %527 = vmatprep.subr.mxu0 0.0
      %528 = vmatpush1.msra.mxu0 0.0
      %529 = vmatprep.mubr.f32.mxu0 0.0
      %530 = vmatmul.mubr.f32.gmra.mrb[0].mxu0 %v171
      %v531 = vpop.f32.mrb[0].mxu0
      %v532 = vadd.f32 %v327, %v531
      %v533 = vpop.f32.mrb[0].mxu0
      %534 = vmatprep.mubr.f32.mxu0 0.0
      %535 = vmatmul.mubr.f32.gmra.mrb[0].mxu0 %v172
      %v536 = vpop.f32.mrb[0].mxu0
      %v537 = vadd.f32 %v332, %v536
      %v538 = vpop.f32.mrb[0].mxu0
      %539 = vmatprep.mubr.f32.mxu0 0.0
      %540 = vmatmul.mubr.f32.gmra.mrb[0].mxu0 %v173
      %v541 = vpop.f32.mrb[0].mxu0
      %v542 = vadd.f32 %v337, %v541
      %v543 = vpop.f32.mrb[0].mxu0
      %544 = vmatprep.mubr.f32.mxu0 0.0
      %545 = vmatmul.mubr.f32.gmra.mrb[0].mxu0 %v174
      %v546 = vpop.f32.mrb[0].mxu0
      %v547 = vadd.f32 %v342, %v546
      %v548 = vpop.f32.mrb[0].mxu0
      %549 = vmatprep.mubr.f32.mxu0 0.0
      %550 = vmatmul.mubr.f32.gmra.mrb[0].mxu0 %v175
      %v551 = vpop.f32.mrb[0].mxu0
      %v552 = vadd.f32 %v347, %v551
      %v553 = vpop.f32.mrb[0].mxu0
      %554 = vmatprep.mubr.f32.mxu0 0.0
      %555 = vmatmul.mubr.f32.gmra.mrb[0].mxu0 %v176
      %v556 = vpop.f32.mrb[0].mxu0
      %v557 = vadd.f32 %v352, %v556
      %v558 = vpop.f32.mrb[0].mxu0
      %559 = vmatprep.mubr.f32.mxu0 0.0
      %560 = vmatmul.mubr.f32.gmra.mrb[0].mxu0 %v177
      %v561 = vpop.f32.mrb[0].mxu0
      %v562 = vadd.f32 %v357, %v561
      %v563 = vpop.f32.mrb[0].mxu0
      %564 = vmatprep.mubr.f32.mxu0 0.0
      %565 = vmatmul.mubr.f32.gmra.mrb[0].mxu0 %v178
      %v566 = vpop.f32.mrb[0].mxu0
      %v567 = vadd.f32 %v362, %v566
      %v568 = vpop.f32.mrb[0].mxu0
      %569 = vmatprep.mubr.f32.mxu0 0.0
      %570 = vmatmul.mubr.f32.gmra.mrb[0].mxu0 %v179
      %v571 = vpop.f32.mrb[0].mxu0
      %v572 = vadd.f32 %v367, %v571
      %v573 = vpop.f32.mrb[0].mxu0
      %574 = vmatprep.mubr.f32.mxu0 0.0
      %575 = vmatmul.mubr.f32.gmra.mrb[0].mxu0 %v180
      %v576 = vpop.f32.mrb[0].mxu0
      %v577 = vadd.f32 %v372, %v576
      %v578 = vpop.f32.mrb[0].mxu0
      %579 = vmatprep.mubr.f32.mxu0 0.0
      %580 = vmatmul.mubr.f32.gmra.mrb[0].mxu0 %v181
      %v581 = vpop.f32.mrb[0].mxu0
      %v582 = vadd.f32 %v377, %v581
      %v583 = vpop.f32.mrb[0].mxu0
      %584 = vmatprep.mubr.f32.mxu0 0.0
      %585 = vmatmul.mubr.f32.gmra.mrb[0].mxu0 %v182
      %v586 = vpop.f32.mrb[0].mxu0
      %v587 = vadd.f32 %v382, %v586
      %v588 = vpop.f32.mrb[0].mxu0
      %589 = vmatprep.mubr.f32.mxu0 0.0
      %590 = vmatmul.mubr.f32.gmra.mrb[0].mxu0 %v183
      %v591 = vpop.f32.mrb[0].mxu0
      %v592 = vadd.f32 %v387, %v591
      %v593 = vpop.f32.mrb[0].mxu0
      %594 = vmatprep.mubr.f32.mxu0 0.0
      %595 = vmatmul.mubr.f32.gmra.mrb[0].mxu0 %v184
      %v596 = vpop.f32.mrb[0].mxu0
      %v597 = vadd.f32 %v392, %v596
      %v598 = vpop.f32.mrb[0].mxu0
      %599 = vmatprep.mubr.f32.mxu0 0.0
      %600 = vmatmul.mubr.f32.gmra.mrb[0].mxu0 %v185
      %v601 = vpop.f32.mrb[0].mxu0
      %v602 = vadd.f32 %v397, %v601
      %v603 = vpop.f32.mrb[0].mxu0
      %604 = vmatprep.mubr.f32.mxu0 0.0
      %605 = vmatmul.mubr.f32.gmra.mrb[0].mxu0 %v186
      %v606 = vpop.f32.mrb[0].mxu0
      %v607 = vadd.f32 %v402, %v606
      %v608 = vpop.f32.mrb[0].mxu0
      %609 = vmatprep.mubr.f32.mxu0 0.0
      %610 = vmatmul.mubr.f32.gmra.mrb[0].mxu0 %v187
      %v611 = vpop.f32.mrb[0].mxu0
      %v612 = vadd.f32 %v407, %v611
      %v613 = vpop.f32.mrb[0].mxu0
      %614 = vmatprep.mubr.f32.mxu0 0.0
      %615 = vmatmul.mubr.f32.gmra.mrb[0].mxu0 %v188
      %v616 = vpop.f32.mrb[0].mxu0
      %v617 = vadd.f32 %v412, %v616
      %v618 = vpop.f32.mrb[0].mxu0
      %619 = vmatprep.mubr.f32.mxu0 0.0
      %620 = vmatmul.mubr.f32.gmra.mrb[0].mxu0 %v189
      %v621 = vpop.f32.mrb[0].mxu0
      %v622 = vadd.f32 %v417, %v621
      %v623 = vpop.f32.mrb[0].mxu0
      %624 = vmatprep.mubr.f32.mxu0 0.0
      %625 = vmatmul.mubr.f32.gmra.mrb[0].mxu0 %v190
      %v626 = vpop.f32.mrb[0].mxu0
      %v627 = vadd.f32 %v422, %v626
      %v628 = vpop.f32.mrb[0].mxu0
      %629 = vmatprep.mubr.f32.mxu0 0.0
      %630 = vmatmul.mubr.f32.gmra.mrb[0].mxu0 %v191
      %v631 = vpop.f32.mrb[0].mxu0
      %v632 = vadd.f32 %v427, %v631
      %v633 = vpop.f32.mrb[0].mxu0
      %634 = vmatprep.mubr.f32.mxu0 0.0
      %635 = vmatmul.mubr.f32.gmra.mrb[0].mxu0 %v192
      %v636 = vpop.f32.mrb[0].mxu0
      %v637 = vadd.f32 %v432, %v636
      %v638 = vpop.f32.mrb[0].mxu0
      %639 = vmatprep.mubr.f32.mxu0 0.0
      %640 = vmatmul.mubr.f32.gmra.mrb[0].mxu0 %v193
      %v641 = vpop.f32.mrb[0].mxu0
      %v642 = vadd.f32 %v437, %v641
      %v643 = vpop.f32.mrb[0].mxu0
      %644 = vmatprep.mubr.f32.mxu0 0.0
      %645 = vmatmul.mubr.f32.gmra.mrb[0].mxu0 %v194
      %v646 = vpop.f32.mrb[0].mxu0
      %v647 = vadd.f32 %v442, %v646
      %v648 = vpop.f32.mrb[0].mxu0
      %649 = vmatprep.mubr.f32.mxu0 0.0
      %650 = vmatmul.mubr.f32.gmra.mrb[0].mxu0 %v195
      %v651 = vpop.f32.mrb[0].mxu0
      %v652 = vadd.f32 %v447, %v651
      %v653 = vpop.f32.mrb[0].mxu0
      %654 = vmatprep.mubr.f32.mxu0 0.0
      %655 = vmatmul.mubr.f32.gmra.mrb[0].mxu0 %v196
      %v656 = vpop.f32.mrb[0].mxu0
      %v657 = vadd.f32 %v452, %v656
      %v658 = vpop.f32.mrb[0].mxu0
      %659 = vmatprep.mubr.f32.mxu0 0.0
      %660 = vmatmul.mubr.f32.gmra.mrb[0].mxu0 %v197
      %v661 = vpop.f32.mrb[0].mxu0
      %v662 = vadd.f32 %v457, %v661
      %v663 = vpop.f32.mrb[0].mxu0
      %664 = vmatprep.mubr.f32.mxu0 0.0
      %665 = vmatmul.mubr.f32.gmra.mrb[0].mxu0 %v198
      %v666 = vpop.f32.mrb[0].mxu0
      %v667 = vadd.f32 %v462, %v666
      %v668 = vpop.f32.mrb[0].mxu0
      %669 = vdwg.mxu0
      %v670 = vld [vmem:[%s165 + $0x2] sm:$0xff]
      %v671 = vld [vmem:[%s165 + $0xa] sm:$0xff]
      %v672 = vld [vmem:[%s165 + $0x12] sm:$0xff]
      %v673 = vld [vmem:[%s165 + $0x1a] sm:$0xff]
      %v674 = vld [vmem:[%s165 + $0x22] sm:$0xff]
      %v675 = vld [vmem:[%s165 + $0x2a] sm:$0xff]
      %v676 = vld [vmem:[%s165 + $0x32] sm:$0xff]
      %v677 = vld [vmem:[%s165 + $0x3a] sm:$0xff]
      %v678 = vld [vmem:[%s165 + $0x42] sm:$0xff]
      %v679 = vld [vmem:[%s165 + $0x4a] sm:$0xff]
      %v680 = vld [vmem:[%s165 + $0x52] sm:$0xff]
      %v681 = vld [vmem:[%s165 + $0x5a] sm:$0xff]
      %v682 = vld [vmem:[%s165 + $0x62] sm:$0xff]
      %v683 = vld [vmem:[%s165 + $0x6a] sm:$0xff]
      %v684 = vld [vmem:[%s165 + $0x72] sm:$0xff]
      %v685 = vld [vmem:[%s165 + $0x7a] sm:$0xff]
      %v686 = vld [vmem:[%s165 + $0x82] sm:$0xff]
      %v687 = vld [vmem:[%s165 + $0x8a] sm:$0xff]
      %v688 = vld [vmem:[%s165 + $0x92] sm:$0xff]
      %v689 = vld [vmem:[%s165 + $0x9a] sm:$0xff]
      %v690 = vld [vmem:[%s165 + $0xa2] sm:$0xff]
      %v691 = vld [vmem:[%s165 + $0xaa] sm:$0xff]
      %v692 = vld [vmem:[%s165 + $0xb2] sm:$0xff]
      %v693 = vld [vmem:[%s165 + $0xba] sm:$0xff]
      %v694 = vld [vmem:[%s165 + $0xc2] sm:$0xff]
      %v695 = vld [vmem:[%s165 + $0xca] sm:$0xff]
      %v696 = vld [vmem:[%s165 + $0xd2] sm:$0xff]
      %v697 = vld [vmem:[%s165 + $0xda] sm:$0xff]
      %s698 = scalar_lea.vmem %s1, 256
      %v699 = vld [vmem:[%s698] sm:$0xff]
      %v700 = vld [vmem:[%s698 + $0x8] sm:$0xff]
      %v701 = vld [vmem:[%s698 + $0x10] sm:$0xff]
      %v702 = vld [vmem:[%s698 + $0x18] sm:$0xff]
      %v703 = vld [vmem:[%s698 + $0x20] sm:$0xff]
      %v704 = vld [vmem:[%s698 + $0x28] sm:$0xff]
      %v705 = vld [vmem:[%s698 + $0x30] sm:$0xff]
      %v706 = vld [vmem:[%s698 + $0x38] sm:$0xff]
      %v707 = vld [vmem:[%s698 + $0x40] sm:$0xff]
      %v708 = vld [vmem:[%s698 + $0x48] sm:$0xff]
      %v709 = vld [vmem:[%s698 + $0x50] sm:$0xff]
      %v710 = vld [vmem:[%s698 + $0x58] sm:$0xff]
      %v711 = vld [vmem:[%s698 + $0x60] sm:$0xff]
      %v712 = vld [vmem:[%s698 + $0x68] sm:$0xff]
      %v713 = vld [vmem:[%s698 + $0x70] sm:$0xff]
      %v714 = vld [vmem:[%s698 + $0x78] sm:$0xff]
      %715 = vmatprep.subr.mxu0 0.0
      %716 = vmatpush1.msra.mxu0 %v699
      %717 = vmatprep.subr.mxu0 0.0
      %718 = vmatpush1.msra.mxu0 %v700
      %719 = vmatprep.subr.mxu0 0.0
      %720 = vmatpush1.msra.mxu0 %v701
      %721 = vmatprep.subr.mxu0 0.0
      %722 = vmatpush1.msra.mxu0 %v702
      %723 = vmatprep.subr.mxu0 0.0
      %724 = vmatpush1.msra.mxu0 %v703
      %725 = vmatprep.subr.mxu0 0.0
      %726 = vmatpush1.msra.mxu0 %v704
      %727 = vmatprep.subr.mxu0 0.0
      %728 = vmatpush1.msra.mxu0 %v705
      %729 = vmatprep.subr.mxu0 0.0
      %730 = vmatpush1.msra.mxu0 %v706
      %731 = vmatprep.subr.mxu0 0.0
      %732 = vmatpush1.msra.mxu0 %v707
      %733 = vmatprep.subr.mxu0 0.0
      %734 = vmatpush1.msra.mxu0 %v708
      %735 = vmatprep.subr.mxu0 0.0
      %736 = vmatpush1.msra.mxu0 %v709
      %737 = vmatprep.subr.mxu0 0.0
      %738 = vmatpush1.msra.mxu0 %v710
      %739 = vmatprep.subr.mxu0 0.0
      %740 = vmatpush1.msra.mxu0 %v711
      %741 = vmatprep.subr.mxu0 0.0
      %742 = vmatpush1.msra.mxu0 %v712
      %743 = vmatprep.subr.mxu0 0.0
      %744 = vmatpush1.msra.mxu0 %v713
      %745 = vmatprep.subr.mxu0 0.0
      %746 = vmatpush1.msra.mxu0 %v714
      %747 = vmatprep.subr.mxu0 0.0
      %748 = vmatpush1.msra.mxu0 0.0
      %749 = vmatprep.subr.mxu0 0.0
      %750 = vmatpush1.msra.mxu0 0.0
      %751 = vmatprep.subr.mxu0 0.0
      %752 = vmatpush1.msra.mxu0 0.0
      %753 = vmatprep.subr.mxu0 0.0
      %754 = vmatpush1.msra.mxu0 0.0
      %755 = vmatprep.subr.mxu0 0.0
      %756 = vmatpush1.msra.mxu0 0.0
      %757 = vmatprep.subr.mxu0 0.0
      %758 = vmatpush1.msra.mxu0 0.0
      %759 = vmatprep.subr.mxu0 0.0
      %760 = vmatpush1.msra.mxu0 0.0
      %761 = vmatprep.subr.mxu0 0.0
      %762 = vmatpush1.msra.mxu0 0.0
      %763 = vmatprep.subr.mxu0 0.0
      %764 = vmatpush1.msra.mxu0 0.0
      %765 = vmatprep.subr.mxu0 0.0
      %766 = vmatpush1.msra.mxu0 0.0
      %767 = vmatprep.subr.mxu0 0.0
      %768 = vmatpush1.msra.mxu0 0.0
      %769 = vmatprep.subr.mxu0 0.0
      %770 = vmatpush1.msra.mxu0 0.0
      %771 = vmatprep.subr.mxu0 0.0
      %772 = vmatpush1.msra.mxu0 0.0
      %773 = vmatprep.subr.mxu0 0.0
      %774 = vmatpush1.msra.mxu0 0.0
      %775 = vmatprep.subr.mxu0 0.0
      %776 = vmatpush1.msra.mxu0 0.0
      %777 = vmatprep.subr.mxu0 0.0
      %778 = vmatpush1.msra.mxu0 0.0
      %779 = vmatprep.mubr.f32.mxu0 0.0
      %780 = vmatmul.mubr.f32.gmra.mrb[0].mxu0 %v670
      %v781 = vpop.f32.mrb[0].mxu0
      %v782 = vadd.f32 0.0, %v781
      %v783 = vpop.f32.mrb[0].mxu0
      %784 = vmatprep.mubr.f32.mxu0 0.0
      %785 = vmatmul.mubr.f32.gmra.mrb[0].mxu0 %v671
      %v786 = vpop.f32.mrb[0].mxu0
      %v787 = vadd.f32 0.0, %v786
      %v788 = vpop.f32.mrb[0].mxu0
      %789 = vmatprep.mubr.f32.mxu0 0.0
      %790 = vmatmul.mubr.f32.gmra.mrb[0].mxu0 %v672
      %v791 = vpop.f32.mrb[0].mxu0
      %v792 = vadd.f32 0.0, %v791
      %v793 = vpop.f32.mrb[0].mxu0
      %794 = vmatprep.mubr.f32.mxu0 0.0
      %795 = vmatmul.mubr.f32.gmra.mrb[0].mxu0 %v673
      %v796 = vpop.f32.mrb[0].mxu0
      %v797 = vadd.f32 0.0, %v796
      %v798 = vpop.f32.mrb[0].mxu0
      %799 = vmatprep.mubr.f32.mxu0 0.0
      %800 = vmatmul.mubr.f32.gmra.mrb[0].mxu0 %v674
      %v801 = vpop.f32.mrb[0].mxu0
      %v802 = vadd.f32 0.0, %v801
      %v803 = vpop.f32.mrb[0].mxu0
      %804 = vmatprep.mubr.f32.mxu0 0.0
      %805 = vmatmul.mubr.f32.gmra.mrb[0].mxu0 %v675
      %v806 = vpop.f32.mrb[0].mxu0
      %v807 = vadd.f32 0.0, %v806
      %v808 = vpop.f32.mrb[0].mxu0
      %809 = vmatprep.mubr.f32.mxu0 0.0
      %810 = vmatmul.mubr.f32.gmra.mrb[0].mxu0 %v676
      %v811 = vpop.f32.mrb[0].mxu0
      %v812 = vadd.f32 0.0, %v811
      %v813 = vpop.f32.mrb[0].mxu0
      %814 = vmatprep.mubr.f32.mxu0 0.0
      %815 = vmatmul.mubr.f32.gmra.mrb[0].mxu0 %v677
      %v816 = vpop.f32.mrb[0].mxu0
      %v817 = vadd.f32 0.0, %v816
      %v818 = vpop.f32.mrb[0].mxu0
      %819 = vmatprep.mubr.f32.mxu0 0.0
      %820 = vmatmul.mubr.f32.gmra.mrb[0].mxu0 %v678
      %v821 = vpop.f32.mrb[0].mxu0
      %v822 = vadd.f32 0.0, %v821
      %v823 = vpop.f32.mrb[0].mxu0
      %824 = vmatprep.mubr.f32.mxu0 0.0
      %825 = vmatmul.mubr.f32.gmra.mrb[0].mxu0 %v679
      %v826 = vpop.f32.mrb[0].mxu0
      %v827 = vadd.f32 0.0, %v826
      %v828 = vpop.f32.mrb[0].mxu0
      %829 = vmatprep.mubr.f32.mxu0 0.0
      %830 = vmatmul.mubr.f32.gmra.mrb[0].mxu0 %v680
      %v831 = vpop.f32.mrb[0].mxu0
      %v832 = vadd.f32 0.0, %v831
      %v833 = vpop.f32.mrb[0].mxu0
      %834 = vmatprep.mubr.f32.mxu0 0.0
      %835 = vmatmul.mubr.f32.gmra.mrb[0].mxu0 %v681
      %v836 = vpop.f32.mrb[0].mxu0
      %v837 = vadd.f32 0.0, %v836
      %v838 = vpop.f32.mrb[0].mxu0
      %839 = vmatprep.mubr.f32.mxu0 0.0
      %840 = vmatmul.mubr.f32.gmra.mrb[0].mxu0 %v682
      %v841 = vpop.f32.mrb[0].mxu0
      %v842 = vadd.f32 0.0, %v841
      %v843 = vpop.f32.mrb[0].mxu0
      %844 = vmatprep.mubr.f32.mxu0 0.0
      %845 = vmatmul.mubr.f32.gmra.mrb[0].mxu0 %v683
      %v846 = vpop.f32.mrb[0].mxu0
      %v847 = vadd.f32 0.0, %v846
      %v848 = vpop.f32.mrb[0].mxu0
      %849 = vmatprep.mubr.f32.mxu0 0.0
      %850 = vmatmul.mubr.f32.gmra.mrb[0].mxu0 %v684
      %v851 = vpop.f32.mrb[0].mxu0
      %v852 = vadd.f32 0.0, %v851
      %v853 = vpop.f32.mrb[0].mxu0
      %854 = vmatprep.mubr.f32.mxu0 0.0
      %855 = vmatmul.mubr.f32.gmra.mrb[0].mxu0 %v685
      %v856 = vpop.f32.mrb[0].mxu0
      %v857 = vadd.f32 0.0, %v856
      %v858 = vpop.f32.mrb[0].mxu0
      %859 = vmatprep.mubr.f32.mxu0 0.0
      %860 = vmatmul.mubr.f32.gmra.mrb[0].mxu0 %v686
      %v861 = vpop.f32.mrb[0].mxu0
      %v862 = vadd.f32 0.0, %v861
      %v863 = vpop.f32.mrb[0].mxu0
      %864 = vmatprep.mubr.f32.mxu0 0.0
      %865 = vmatmul.mubr.f32.gmra.mrb[0].mxu0 %v687
      %v866 = vpop.f32.mrb[0].mxu0
      %v867 = vadd.f32 0.0, %v866
      %v868 = vpop.f32.mrb[0].mxu0
      %869 = vmatprep.mubr.f32.mxu0 0.0
      %870 = vmatmul.mubr.f32.gmra.mrb[0].mxu0 %v688
      %v871 = vpop.f32.mrb[0].mxu0
      %v872 = vadd.f32 0.0, %v871
      %v873 = vpop.f32.mrb[0].mxu0
      %874 = vmatprep.mubr.f32.mxu0 0.0
      %875 = vmatmul.mubr.f32.gmra.mrb[0].mxu0 %v689
      %v876 = vpop.f32.mrb[0].mxu0
      %v877 = vadd.f32 0.0, %v876
      %v878 = vpop.f32.mrb[0].mxu0
      %879 = vmatprep.mubr.f32.mxu0 0.0
      %880 = vmatmul.mubr.f32.gmra.mrb[0].mxu0 %v690
      %v881 = vpop.f32.mrb[0].mxu0
      %v882 = vadd.f32 0.0, %v881
      %v883 = vpop.f32.mrb[0].mxu0
      %884 = vmatprep.mubr.f32.mxu0 0.0
      %885 = vmatmul.mubr.f32.gmra.mrb[0].mxu0 %v691
      %v886 = vpop.f32.mrb[0].mxu0
      %v887 = vadd.f32 0.0, %v886
      %v888 = vpop.f32.mrb[0].mxu0
      %889 = vmatprep.mubr.f32.mxu0 0.0
      %890 = vmatmul.mubr.f32.gmra.mrb[0].mxu0 %v692
      %v891 = vpop.f32.mrb[0].mxu0
      %v892 = vadd.f32 0.0, %v891
      %v893 = vpop.f32.mrb[0].mxu0
      %894 = vmatprep.mubr.f32.mxu0 0.0
      %895 = vmatmul.mubr.f32.gmra.mrb[0].mxu0 %v693
      %v896 = vpop.f32.mrb[0].mxu0
      %v897 = vadd.f32 0.0, %v896
      %v898 = vpop.f32.mrb[0].mxu0
      %899 = vmatprep.mubr.f32.mxu0 0.0
      %900 = vmatmul.mubr.f32.gmra.mrb[0].mxu0 %v694
      %v901 = vpop.f32.mrb[0].mxu0
      %v902 = vadd.f32 0.0, %v901
      %v903 = vpop.f32.mrb[0].mxu0
      %904 = vmatprep.mubr.f32.mxu0 0.0
      %905 = vmatmul.mubr.f32.gmra.mrb[0].mxu0 %v695
      %v906 = vpop.f32.mrb[0].mxu0
      %v907 = vadd.f32 0.0, %v906
      %v908 = vpop.f32.mrb[0].mxu0
      %909 = vmatprep.mubr.f32.mxu0 0.0
      %910 = vmatmul.mubr.f32.gmra.mrb[0].mxu0 %v696
      %v911 = vpop.f32.mrb[0].mxu0
      %v912 = vadd.f32 0.0, %v911
      %v913 = vpop.f32.mrb[0].mxu0
      %914 = vmatprep.mubr.f32.mxu0 0.0
      %915 = vmatmul.mubr.f32.gmra.mrb[0].mxu0 %v697
      %v916 = vpop.f32.mrb[0].mxu0
      %v917 = vadd.f32 0.0, %v916
      %v918 = vpop.f32.mrb[0].mxu0
      %919 = vdwg.mxu0
      %v920 = vadd.f32 %v532, %v782
      %v921 = vadd.f32 %v537, %v787
      %v922 = vadd.f32 %v542, %v792
      %v923 = vadd.f32 %v547, %v797
      %v924 = vadd.f32 %v552, %v802
      %v925 = vadd.f32 %v557, %v807
      %v926 = vadd.f32 %v562, %v812
      %v927 = vadd.f32 %v567, %v817
      %v928 = vadd.f32 %v572, %v822
      %v929 = vadd.f32 %v577, %v827
      %v930 = vadd.f32 %v582, %v832
      %v931 = vadd.f32 %v587, %v837
      %v932 = vadd.f32 %v592, %v842
      %v933 = vadd.f32 %v597, %v847
      %v934 = vadd.f32 %v602, %v852
      %v935 = vadd.f32 %v607, %v857
      %v936 = vadd.f32 %v612, %v862
      %v937 = vadd.f32 %v617, %v867
      %v938 = vadd.f32 %v622, %v872
      %v939 = vadd.f32 %v627, %v877
      %v940 = vadd.f32 %v632, %v882
      %v941 = vadd.f32 %v637, %v887
      %v942 = vadd.f32 %v642, %v892
      %v943 = vadd.f32 %v647, %v897
      %v944 = vadd.f32 %v652, %v902
      %v945 = vadd.f32 %v657, %v907
      %v946 = vadd.f32 %v662, %v912
      %v947 = vadd.f32 %v667, %v917
      %v948 = vld [vmem:[%s165 + $0x10] sm:$0xff]
      %v949 = vld [vmem:[%s165 + $0x18] sm:$0xff]
      %v950 = vld [vmem:[%s165 + $0x20] sm:$0xff]
      %v951 = vld [vmem:[%s165 + $0x28] sm:$0xff]
      %v952 = vld [vmem:[%s165 + $0x30] sm:$0xff]
      %v953 = vld [vmem:[%s165 + $0x38] sm:$0xff]
      %v954 = vld [vmem:[%s165 + $0x40] sm:$0xff]
      %v955 = vld [vmem:[%s165 + $0x48] sm:$0xff]
      %v956 = vld [vmem:[%s165 + $0x50] sm:$0xff]
      %v957 = vld [vmem:[%s165 + $0x58] sm:$0xff]
      %v958 = vld [vmem:[%s165 + $0x60] sm:$0xff]
      %v959 = vld [vmem:[%s165 + $0x68] sm:$0xff]
      %v960 = vld [vmem:[%s165 + $0x70] sm:$0xff]
      %v961 = vld [vmem:[%s165 + $0x78] sm:$0xff]
      %v962 = vld [vmem:[%s165 + $0x80] sm:$0xff]
      %v963 = vld [vmem:[%s165 + $0x88] sm:$0xff]
      %v964 = vld [vmem:[%s165 + $0x90] sm:$0xff]
      %v965 = vld [vmem:[%s165 + $0x98] sm:$0xff]
      %v966 = vld [vmem:[%s165 + $0xa0] sm:$0xff]
      %v967 = vld [vmem:[%s165 + $0xa8] sm:$0xff]
      %v968 = vld [vmem:[%s165 + $0xb0] sm:$0xff]
      %v969 = vld [vmem:[%s165 + $0xb8] sm:$0xff]
      %v970 = vld [vmem:[%s165 + $0xc0] sm:$0xff]
      %v971 = vld [vmem:[%s165 + $0xc8] sm:$0xff]
      %v972 = vld [vmem:[%s165 + $0xd0] sm:$0xff]
      %v973 = vld [vmem:[%s165 + $0xd8] sm:$0xff]
      %v974 = vld [vmem:[%s165 + $0xe0] sm:$0xff]
      %v975 = vld [vmem:[%s165 + $0xe8] sm:$0xff]
      %s976 = scalar_lea.vmem %s1, 384
      %v977 = vld [vmem:[%s976] sm:$0xff]
      %v978 = vld [vmem:[%s976 + $0x8] sm:$0xff]
      %v979 = vld [vmem:[%s976 + $0x10] sm:$0xff]
      %v980 = vld [vmem:[%s976 + $0x18] sm:$0xff]
      %v981 = vld [vmem:[%s976 + $0x20] sm:$0xff]
      %v982 = vld [vmem:[%s976 + $0x28] sm:$0xff]
      %v983 = vld [vmem:[%s976 + $0x30] sm:$0xff]
      %v984 = vld [vmem:[%s976 + $0x38] sm:$0xff]
      %v985 = vld [vmem:[%s976 + $0x40] sm:$0xff]
      %v986 = vld [vmem:[%s976 + $0x48] sm:$0xff]
      %v987 = vld [vmem:[%s976 + $0x50] sm:$0xff]
      %v988 = vld [vmem:[%s976 + $0x58] sm:$0xff]
      %v989 = vld [vmem:[%s976 + $0x60] sm:$0xff]
      %v990 = vld [vmem:[%s976 + $0x68] sm:$0xff]
      %v991 = vld [vmem:[%s976 + $0x70] sm:$0xff]
      %v992 = vld [vmem:[%s976 + $0x78] sm:$0xff]
      %993 = vmatprep.subr.mxu0 0.0
      %994 = vmatpush1.msra.mxu0 %v977
      %995 = vmatprep.subr.mxu0 0.0
      %996 = vmatpush1.msra.mxu0 %v978
      %997 = vmatprep.subr.mxu0 0.0
      %998 = vmatpush1.msra.mxu0 %v979
      %999 = vmatprep.subr.mxu0 0.0
      %1000 = vmatpush1.msra.mxu0 %v980
      %1001 = vmatprep.subr.mxu0 0.0
      %1002 = vmatpush1.msra.mxu0 %v981
      %1003 = vmatprep.subr.mxu0 0.0
      %1004 = vmatpush1.msra.mxu0 %v982
      %1005 = vmatprep.subr.mxu0 0.0
      %1006 = vmatpush1.msra.mxu0 %v983
      %1007 = vmatprep.subr.mxu0 0.0
      %1008 = vmatpush1.msra.mxu0 %v984
      %1009 = vmatprep.subr.mxu0 0.0
      %1010 = vmatpush1.msra.mxu0 %v985
      %1011 = vmatprep.subr.mxu0 0.0
      %1012 = vmatpush1.msra.mxu0 %v986
      %1013 = vmatprep.subr.mxu0 0.0
      %1014 = vmatpush1.msra.mxu0 %v987
      %1015 = vmatprep.subr.mxu0 0.0
      %1016 = vmatpush1.msra.mxu0 %v988
      %1017 = vmatprep.subr.mxu0 0.0
      %1018 = vmatpush1.msra.mxu0 %v989
      %1019 = vmatprep.subr.mxu0 0.0
      %1020 = vmatpush1.msra.mxu0 %v990
      %1021 = vmatprep.subr.mxu0 0.0
      %1022 = vmatpush1.msra.mxu0 %v991
      %1023 = vmatprep.subr.mxu0 0.0
      %1024 = vmatpush1.msra.mxu0 %v992
      %1025 = vmatprep.subr.mxu0 0.0
      %1026 = vmatpush1.msra.mxu0 0.0
      %1027 = vmatprep.subr.mxu0 0.0
      %1028 = vmatpush1.msra.mxu0 0.0
      %1029 = vmatprep.subr.mxu0 0.0
      %1030 = vmatpush1.msra.mxu0 0.0
      %1031 = vmatprep.subr.mxu0 0.0
      %1032 = vmatpush1.msra.mxu0 0.0
      %1033 = vmatprep.subr.mxu0 0.0
      %1034 = vmatpush1.msra.mxu0 0.0
      %1035 = vmatprep.subr.mxu0 0.0
      %1036 = vmatpush1.msra.mxu0 0.0
      %1037 = vmatprep.subr.mxu0 0.0
      %1038 = vmatpush1.msra.mxu0 0.0
      %1039 = vmatprep.subr.mxu0 0.0
      %1040 = vmatpush1.msra.mxu0 0.0
      %1041 = vmatprep.subr.mxu0 0.0
      %1042 = vmatpush1.msra.mxu0 0.0
      %1043 = vmatprep.subr.mxu0 0.0
      %1044 = vmatpush1.msra.mxu0 0.0
      %1045 = vmatprep.subr.mxu0 0.0
      %1046 = vmatpush1.msra.mxu0 0.0
      %1047 = vmatprep.subr.mxu0 0.0
      %1048 = vmatpush1.msra.mxu0 0.0
      %1049 = vmatprep.subr.mxu0 0.0
      %1050 = vmatpush1.msra.mxu0 0.0
      %1051 = vmatprep.subr.mxu0 0.0
      %1052 = vmatpush1.msra.mxu0 0.0
      %1053 = vmatprep.subr.mxu0 0.0
      %1054 = vmatpush1.msra.mxu0 0.0
      %1055 = vmatprep.subr.mxu0 0.0
      %1056 = vmatpush1.msra.mxu0 0.0
      %1057 = vmatprep.mubr.f32.mxu0 0.0
      %1058 = vmatmul.mubr.f32.gmra.mrb[0].mxu0 %v948
      %v1059 = vpop.f32.mrb[0].mxu0
      %v1060 = vadd.f32 0.0, %v1059
      %v1061 = vpop.f32.mrb[0].mxu0
      %1062 = vmatprep.mubr.f32.mxu0 0.0
      %1063 = vmatmul.mubr.f32.gmra.mrb[0].mxu0 %v949
      %v1064 = vpop.f32.mrb[0].mxu0
      %v1065 = vadd.f32 0.0, %v1064
      %v1066 = vpop.f32.mrb[0].mxu0
      %1067 = vmatprep.mubr.f32.mxu0 0.0
      %1068 = vmatmul.mubr.f32.gmra.mrb[0].mxu0 %v950
      %v1069 = vpop.f32.mrb[0].mxu0
      %v1070 = vadd.f32 0.0, %v1069
      %v1071 = vpop.f32.mrb[0].mxu0
      %1072 = vmatprep.mubr.f32.mxu0 0.0
      %1073 = vmatmul.mubr.f32.gmra.mrb[0].mxu0 %v951
      %v1074 = vpop.f32.mrb[0].mxu0
      %v1075 = vadd.f32 0.0, %v1074
      %v1076 = vpop.f32.mrb[0].mxu0
      %1077 = vmatprep.mubr.f32.mxu0 0.0
      %1078 = vmatmul.mubr.f32.gmra.mrb[0].mxu0 %v952
      %v1079 = vpop.f32.mrb[0].mxu0
      %v1080 = vadd.f32 0.0, %v1079
      %v1081 = vpop.f32.mrb[0].mxu0
      %1082 = vmatprep.mubr.f32.mxu0 0.0
      %1083 = vmatmul.mubr.f32.gmra.mrb[0].mxu0 %v953
      %v1084 = vpop.f32.mrb[0].mxu0
      %v1085 = vadd.f32 0.0, %v1084
      %v1086 = vpop.f32.mrb[0].mxu0
      %1087 = vmatprep.mubr.f32.mxu0 0.0
      %1088 = vmatmul.mubr.f32.gmra.mrb[0].mxu0 %v954
      %v1089 = vpop.f32.mrb[0].mxu0
      %v1090 = vadd.f32 0.0, %v1089
      %v1091 = vpop.f32.mrb[0].mxu0
      %1092 = vmatprep.mubr.f32.mxu0 0.0
      %1093 = vmatmul.mubr.f32.gmra.mrb[0].mxu0 %v955
      %v1094 = vpop.f32.mrb[0].mxu0
      %v1095 = vadd.f32 0.0, %v1094
      %v1096 = vpop.f32.mrb[0].mxu0
      %1097 = vmatprep.mubr.f32.mxu0 0.0
      %1098 = vmatmul.mubr.f32.gmra.mrb[0].mxu0 %v956
      %v1099 = vpop.f32.mrb[0].mxu0
      %v1100 = vadd.f32 0.0, %v1099
      %v1101 = vpop.f32.mrb[0].mxu0
      %1102 = vmatprep.mubr.f32.mxu0 0.0
      %1103 = vmatmul.mubr.f32.gmra.mrb[0].mxu0 %v957
      %v1104 = vpop.f32.mrb[0].mxu0
      %v1105 = vadd.f32 0.0, %v1104
      %v1106 = vpop.f32.mrb[0].mxu0
      %1107 = vmatprep.mubr.f32.mxu0 0.0
      %1108 = vmatmul.mubr.f32.gmra.mrb[0].mxu0 %v958
      %v1109 = vpop.f32.mrb[0].mxu0
      %v1110 = vadd.f32 0.0, %v1109
      %v1111 = vpop.f32.mrb[0].mxu0
      %1112 = vmatprep.mubr.f32.mxu0 0.0
      %1113 = vmatmul.mubr.f32.gmra.mrb[0].mxu0 %v959
      %v1114 = vpop.f32.mrb[0].mxu0
      %v1115 = vadd.f32 0.0, %v1114
      %v1116 = vpop.f32.mrb[0].mxu0
      %1117 = vmatprep.mubr.f32.mxu0 0.0
      %1118 = vmatmul.mubr.f32.gmra.mrb[0].mxu0 %v960
      %v1119 = vpop.f32.mrb[0].mxu0
      %v1120 = vadd.f32 0.0, %v1119
      %v1121 = vpop.f32.mrb[0].mxu0
      %1122 = vmatprep.mubr.f32.mxu0 0.0
      %1123 = vmatmul.mubr.f32.gmra.mrb[0].mxu0 %v961
      %v1124 = vpop.f32.mrb[0].mxu0
      %v1125 = vadd.f32 0.0, %v1124
      %v1126 = vpop.f32.mrb[0].mxu0
      %1127 = vmatprep.mubr.f32.mxu0 0.0
      %1128 = vmatmul.mubr.f32.gmra.mrb[0].mxu0 %v962
      %v1129 = vpop.f32.mrb[0].mxu0
      %v1130 = vadd.f32 0.0, %v1129
      %v1131 = vpop.f32.mrb[0].mxu0
      %1132 = vmatprep.mubr.f32.mxu0 0.0
      %1133 = vmatmul.mubr.f32.gmra.mrb[0].mxu0 %v963
      %v1134 = vpop.f32.mrb[0].mxu0
      %v1135 = vadd.f32 0.0, %v1134
      %v1136 = vpop.f32.mrb[0].mxu0
      %1137 = vmatprep.mubr.f32.mxu0 0.0
      %1138 = vmatmul.mubr.f32.gmra.mrb[0].mxu0 %v964
      %v1139 = vpop.f32.mrb[0].mxu0
      %v1140 = vadd.f32 0.0, %v1139
      %v1141 = vpop.f32.mrb[0].mxu0
      %1142 = vmatprep.mubr.f32.mxu0 0.0
      %1143 = vmatmul.mubr.f32.gmra.mrb[0].mxu0 %v965
      %v1144 = vpop.f32.mrb[0].mxu0
      %v1145 = vadd.f32 0.0, %v1144
      %v1146 = vpop.f32.mrb[0].mxu0
      %1147 = vmatprep.mubr.f32.mxu0 0.0
      %1148 = vmatmul.mubr.f32.gmra.mrb[0].mxu0 %v966
      %v1149 = vpop.f32.mrb[0].mxu0
      %v1150 = vadd.f32 0.0, %v1149
      %v1151 = vpop.f32.mrb[0].mxu0
      %1152 = vmatprep.mubr.f32.mxu0 0.0
      %1153 = vmatmul.mubr.f32.gmra.mrb[0].mxu0 %v967
      %v1154 = vpop.f32.mrb[0].mxu0
      %v1155 = vadd.f32 0.0, %v1154
      %v1156 = vpop.f32.mrb[0].mxu0
      %1157 = vmatprep.mubr.f32.mxu0 0.0
      %1158 = vmatmul.mubr.f32.gmra.mrb[0].mxu0 %v968
      %v1159 = vpop.f32.mrb[0].mxu0
      %v1160 = vadd.f32 0.0, %v1159
      %v1161 = vpop.f32.mrb[0].mxu0
      %1162 = vmatprep.mubr.f32.mxu0 0.0
      %1163 = vmatmul.mubr.f32.gmra.mrb[0].mxu0 %v969
      %v1164 = vpop.f32.mrb[0].mxu0
      %v1165 = vadd.f32 0.0, %v1164
      %v1166 = vpop.f32.mrb[0].mxu0
      %1167 = vmatprep.mubr.f32.mxu0 0.0
      %1168 = vmatmul.mubr.f32.gmra.mrb[0].mxu0 %v970
      %v1169 = vpop.f32.mrb[0].mxu0
      %v1170 = vadd.f32 0.0, %v1169
      %v1171 = vpop.f32.mrb[0].mxu0
      %1172 = vmatprep.mubr.f32.mxu0 0.0
      %1173 = vmatmul.mubr.f32.gmra.mrb[0].mxu0 %v971
      %v1174 = vpop.f32.mrb[0].mxu0
      %v1175 = vadd.f32 0.0, %v1174
      %v1176 = vpop.f32.mrb[0].mxu0
      %1177 = vmatprep.mubr.f32.mxu0 0.0
      %1178 = vmatmul.mubr.f32.gmra.mrb[0].mxu0 %v972
      %v1179 = vpop.f32.mrb[0].mxu0
      %v1180 = vadd.f32 0.0, %v1179
      %v1181 = vpop.f32.mrb[0].mxu0
      %1182 = vmatprep.mubr.f32.mxu0 0.0
      %1183 = vmatmul.mubr.f32.gmra.mrb[0].mxu0 %v973
      %v1184 = vpop.f32.mrb[0].mxu0
      %v1185 = vadd.f32 0.0, %v1184
      %v1186 = vpop.f32.mrb[0].mxu0
      %1187 = vmatprep.mubr.f32.mxu0 0.0
      %1188 = vmatmul.mubr.f32.gmra.mrb[0].mxu0 %v974
      %v1189 = vpop.f32.mrb[0].mxu0
      %v1190 = vadd.f32 0.0, %v1189
      %v1191 = vpop.f32.mrb[0].mxu0
      %1192 = vmatprep.mubr.f32.mxu0 0.0
      %1193 = vmatmul.mubr.f32.gmra.mrb[0].mxu0 %v975
      %v1194 = vpop.f32.mrb[0].mxu0
      %v1195 = vadd.f32 0.0, %v1194
      %v1196 = vpop.f32.mrb[0].mxu0
      %1197 = vdwg.mxu0
      %v1198 = vadd.f32 %v920, %v1060
      %v1199 = vadd.f32 %v921, %v1065
      %v1200 = vadd.f32 %v922, %v1070
      %v1201 = vadd.f32 %v923, %v1075
      %v1202 = vadd.f32 %v924, %v1080
      %v1203 = vadd.f32 %v925, %v1085
      %v1204 = vadd.f32 %v926, %v1090
      %v1205 = vadd.f32 %v927, %v1095
      %v1206 = vadd.f32 %v928, %v1100
      %v1207 = vadd.f32 %v929, %v1105
      %v1208 = vadd.f32 %v930, %v1110
      %v1209 = vadd.f32 %v931, %v1115
      %v1210 = vadd.f32 %v932, %v1120
      %v1211 = vadd.f32 %v933, %v1125
      %v1212 = vadd.f32 %v934, %v1130
      %v1213 = vadd.f32 %v935, %v1135
      %v1214 = vadd.f32 %v936, %v1140
      %v1215 = vadd.f32 %v937, %v1145
      %v1216 = vadd.f32 %v938, %v1150
      %v1217 = vadd.f32 %v939, %v1155
      %v1218 = vadd.f32 %v940, %v1160
      %v1219 = vadd.f32 %v941, %v1165
      %v1220 = vadd.f32 %v942, %v1170
      %v1221 = vadd.f32 %v943, %v1175
      %v1222 = vadd.f32 %v944, %v1180
      %v1223 = vadd.f32 %v945, %v1185
      %v1224 = vadd.f32 %v946, %v1190
      %v1225 = vadd.f32 %v947, %v1195
      %v1226 = vld [vmem:[%s165 + $0x11] sm:$0xff]
      %v1227 = vld [vmem:[%s165 + $0x19] sm:$0xff]
      %v1228 = vld [vmem:[%s165 + $0x21] sm:$0xff]
      %v1229 = vld [vmem:[%s165 + $0x29] sm:$0xff]
      %v1230 = vld [vmem:[%s165 + $0x31] sm:$0xff]
      %v1231 = vld [vmem:[%s165 + $0x39] sm:$0xff]
      %v1232 = vld [vmem:[%s165 + $0x41] sm:$0xff]
      %v1233 = vld [vmem:[%s165 + $0x49] sm:$0xff]
      %v1234 = vld [vmem:[%s165 + $0x51] sm:$0xff]
      %v1235 = vld [vmem:[%s165 + $0x59] sm:$0xff]
      %v1236 = vld [vmem:[%s165 + $0x61] sm:$0xff]
      %v1237 = vld [vmem:[%s165 + $0x69] sm:$0xff]
      %v1238 = vld [vmem:[%s165 + $0x71] sm:$0xff]
      %v1239 = vld [vmem:[%s165 + $0x79] sm:$0xff]
      %v1240 = vld [vmem:[%s165 + $0x81] sm:$0xff]
      %v1241 = vld [vmem:[%s165 + $0x89] sm:$0xff]
      %v1242 = vld [vmem:[%s165 + $0x91] sm:$0xff]
      %v1243 = vld [vmem:[%s165 + $0x99] sm:$0xff]
      %v1244 = vld [vmem:[%s165 + $0xa1] sm:$0xff]
      %v1245 = vld [vmem:[%s165 + $0xa9] sm:$0xff]
      %v1246 = vld [vmem:[%s165 + $0xb1] sm:$0xff]
      %v1247 = vld [vmem:[%s165 + $0xb9] sm:$0xff]
      %v1248 = vld [vmem:[%s165 + $0xc1] sm:$0xff]
      %v1249 = vld [vmem:[%s165 + $0xc9] sm:$0xff]
      %v1250 = vld [vmem:[%s165 + $0xd1] sm:$0xff]
      %v1251 = vld [vmem:[%s165 + $0xd9] sm:$0xff]
      %v1252 = vld [vmem:[%s165 + $0xe1] sm:$0xff]
      %v1253 = vld [vmem:[%s165 + $0xe9] sm:$0xff]
      %s1254 = scalar_lea.vmem %s1, 512
      %v1255 = vld [vmem:[%s1254] sm:$0xff]
      %v1256 = vld [vmem:[%s1254 + $0x8] sm:$0xff]
      %v1257 = vld [vmem:[%s1254 + $0x10] sm:$0xff]
      %v1258 = vld [vmem:[%s1254 + $0x18] sm:$0xff]
      %v1259 = vld [vmem:[%s1254 + $0x20] sm:$0xff]
      %v1260 = vld [vmem:[%s1254 + $0x28] sm:$0xff]
      %v1261 = vld [vmem:[%s1254 + $0x30] sm:$0xff]
      %v1262 = vld [vmem:[%s1254 + $0x38] sm:$0xff]
      %v1263 = vld [vmem:[%s1254 + $0x40] sm:$0xff]
      %v1264 = vld [vmem:[%s1254 + $0x48] sm:$0xff]
      %v1265 = vld [vmem:[%s1254 + $0x50] sm:$0xff]
      %v1266 = vld [vmem:[%s1254 + $0x58] sm:$0xff]
      %v1267 = vld [vmem:[%s1254 + $0x60] sm:$0xff]
      %v1268 = vld [vmem:[%s1254 + $0x68] sm:$0xff]
      %v1269 = vld [vmem:[%s1254 + $0x70] sm:$0xff]
      %v1270 = vld [vmem:[%s1254 + $0x78] sm:$0xff]
      %1271 = vmatprep.subr.mxu0 0.0
      %1272 = vmatpush1.msra.mxu0 %v1255
      %1273 = vmatprep.subr.mxu0 0.0
      %1274 = vmatpush1.msra.mxu0 %v1256
      %1275 = vmatprep.subr.mxu0 0.0
      %1276 = vmatpush1.msra.mxu0 %v1257
      %1277 = vmatprep.subr.mxu0 0.0
      %1278 = vmatpush1.msra.mxu0 %v1258
      %1279 = vmatprep.subr.mxu0 0.0
      %1280 = vmatpush1.msra.mxu0 %v1259
      %1281 = vmatprep.subr.mxu0 0.0
      %1282 = vmatpush1.msra.mxu0 %v1260
      %1283 = vmatprep.subr.mxu0 0.0
      %1284 = vmatpush1.msra.mxu0 %v1261
      %1285 = vmatprep.subr.mxu0 0.0
      %1286 = vmatpush1.msra.mxu0 %v1262
      %1287 = vmatprep.subr.mxu0 0.0
      %1288 = vmatpush1.msra.mxu0 %v1263
      %1289 = vmatprep.subr.mxu0 0.0
      %1290 = vmatpush1.msra.mxu0 %v1264
      %1291 = vmatprep.subr.mxu0 0.0
      %1292 = vmatpush1.msra.mxu0 %v1265
      %1293 = vmatprep.subr.mxu0 0.0
      %1294 = vmatpush1.msra.mxu0 %v1266
      %1295 = vmatprep.subr.mxu0 0.0
      %1296 = vmatpush1.msra.mxu0 %v1267
      %1297 = vmatprep.subr.mxu0 0.0
      %1298 = vmatpush1.msra.mxu0 %v1268
      %1299 = vmatprep.subr.mxu0 0.0
      %1300 = vmatpush1.msra.mxu0 %v1269
      %1301 = vmatprep.subr.mxu0 0.0
      %1302 = vmatpush1.msra.mxu0 %v1270
      %1303 = vmatprep.subr.mxu0 0.0
      %1304 = vmatpush1.msra.mxu0 0.0
      %1305 = vmatprep.subr.mxu0 0.0
      %1306 = vmatpush1.msra.mxu0 0.0
      %1307 = vmatprep.subr.mxu0 0.0
      %1308 = vmatpush1.msra.mxu0 0.0
      %1309 = vmatprep.subr.mxu0 0.0
      %1310 = vmatpush1.msra.mxu0 0.0
      %1311 = vmatprep.subr.mxu0 0.0
      %1312 = vmatpush1.msra.mxu0 0.0
      %1313 = vmatprep.subr.mxu0 0.0
      %1314 = vmatpush1.msra.mxu0 0.0
      %1315 = vmatprep.subr.mxu0 0.0
      %1316 = vmatpush1.msra.mxu0 0.0
      %1317 = vmatprep.subr.mxu0 0.0
      %1318 = vmatpush1.msra.mxu0 0.0
      %1319 = vmatprep.subr.mxu0 0.0
      %1320 = vmatpush1.msra.mxu0 0.0
      %1321 = vmatprep.subr.mxu0 0.0
      %1322 = vmatpush1.msra.mxu0 0.0
      %1323 = vmatprep.subr.mxu0 0.0
      %1324 = vmatpush1.msra.mxu0 0.0
      %1325 = vmatprep.subr.mxu0 0.0
      %1326 = vmatpush1.msra.mxu0 0.0
      %1327 = vmatprep.subr.mxu0 0.0
      %1328 = vmatpush1.msra.mxu0 0.0
      %1329 = vmatprep.subr.mxu0 0.0
      %1330 = vmatpush1.msra.mxu0 0.0
      %1331 = vmatprep.subr.mxu0 0.0
      %1332 = vmatpush1.msra.mxu0 0.0
      %1333 = vmatprep.subr.mxu0 0.0
      %1334 = vmatpush1.msra.mxu0 0.0
      %1335 = vmatprep.mubr.f32.mxu0 0.0
      %1336 = vmatmul.mubr.f32.gmra.mrb[0].mxu0 %v1226
      %v1337 = vpop.f32.mrb[0].mxu0
      %v1338 = vadd.f32 0.0, %v1337
      %v1339 = vpop.f32.mrb[0].mxu0
      %1340 = vmatprep.mubr.f32.mxu0 0.0
      %1341 = vmatmul.mubr.f32.gmra.mrb[0].mxu0 %v1227
      %v1342 = vpop.f32.mrb[0].mxu0
      %v1343 = vadd.f32 0.0, %v1342
      %v1344 = vpop.f32.mrb[0].mxu0
      %1345 = vmatprep.mubr.f32.mxu0 0.0
      %1346 = vmatmul.mubr.f32.gmra.mrb[0].mxu0 %v1228
      %v1347 = vpop.f32.mrb[0].mxu0
      %v1348 = vadd.f32 0.0, %v1347
      %v1349 = vpop.f32.mrb[0].mxu0
      %1350 = vmatprep.mubr.f32.mxu0 0.0
      %1351 = vmatmul.mubr.f32.gmra.mrb[0].mxu0 %v1229
      %v1352 = vpop.f32.mrb[0].mxu0
      %v1353 = vadd.f32 0.0, %v1352
      %v1354 = vpop.f32.mrb[0].mxu0
      %1355 = vmatprep.mubr.f32.mxu0 0.0
      %1356 = vmatmul.mubr.f32.gmra.mrb[0].mxu0 %v1230
      %v1357 = vpop.f32.mrb[0].mxu0
      %v1358 = vadd.f32 0.0, %v1357
      %v1359 = vpop.f32.mrb[0].mxu0
      %1360 = vmatprep.mubr.f32.mxu0 0.0
      %1361 = vmatmul.mubr.f32.gmra.mrb[0].mxu0 %v1231
      %v1362 = vpop.f32.mrb[0].mxu0
      %v1363 = vadd.f32 0.0, %v1362
      %v1364 = vpop.f32.mrb[0].mxu0
      %1365 = vmatprep.mubr.f32.mxu0 0.0
      %1366 = vmatmul.mubr.f32.gmra.mrb[0].mxu0 %v1232
      %v1367 = vpop.f32.mrb[0].mxu0
      %v1368 = vadd.f32 0.0, %v1367
      %v1369 = vpop.f32.mrb[0].mxu0
      %1370 = vmatprep.mubr.f32.mxu0 0.0
      %1371 = vmatmul.mubr.f32.gmra.mrb[0].mxu0 %v1233
      %v1372 = vpop.f32.mrb[0].mxu0
      %v1373 = vadd.f32 0.0, %v1372
      %v1374 = vpop.f32.mrb[0].mxu0
      %1375 = vmatprep.mubr.f32.mxu0 0.0
      %1376 = vmatmul.mubr.f32.gmra.mrb[0].mxu0 %v1234
      %v1377 = vpop.f32.mrb[0].mxu0
      %v1378 = vadd.f32 0.0, %v1377
      %v1379 = vpop.f32.mrb[0].mxu0
      %1380 = vmatprep.mubr.f32.mxu0 0.0
      %1381 = vmatmul.mubr.f32.gmra.mrb[0].mxu0 %v1235
      %v1382 = vpop.f32.mrb[0].mxu0
      %v1383 = vadd.f32 0.0, %v1382
      %v1384 = vpop.f32.mrb[0].mxu0
      %1385 = vmatprep.mubr.f32.mxu0 0.0
      %1386 = vmatmul.mubr.f32.gmra.mrb[0].mxu0 %v1236
      %v1387 = vpop.f32.mrb[0].mxu0
      %v1388 = vadd.f32 0.0, %v1387
      %v1389 = vpop.f32.mrb[0].mxu0
      %1390 = vmatprep.mubr.f32.mxu0 0.0
      %1391 = vmatmul.mubr.f32.gmra.mrb[0].mxu0 %v1237
      %v1392 = vpop.f32.mrb[0].mxu0
      %v1393 = vadd.f32 0.0, %v1392
      %v1394 = vpop.f32.mrb[0].mxu0
      %1395 = vmatprep.mubr.f32.mxu0 0.0
      %1396 = vmatmul.mubr.f32.gmra.mrb[0].mxu0 %v1238
      %v1397 = vpop.f32.mrb[0].mxu0
      %v1398 = vadd.f32 0.0, %v1397
      %v1399 = vpop.f32.mrb[0].mxu0
      %1400 = vmatprep.mubr.f32.mxu0 0.0
      %1401 = vmatmul.mubr.f32.gmra.mrb[0].mxu0 %v1239
      %v1402 = vpop.f32.mrb[0].mxu0
      %v1403 = vadd.f32 0.0, %v1402
      %v1404 = vpop.f32.mrb[0].mxu0
      %1405 = vmatprep.mubr.f32.mxu0 0.0
      %1406 = vmatmul.mubr.f32.gmra.mrb[0].mxu0 %v1240
      %v1407 = vpop.f32.mrb[0].mxu0
      %v1408 = vadd.f32 0.0, %v1407
      %v1409 = vpop.f32.mrb[0].mxu0
      %1410 = vmatprep.mubr.f32.mxu0 0.0
      %1411 = vmatmul.mubr.f32.gmra.mrb[0].mxu0 %v1241
      %v1412 = vpop.f32.mrb[0].mxu0
      %v1413 = vadd.f32 0.0, %v1412
      %v1414 = vpop.f32.mrb[0].mxu0
      %1415 = vmatprep.mubr.f32.mxu0 0.0
      %1416 = vmatmul.mubr.f32.gmra.mrb[0].mxu0 %v1242
      %v1417 = vpop.f32.mrb[0].mxu0
      %v1418 = vadd.f32 0.0, %v1417
      %v1419 = vpop.f32.mrb[0].mxu0
      %1420 = vmatprep.mubr.f32.mxu0 0.0
      %1421 = vmatmul.mubr.f32.gmra.mrb[0].mxu0 %v1243
      %v1422 = vpop.f32.mrb[0].mxu0
      %v1423 = vadd.f32 0.0, %v1422
      %v1424 = vpop.f32.mrb[0].mxu0
      %1425 = vmatprep.mubr.f32.mxu0 0.0
      %1426 = vmatmul.mubr.f32.gmra.mrb[0].mxu0 %v1244
      %v1427 = vpop.f32.mrb[0].mxu0
      %v1428 = vadd.f32 0.0, %v1427
      %v1429 = vpop.f32.mrb[0].mxu0
      %1430 = vmatprep.mubr.f32.mxu0 0.0
      %1431 = vmatmul.mubr.f32.gmra.mrb[0].mxu0 %v1245
      %v1432 = vpop.f32.mrb[0].mxu0
      %v1433 = vadd.f32 0.0, %v1432
      %v1434 = vpop.f32.mrb[0].mxu0
      %1435 = vmatprep.mubr.f32.mxu0 0.0
      %1436 = vmatmul.mubr.f32.gmra.mrb[0].mxu0 %v1246
      %v1437 = vpop.f32.mrb[0].mxu0
      %v1438 = vadd.f32 0.0, %v1437
      %v1439 = vpop.f32.mrb[0].mxu0
      %1440 = vmatprep.mubr.f32.mxu0 0.0
      %1441 = vmatmul.mubr.f32.gmra.mrb[0].mxu0 %v1247
      %v1442 = vpop.f32.mrb[0].mxu0
      %v1443 = vadd.f32 0.0, %v1442
      %v1444 = vpop.f32.mrb[0].mxu0
      %1445 = vmatprep.mubr.f32.mxu0 0.0
      %1446 = vmatmul.mubr.f32.gmra.mrb[0].mxu0 %v1248
      %v1447 = vpop.f32.mrb[0].mxu0
      %v1448 = vadd.f32 0.0, %v1447
      %v1449 = vpop.f32.mrb[0].mxu0
      %1450 = vmatprep.mubr.f32.mxu0 0.0
      %1451 = vmatmul.mubr.f32.gmra.mrb[0].mxu0 %v1249
      %v1452 = vpop.f32.mrb[0].mxu0
      %v1453 = vadd.f32 0.0, %v1452
      %v1454 = vpop.f32.mrb[0].mxu0
      %1455 = vmatprep.mubr.f32.mxu0 0.0
      %1456 = vmatmul.mubr.f32.gmra.mrb[0].mxu0 %v1250
      %v1457 = vpop.f32.mrb[0].mxu0
      %v1458 = vadd.f32 0.0, %v1457
      %v1459 = vpop.f32.mrb[0].mxu0
      %1460 = vmatprep.mubr.f32.mxu0 0.0
      %1461 = vmatmul.mubr.f32.gmra.mrb[0].mxu0 %v1251
      %v1462 = vpop.f32.mrb[0].mxu0
      %v1463 = vadd.f32 0.0, %v1462
      %v1464 = vpop.f32.mrb[0].mxu0
      %1465 = vmatprep.mubr.f32.mxu0 0.0
      %1466 = vmatmul.mubr.f32.gmra.mrb[0].mxu0 %v1252
      %v1467 = vpop.f32.mrb[0].mxu0
      %v1468 = vadd.f32 0.0, %v1467
      %v1469 = vpop.f32.mrb[0].mxu0
      %1470 = vmatprep.mubr.f32.mxu0 0.0
      %1471 = vmatmul.mubr.f32.gmra.mrb[0].mxu0 %v1253
      %v1472 = vpop.f32.mrb[0].mxu0
      %v1473 = vadd.f32 0.0, %v1472
      %v1474 = vpop.f32.mrb[0].mxu0
      %1475 = vdwg.mxu0
      %v1476 = vadd.f32 %v1198, %v1338
      %v1477 = vadd.f32 %v1199, %v1343
      %v1478 = vadd.f32 %v1200, %v1348
      %v1479 = vadd.f32 %v1201, %v1353
      %v1480 = vadd.f32 %v1202, %v1358
      %v1481 = vadd.f32 %v1203, %v1363
      %v1482 = vadd.f32 %v1204, %v1368
      %v1483 = vadd.f32 %v1205, %v1373
      %v1484 = vadd.f32 %v1206, %v1378
      %v1485 = vadd.f32 %v1207, %v1383
      %v1486 = vadd.f32 %v1208, %v1388
      %v1487 = vadd.f32 %v1209, %v1393
      %v1488 = vadd.f32 %v1210, %v1398
      %v1489 = vadd.f32 %v1211, %v1403
      %v1490 = vadd.f32 %v1212, %v1408
      %v1491 = vadd.f32 %v1213, %v1413
      %v1492 = vadd.f32 %v1214, %v1418
      %v1493 = vadd.f32 %v1215, %v1423
      %v1494 = vadd.f32 %v1216, %v1428
      %v1495 = vadd.f32 %v1217, %v1433
      %v1496 = vadd.f32 %v1218, %v1438
      %v1497 = vadd.f32 %v1219, %v1443
      %v1498 = vadd.f32 %v1220, %v1448
      %v1499 = vadd.f32 %v1221, %v1453
      %v1500 = vadd.f32 %v1222, %v1458
      %v1501 = vadd.f32 %v1223, %v1463
      %v1502 = vadd.f32 %v1224, %v1468
      %v1503 = vadd.f32 %v1225, %v1473
      %v1504 = vld [vmem:[%s165 + $0x12] sm:$0xff]
      %v1505 = vld [vmem:[%s165 + $0x1a] sm:$0xff]
      %v1506 = vld [vmem:[%s165 + $0x22] sm:$0xff]
      %v1507 = vld [vmem:[%s165 + $0x2a] sm:$0xff]
      %v1508 = vld [vmem:[%s165 + $0x32] sm:$0xff]
      %v1509 = vld [vmem:[%s165 + $0x3a] sm:$0xff]
      %v1510 = vld [vmem:[%s165 + $0x42] sm:$0xff]
      %v1511 = vld [vmem:[%s165 + $0x4a] sm:$0xff]
      %v1512 = vld [vmem:[%s165 + $0x52] sm:$0xff]
      %v1513 = vld [vmem:[%s165 + $0x5a] sm:$0xff]
      %v1514 = vld [vmem:[%s165 + $0x62] sm:$0xff]
      %v1515 = vld [vmem:[%s165 + $0x6a] sm:$0xff]
      %v1516 = vld [vmem:[%s165 + $0x72] sm:$0xff]
      %v1517 = vld [vmem:[%s165 + $0x7a] sm:$0xff]
      %v1518 = vld [vmem:[%s165 + $0x82] sm:$0xff]
      %v1519 = vld [vmem:[%s165 + $0x8a] sm:$0xff]
      %v1520 = vld [vmem:[%s165 + $0x92] sm:$0xff]
      %v1521 = vld [vmem:[%s165 + $0x9a] sm:$0xff]
      %v1522 = vld [vmem:[%s165 + $0xa2] sm:$0xff]
      %v1523 = vld [vmem:[%s165 + $0xaa] sm:$0xff]
      %v1524 = vld [vmem:[%s165 + $0xb2] sm:$0xff]
      %v1525 = vld [vmem:[%s165 + $0xba] sm:$0xff]
      %v1526 = vld [vmem:[%s165 + $0xc2] sm:$0xff]
      %v1527 = vld [vmem:[%s165 + $0xca] sm:$0xff]
      %v1528 = vld [vmem:[%s165 + $0xd2] sm:$0xff]
      %v1529 = vld [vmem:[%s165 + $0xda] sm:$0xff]
      %v1530 = vld [vmem:[%s165 + $0xe2] sm:$0xff]
      %v1531 = vld [vmem:[%s165 + $0xea] sm:$0xff]
      %s1532 = scalar_lea.vmem %s1, 640
      %v1533 = vld [vmem:[%s1532] sm:$0xff]
      %v1534 = vld [vmem:[%s1532 + $0x8] sm:$0xff]
      %v1535 = vld [vmem:[%s1532 + $0x10] sm:$0xff]
      %v1536 = vld [vmem:[%s1532 + $0x18] sm:$0xff]
      %v1537 = vld [vmem:[%s1532 + $0x20] sm:$0xff]
      %v1538 = vld [vmem:[%s1532 + $0x28] sm:$0xff]
      %v1539 = vld [vmem:[%s1532 + $0x30] sm:$0xff]
      %v1540 = vld [vmem:[%s1532 + $0x38] sm:$0xff]
      %v1541 = vld [vmem:[%s1532 + $0x40] sm:$0xff]
      %v1542 = vld [vmem:[%s1532 + $0x48] sm:$0xff]
      %v1543 = vld [vmem:[%s1532 + $0x50] sm:$0xff]
      %v1544 = vld [vmem:[%s1532 + $0x58] sm:$0xff]
      %v1545 = vld [vmem:[%s1532 + $0x60] sm:$0xff]
      %v1546 = vld [vmem:[%s1532 + $0x68] sm:$0xff]
      %v1547 = vld [vmem:[%s1532 + $0x70] sm:$0xff]
      %v1548 = vld [vmem:[%s1532 + $0x78] sm:$0xff]
      %1549 = vmatprep.subr.mxu0 0.0
      %1550 = vmatpush1.msra.mxu0 %v1533
      %1551 = vmatprep.subr.mxu0 0.0
      %1552 = vmatpush1.msra.mxu0 %v1534
      %1553 = vmatprep.subr.mxu0 0.0
      %1554 = vmatpush1.msra.mxu0 %v1535
      %1555 = vmatprep.subr.mxu0 0.0
      %1556 = vmatpush1.msra.mxu0 %v1536
      %1557 = vmatprep.subr.mxu0 0.0
      %1558 = vmatpush1.msra.mxu0 %v1537
      %1559 = vmatprep.subr.mxu0 0.0
      %1560 = vmatpush1.msra.mxu0 %v1538
      %1561 = vmatprep.subr.mxu0 0.0
      %1562 = vmatpush1.msra.mxu0 %v1539
      %1563 = vmatprep.subr.mxu0 0.0
      %1564 = vmatpush1.msra.mxu0 %v1540
      %1565 = vmatprep.subr.mxu0 0.0
      %1566 = vmatpush1.msra.mxu0 %v1541
      %1567 = vmatprep.subr.mxu0 0.0
      %1568 = vmatpush1.msra.mxu0 %v1542
      %1569 = vmatprep.subr.mxu0 0.0
      %1570 = vmatpush1.msra.mxu0 %v1543
      %1571 = vmatprep.subr.mxu0 0.0
      %1572 = vmatpush1.msra.mxu0 %v1544
      %1573 = vmatprep.subr.mxu0 0.0
      %1574 = vmatpush1.msra.mxu0 %v1545
      %1575 = vmatprep.subr.mxu0 0.0
      %1576 = vmatpush1.msra.mxu0 %v1546
      %1577 = vmatprep.subr.mxu0 0.0
      %1578 = vmatpush1.msra.mxu0 %v1547
      %1579 = vmatprep.subr.mxu0 0.0
      %1580 = vmatpush1.msra.mxu0 %v1548
      %1581 = vmatprep.subr.mxu0 0.0
      %1582 = vmatpush1.msra.mxu0 0.0
      %1583 = vmatprep.subr.mxu0 0.0
      %1584 = vmatpush1.msra.mxu0 0.0
      %1585 = vmatprep.subr.mxu0 0.0
      %1586 = vmatpush1.msra.mxu0 0.0
      %1587 = vmatprep.subr.mxu0 0.0
      %1588 = vmatpush1.msra.mxu0 0.0
      %1589 = vmatprep.subr.mxu0 0.0
      %1590 = vmatpush1.msra.mxu0 0.0
      %1591 = vmatprep.subr.mxu0 0.0
      %1592 = vmatpush1.msra.mxu0 0.0
      %1593 = vmatprep.subr.mxu0 0.0
      %1594 = vmatpush1.msra.mxu0 0.0
      %1595 = vmatprep.subr.mxu0 0.0
      %1596 = vmatpush1.msra.mxu0 0.0
      %1597 = vmatprep.subr.mxu0 0.0
      %1598 = vmatpush1.msra.mxu0 0.0
      %1599 = vmatprep.subr.mxu0 0.0
      %1600 = vmatpush1.msra.mxu0 0.0
      %1601 = vmatprep.subr.mxu0 0.0
      %1602 = vmatpush1.msra.mxu0 0.0
      %1603 = vmatprep.subr.mxu0 0.0
      %1604 = vmatpush1.msra.mxu0 0.0
      %1605 = vmatprep.subr.mxu0 0.0
      %1606 = vmatpush1.msra.mxu0 0.0
      %1607 = vmatprep.subr.mxu0 0.0
      %1608 = vmatpush1.msra.mxu0 0.0
      %1609 = vmatprep.subr.mxu0 0.0
      %1610 = vmatpush1.msra.mxu0 0.0
      %1611 = vmatprep.subr.mxu0 0.0
      %1612 = vmatpush1.msra.mxu0 0.0
      %1613 = vmatprep.mubr.f32.mxu0 0.0
      %1614 = vmatmul.mubr.f32.gmra.mrb[0].mxu0 %v1504
      %v1615 = vpop.f32.mrb[0].mxu0
      %v1616 = vadd.f32 0.0, %v1615
      %v1617 = vpop.f32.mrb[0].mxu0
      %1618 = vmatprep.mubr.f32.mxu0 0.0
      %1619 = vmatmul.mubr.f32.gmra.mrb[0].mxu0 %v1505
      %v1620 = vpop.f32.mrb[0].mxu0
      %v1621 = vadd.f32 0.0, %v1620
      %v1622 = vpop.f32.mrb[0].mxu0
      %1623 = vmatprep.mubr.f32.mxu0 0.0
      %1624 = vmatmul.mubr.f32.gmra.mrb[0].mxu0 %v1506
      %v1625 = vpop.f32.mrb[0].mxu0
      %v1626 = vadd.f32 0.0, %v1625
      %v1627 = vpop.f32.mrb[0].mxu0
      %1628 = vmatprep.mubr.f32.mxu0 0.0
      %1629 = vmatmul.mubr.f32.gmra.mrb[0].mxu0 %v1507
      %v1630 = vpop.f32.mrb[0].mxu0
      %v1631 = vadd.f32 0.0, %v1630
      %v1632 = vpop.f32.mrb[0].mxu0
      %1633 = vmatprep.mubr.f32.mxu0 0.0
      %1634 = vmatmul.mubr.f32.gmra.mrb[0].mxu0 %v1508
      %v1635 = vpop.f32.mrb[0].mxu0
      %v1636 = vadd.f32 0.0, %v1635
      %v1637 = vpop.f32.mrb[0].mxu0
      %1638 = vmatprep.mubr.f32.mxu0 0.0
      %1639 = vmatmul.mubr.f32.gmra.mrb[0].mxu0 %v1509
      %v1640 = vpop.f32.mrb[0].mxu0
      %v1641 = vadd.f32 0.0, %v1640
      %v1642 = vpop.f32.mrb[0].mxu0
      %1643 = vmatprep.mubr.f32.mxu0 0.0
      %1644 = vmatmul.mubr.f32.gmra.mrb[0].mxu0 %v1510
      %v1645 = vpop.f32.mrb[0].mxu0
      %v1646 = vadd.f32 0.0, %v1645
      %v1647 = vpop.f32.mrb[0].mxu0
      %1648 = vmatprep.mubr.f32.mxu0 0.0
      %1649 = vmatmul.mubr.f32.gmra.mrb[0].mxu0 %v1511
      %v1650 = vpop.f32.mrb[0].mxu0
      %v1651 = vadd.f32 0.0, %v1650
      %v1652 = vpop.f32.mrb[0].mxu0
      %1653 = vmatprep.mubr.f32.mxu0 0.0
      %1654 = vmatmul.mubr.f32.gmra.mrb[0].mxu0 %v1512
      %v1655 = vpop.f32.mrb[0].mxu0
      %v1656 = vadd.f32 0.0, %v1655
      %v1657 = vpop.f32.mrb[0].mxu0
      %1658 = vmatprep.mubr.f32.mxu0 0.0
      %1659 = vmatmul.mubr.f32.gmra.mrb[0].mxu0 %v1513
      %v1660 = vpop.f32.mrb[0].mxu0
      %v1661 = vadd.f32 0.0, %v1660
      %v1662 = vpop.f32.mrb[0].mxu0
      %1663 = vmatprep.mubr.f32.mxu0 0.0
      %1664 = vmatmul.mubr.f32.gmra.mrb[0].mxu0 %v1514
      %v1665 = vpop.f32.mrb[0].mxu0
      %v1666 = vadd.f32 0.0, %v1665
      %v1667 = vpop.f32.mrb[0].mxu0
      %1668 = vmatprep.mubr.f32.mxu0 0.0
      %1669 = vmatmul.mubr.f32.gmra.mrb[0].mxu0 %v1515
      %v1670 = vpop.f32.mrb[0].mxu0
      %v1671 = vadd.f32 0.0, %v1670
      %v1672 = vpop.f32.mrb[0].mxu0
      %1673 = vmatprep.mubr.f32.mxu0 0.0
      %1674 = vmatmul.mubr.f32.gmra.mrb[0].mxu0 %v1516
      %v1675 = vpop.f32.mrb[0].mxu0
      %v1676 = vadd.f32 0.0, %v1675
      %v1677 = vpop.f32.mrb[0].mxu0
      %1678 = vmatprep.mubr.f32.mxu0 0.0
      %1679 = vmatmul.mubr.f32.gmra.mrb[0].mxu0 %v1517
      %v1680 = vpop.f32.mrb[0].mxu0
      %v1681 = vadd.f32 0.0, %v1680
      %v1682 = vpop.f32.mrb[0].mxu0
      %1683 = vmatprep.mubr.f32.mxu0 0.0
      %1684 = vmatmul.mubr.f32.gmra.mrb[0].mxu0 %v1518
      %v1685 = vpop.f32.mrb[0].mxu0
      %v1686 = vadd.f32 0.0, %v1685
      %v1687 = vpop.f32.mrb[0].mxu0
      %1688 = vmatprep.mubr.f32.mxu0 0.0
      %1689 = vmatmul.mubr.f32.gmra.mrb[0].mxu0 %v1519
      %v1690 = vpop.f32.mrb[0].mxu0
      %v1691 = vadd.f32 0.0, %v1690
      %v1692 = vpop.f32.mrb[0].mxu0
      %1693 = vmatprep.mubr.f32.mxu0 0.0
      %1694 = vmatmul.mubr.f32.gmra.mrb[0].mxu0 %v1520
      %v1695 = vpop.f32.mrb[0].mxu0
      %v1696 = vadd.f32 0.0, %v1695
      %v1697 = vpop.f32.mrb[0].mxu0
      %1698 = vmatprep.mubr.f32.mxu0 0.0
      %1699 = vmatmul.mubr.f32.gmra.mrb[0].mxu0 %v1521
      %v1700 = vpop.f32.mrb[0].mxu0
      %v1701 = vadd.f32 0.0, %v1700
      %v1702 = vpop.f32.mrb[0].mxu0
      %1703 = vmatprep.mubr.f32.mxu0 0.0
      %1704 = vmatmul.mubr.f32.gmra.mrb[0].mxu0 %v1522
      %v1705 = vpop.f32.mrb[0].mxu0
      %v1706 = vadd.f32 0.0, %v1705
      %v1707 = vpop.f32.mrb[0].mxu0
      %1708 = vmatprep.mubr.f32.mxu0 0.0
      %1709 = vmatmul.mubr.f32.gmra.mrb[0].mxu0 %v1523
      %v1710 = vpop.f32.mrb[0].mxu0
      %v1711 = vadd.f32 0.0, %v1710
      %v1712 = vpop.f32.mrb[0].mxu0
      %1713 = vmatprep.mubr.f32.mxu0 0.0
      %1714 = vmatmul.mubr.f32.gmra.mrb[0].mxu0 %v1524
      %v1715 = vpop.f32.mrb[0].mxu0
      %v1716 = vadd.f32 0.0, %v1715
      %v1717 = vpop.f32.mrb[0].mxu0
      %1718 = vmatprep.mubr.f32.mxu0 0.0
      %1719 = vmatmul.mubr.f32.gmra.mrb[0].mxu0 %v1525
      %v1720 = vpop.f32.mrb[0].mxu0
      %v1721 = vadd.f32 0.0, %v1720
      %v1722 = vpop.f32.mrb[0].mxu0
      %1723 = vmatprep.mubr.f32.mxu0 0.0
      %1724 = vmatmul.mubr.f32.gmra.mrb[0].mxu0 %v1526
      %v1725 = vpop.f32.mrb[0].mxu0
      %v1726 = vadd.f32 0.0, %v1725
      %v1727 = vpop.f32.mrb[0].mxu0
      %1728 = vmatprep.mubr.f32.mxu0 0.0
      %1729 = vmatmul.mubr.f32.gmra.mrb[0].mxu0 %v1527
      %v1730 = vpop.f32.mrb[0].mxu0
      %v1731 = vadd.f32 0.0, %v1730
      %v1732 = vpop.f32.mrb[0].mxu0
      %1733 = vmatprep.mubr.f32.mxu0 0.0
      %1734 = vmatmul.mubr.f32.gmra.mrb[0].mxu0 %v1528
      %v1735 = vpop.f32.mrb[0].mxu0
      %v1736 = vadd.f32 0.0, %v1735
      %v1737 = vpop.f32.mrb[0].mxu0
      %1738 = vmatprep.mubr.f32.mxu0 0.0
      %1739 = vmatmul.mubr.f32.gmra.mrb[0].mxu0 %v1529
      %v1740 = vpop.f32.mrb[0].mxu0
      %v1741 = vadd.f32 0.0, %v1740
      %v1742 = vpop.f32.mrb[0].mxu0
      %1743 = vmatprep.mubr.f32.mxu0 0.0
      %1744 = vmatmul.mubr.f32.gmra.mrb[0].mxu0 %v1530
      %v1745 = vpop.f32.mrb[0].mxu0
      %v1746 = vadd.f32 0.0, %v1745
      %v1747 = vpop.f32.mrb[0].mxu0
      %1748 = vmatprep.mubr.f32.mxu0 0.0
      %1749 = vmatmul.mubr.f32.gmra.mrb[0].mxu0 %v1531
      %v1750 = vpop.f32.mrb[0].mxu0
      %v1751 = vadd.f32 0.0, %v1750
      %v1752 = vpop.f32.mrb[0].mxu0
      %1753 = vdwg.mxu0
      %v1754 = vadd.f32 %v1476, %v1616
      %v1755 = vadd.f32 %v1477, %v1621
      %v1756 = vadd.f32 %v1478, %v1626
      %v1757 = vadd.f32 %v1479, %v1631
      %v1758 = vadd.f32 %v1480, %v1636
      %v1759 = vadd.f32 %v1481, %v1641
      %v1760 = vadd.f32 %v1482, %v1646
      %v1761 = vadd.f32 %v1483, %v1651
      %v1762 = vadd.f32 %v1484, %v1656
      %v1763 = vadd.f32 %v1485, %v1661
      %v1764 = vadd.f32 %v1486, %v1666
      %v1765 = vadd.f32 %v1487, %v1671
      %v1766 = vadd.f32 %v1488, %v1676
      %v1767 = vadd.f32 %v1489, %v1681
      %v1768 = vadd.f32 %v1490, %v1686
      %v1769 = vadd.f32 %v1491, %v1691
      %v1770 = vadd.f32 %v1492, %v1696
      %v1771 = vadd.f32 %v1493, %v1701
      %v1772 = vadd.f32 %v1494, %v1706
      %v1773 = vadd.f32 %v1495, %v1711
      %v1774 = vadd.f32 %v1496, %v1716
      %v1775 = vadd.f32 %v1497, %v1721
      %v1776 = vadd.f32 %v1498, %v1726
      %v1777 = vadd.f32 %v1499, %v1731
      %v1778 = vadd.f32 %v1500, %v1736
      %v1779 = vadd.f32 %v1501, %v1741
      %v1780 = vadd.f32 %v1502, %v1746
      %v1781 = vadd.f32 %v1503, %v1751
      %v1782 = vld [vmem:[%s165 + $0x20] sm:$0xff]
      %v1783 = vld [vmem:[%s165 + $0x28] sm:$0xff]
      %v1784 = vld [vmem:[%s165 + $0x30] sm:$0xff]
      %v1785 = vld [vmem:[%s165 + $0x38] sm:$0xff]
      %v1786 = vld [vmem:[%s165 + $0x40] sm:$0xff]
      %v1787 = vld [vmem:[%s165 + $0x48] sm:$0xff]
      %v1788 = vld [vmem:[%s165 + $0x50] sm:$0xff]
      %v1789 = vld [vmem:[%s165 + $0x58] sm:$0xff]
      %v1790 = vld [vmem:[%s165 + $0x60] sm:$0xff]
      %v1791 = vld [vmem:[%s165 + $0x68] sm:$0xff]
      %v1792 = vld [vmem:[%s165 + $0x70] sm:$0xff]
      %v1793 = vld [vmem:[%s165 + $0x78] sm:$0xff]
      %v1794 = vld [vmem:[%s165 + $0x80] sm:$0xff]
      %v1795 = vld [vmem:[%s165 + $0x88] sm:$0xff]
      %v1796 = vld [vmem:[%s165 + $0x90] sm:$0xff]
      %v1797 = vld [vmem:[%s165 + $0x98] sm:$0xff]
      %v1798 = vld [vmem:[%s165 + $0xa0] sm:$0xff]
      %v1799 = vld [vmem:[%s165 + $0xa8] sm:$0xff]
      %v1800 = vld [vmem:[%s165 + $0xb0] sm:$0xff]
      %v1801 = vld [vmem:[%s165 + $0xb8] sm:$0xff]
      %v1802 = vld [vmem:[%s165 + $0xc0] sm:$0xff]
      %v1803 = vld [vmem:[%s165 + $0xc8] sm:$0xff]
      %v1804 = vld [vmem:[%s165 + $0xd0] sm:$0xff]
      %v1805 = vld [vmem:[%s165 + $0xd8] sm:$0xff]
      %v1806 = vld [vmem:[%s165 + $0xe0] sm:$0xff]
      %v1807 = vld [vmem:[%s165 + $0xe8] sm:$0xff]
      %v1808 = vld [vmem:[%s165 + $0xf0] sm:$0xff]
      %v1809 = vld [vmem:[%s165 + $0xf8] sm:$0xff]
      %s1810 = scalar_lea.vmem %s1, 768
      %v1811 = vld [vmem:[%s1810] sm:$0xff]
      %v1812 = vld [vmem:[%s1810 + $0x8] sm:$0xff]
      %v1813 = vld [vmem:[%s1810 + $0x10] sm:$0xff]
      %v1814 = vld [vmem:[%s1810 + $0x18] sm:$0xff]
      %v1815 = vld [vmem:[%s1810 + $0x20] sm:$0xff]
      %v1816 = vld [vmem:[%s1810 + $0x28] sm:$0xff]
      %v1817 = vld [vmem:[%s1810 + $0x30] sm:$0xff]
      %v1818 = vld [vmem:[%s1810 + $0x38] sm:$0xff]
      %v1819 = vld [vmem:[%s1810 + $0x40] sm:$0xff]
      %v1820 = vld [vmem:[%s1810 + $0x48] sm:$0xff]
      %v1821 = vld [vmem:[%s1810 + $0x50] sm:$0xff]
      %v1822 = vld [vmem:[%s1810 + $0x58] sm:$0xff]
      %v1823 = vld [vmem:[%s1810 + $0x60] sm:$0xff]
      %v1824 = vld [vmem:[%s1810 + $0x68] sm:$0xff]
      %v1825 = vld [vmem:[%s1810 + $0x70] sm:$0xff]
      %v1826 = vld [vmem:[%s1810 + $0x78] sm:$0xff]
      %1827 = vmatprep.subr.mxu0 0.0
      %1828 = vmatpush1.msra.mxu0 %v1811
      %1829 = vmatprep.subr.mxu0 0.0
      %1830 = vmatpush1.msra.mxu0 %v1812
      %1831 = vmatprep.subr.mxu0 0.0
      %1832 = vmatpush1.msra.mxu0 %v1813
      %1833 = vmatprep.subr.mxu0 0.0
      %1834 = vmatpush1.msra.mxu0 %v1814
      %1835 = vmatprep.subr.mxu0 0.0
      %1836 = vmatpush1.msra.mxu0 %v1815
      %1837 = vmatprep.subr.mxu0 0.0
      %1838 = vmatpush1.msra.mxu0 %v1816
      %1839 = vmatprep.subr.mxu0 0.0
      %1840 = vmatpush1.msra.mxu0 %v1817
      %1841 = vmatprep.subr.mxu0 0.0
      %1842 = vmatpush1.msra.mxu0 %v1818
      %1843 = vmatprep.subr.mxu0 0.0
      %1844 = vmatpush1.msra.mxu0 %v1819
      %1845 = vmatprep.subr.mxu0 0.0
      %1846 = vmatpush1.msra.mxu0 %v1820
      %1847 = vmatprep.subr.mxu0 0.0
      %1848 = vmatpush1.msra.mxu0 %v1821
      %1849 = vmatprep.subr.mxu0 0.0
      %1850 = vmatpush1.msra.mxu0 %v1822
      %1851 = vmatprep.subr.mxu0 0.0
      %1852 = vmatpush1.msra.mxu0 %v1823
      %1853 = vmatprep.subr.mxu0 0.0
      %1854 = vmatpush1.msra.mxu0 %v1824
      %1855 = vmatprep.subr.mxu0 0.0
      %1856 = vmatpush1.msra.mxu0 %v1825
      %1857 = vmatprep.subr.mxu0 0.0
      %1858 = vmatpush1.msra.mxu0 %v1826
      %1859 = vmatprep.subr.mxu0 0.0
      %1860 = vmatpush1.msra.mxu0 0.0
      %1861 = vmatprep.subr.mxu0 0.0
      %1862 = vmatpush1.msra.mxu0 0.0
      %1863 = vmatprep.subr.mxu0 0.0
      %1864 = vmatpush1.msra.mxu0 0.0
      %1865 = vmatprep.subr.mxu0 0.0
      %1866 = vmatpush1.msra.mxu0 0.0
      %1867 = vmatprep.subr.mxu0 0.0
      %1868 = vmatpush1.msra.mxu0 0.0
      %1869 = vmatprep.subr.mxu0 0.0
      %1870 = vmatpush1.msra.mxu0 0.0
      %1871 = vmatprep.subr.mxu0 0.0
      %1872 = vmatpush1.msra.mxu0 0.0
      %1873 = vmatprep.subr.mxu0 0.0
      %1874 = vmatpush1.msra.mxu0 0.0
      %1875 = vmatprep.subr.mxu0 0.0
      %1876 = vmatpush1.msra.mxu0 0.0
      %1877 = vmatprep.subr.mxu0 0.0
      %1878 = vmatpush1.msra.mxu0 0.0
      %1879 = vmatprep.subr.mxu0 0.0
      %1880 = vmatpush1.msra.mxu0 0.0
      %1881 = vmatprep.subr.mxu0 0.0
      %1882 = vmatpush1.msra.mxu0 0.0
      %1883 = vmatprep.subr.mxu0 0.0
      %1884 = vmatpush1.msra.mxu0 0.0
      %1885 = vmatprep.subr.mxu0 0.0
      %1886 = vmatpush1.msra.mxu0 0.0
      %1887 = vmatprep.subr.mxu0 0.0
      %1888 = vmatpush1.msra.mxu0 0.0
      %1889 = vmatprep.subr.mxu0 0.0
      %1890 = vmatpush1.msra.mxu0 0.0
      %1891 = vmatprep.mubr.f32.mxu0 0.0
      %1892 = vmatmul.mubr.f32.gmra.mrb[0].mxu0 %v1782
      %v1893 = vpop.f32.mrb[0].mxu0
      %v1894 = vadd.f32 0.0, %v1893
      %v1895 = vpop.f32.mrb[0].mxu0
      %1896 = vmatprep.mubr.f32.mxu0 0.0
      %1897 = vmatmul.mubr.f32.gmra.mrb[0].mxu0 %v1783
      %v1898 = vpop.f32.mrb[0].mxu0
      %v1899 = vadd.f32 0.0, %v1898
      %v1900 = vpop.f32.mrb[0].mxu0
      %1901 = vmatprep.mubr.f32.mxu0 0.0
      %1902 = vmatmul.mubr.f32.gmra.mrb[0].mxu0 %v1784
      %v1903 = vpop.f32.mrb[0].mxu0
      %v1904 = vadd.f32 0.0, %v1903
      %v1905 = vpop.f32.mrb[0].mxu0
      %1906 = vmatprep.mubr.f32.mxu0 0.0
      %1907 = vmatmul.mubr.f32.gmra.mrb[0].mxu0 %v1785
      %v1908 = vpop.f32.mrb[0].mxu0
      %v1909 = vadd.f32 0.0, %v1908
      %v1910 = vpop.f32.mrb[0].mxu0
      %1911 = vmatprep.mubr.f32.mxu0 0.0
      %1912 = vmatmul.mubr.f32.gmra.mrb[0].mxu0 %v1786
      %v1913 = vpop.f32.mrb[0].mxu0
      %v1914 = vadd.f32 0.0, %v1913
      %v1915 = vpop.f32.mrb[0].mxu0
      %1916 = vmatprep.mubr.f32.mxu0 0.0
      %1917 = vmatmul.mubr.f32.gmra.mrb[0].mxu0 %v1787
      %v1918 = vpop.f32.mrb[0].mxu0
      %v1919 = vadd.f32 0.0, %v1918
      %v1920 = vpop.f32.mrb[0].mxu0
      %1921 = vmatprep.mubr.f32.mxu0 0.0
      %1922 = vmatmul.mubr.f32.gmra.mrb[0].mxu0 %v1788
      %v1923 = vpop.f32.mrb[0].mxu0
      %v1924 = vadd.f32 0.0, %v1923
      %v1925 = vpop.f32.mrb[0].mxu0
      %1926 = vmatprep.mubr.f32.mxu0 0.0
      %1927 = vmatmul.mubr.f32.gmra.mrb[0].mxu0 %v1789
      %v1928 = vpop.f32.mrb[0].mxu0
      %v1929 = vadd.f32 0.0, %v1928
      %v1930 = vpop.f32.mrb[0].mxu0
      %1931 = vmatprep.mubr.f32.mxu0 0.0
      %1932 = vmatmul.mubr.f32.gmra.mrb[0].mxu0 %v1790
      %v1933 = vpop.f32.mrb[0].mxu0
      %v1934 = vadd.f32 0.0, %v1933
      %v1935 = vpop.f32.mrb[0].mxu0
      %1936 = vmatprep.mubr.f32.mxu0 0.0
      %1937 = vmatmul.mubr.f32.gmra.mrb[0].mxu0 %v1791
      %v1938 = vpop.f32.mrb[0].mxu0
      %v1939 = vadd.f32 0.0, %v1938
      %v1940 = vpop.f32.mrb[0].mxu0
      %1941 = vmatprep.mubr.f32.mxu0 0.0
      %1942 = vmatmul.mubr.f32.gmra.mrb[0].mxu0 %v1792
      %v1943 = vpop.f32.mrb[0].mxu0
      %v1944 = vadd.f32 0.0, %v1943
      %v1945 = vpop.f32.mrb[0].mxu0
      %1946 = vmatprep.mubr.f32.mxu0 0.0
      %1947 = vmatmul.mubr.f32.gmra.mrb[0].mxu0 %v1793
      %v1948 = vpop.f32.mrb[0].mxu0
      %v1949 = vadd.f32 0.0, %v1948
      %v1950 = vpop.f32.mrb[0].mxu0
      %1951 = vmatprep.mubr.f32.mxu0 0.0
      %1952 = vmatmul.mubr.f32.gmra.mrb[0].mxu0 %v1794
      %v1953 = vpop.f32.mrb[0].mxu0
      %v1954 = vadd.f32 0.0, %v1953
      %v1955 = vpop.f32.mrb[0].mxu0
      %1956 = vmatprep.mubr.f32.mxu0 0.0
      %1957 = vmatmul.mubr.f32.gmra.mrb[0].mxu0 %v1795
      %v1958 = vpop.f32.mrb[0].mxu0
      %v1959 = vadd.f32 0.0, %v1958
      %v1960 = vpop.f32.mrb[0].mxu0
      %1961 = vmatprep.mubr.f32.mxu0 0.0
      %1962 = vmatmul.mubr.f32.gmra.mrb[0].mxu0 %v1796
      %v1963 = vpop.f32.mrb[0].mxu0
      %v1964 = vadd.f32 0.0, %v1963
      %v1965 = vpop.f32.mrb[0].mxu0
      %1966 = vmatprep.mubr.f32.mxu0 0.0
      %1967 = vmatmul.mubr.f32.gmra.mrb[0].mxu0 %v1797
      %v1968 = vpop.f32.mrb[0].mxu0
      %v1969 = vadd.f32 0.0, %v1968
      %v1970 = vpop.f32.mrb[0].mxu0
      %1971 = vmatprep.mubr.f32.mxu0 0.0
      %1972 = vmatmul.mubr.f32.gmra.mrb[0].mxu0 %v1798
      %v1973 = vpop.f32.mrb[0].mxu0
      %v1974 = vadd.f32 0.0, %v1973
      %v1975 = vpop.f32.mrb[0].mxu0
      %1976 = vmatprep.mubr.f32.mxu0 0.0
      %1977 = vmatmul.mubr.f32.gmra.mrb[0].mxu0 %v1799
      %v1978 = vpop.f32.mrb[0].mxu0
      %v1979 = vadd.f32 0.0, %v1978
      %v1980 = vpop.f32.mrb[0].mxu0
      %1981 = vmatprep.mubr.f32.mxu0 0.0
      %1982 = vmatmul.mubr.f32.gmra.mrb[0].mxu0 %v1800
      %v1983 = vpop.f32.mrb[0].mxu0
      %v1984 = vadd.f32 0.0, %v1983
      %v1985 = vpop.f32.mrb[0].mxu0
      %1986 = vmatprep.mubr.f32.mxu0 0.0
      %1987 = vmatmul.mubr.f32.gmra.mrb[0].mxu0 %v1801
      %v1988 = vpop.f32.mrb[0].mxu0
      %v1989 = vadd.f32 0.0, %v1988
      %v1990 = vpop.f32.mrb[0].mxu0
      %1991 = vmatprep.mubr.f32.mxu0 0.0
      %1992 = vmatmul.mubr.f32.gmra.mrb[0].mxu0 %v1802
      %v1993 = vpop.f32.mrb[0].mxu0
      %v1994 = vadd.f32 0.0, %v1993
      %v1995 = vpop.f32.mrb[0].mxu0
      %1996 = vmatprep.mubr.f32.mxu0 0.0
      %1997 = vmatmul.mubr.f32.gmra.mrb[0].mxu0 %v1803
      %v1998 = vpop.f32.mrb[0].mxu0
      %v1999 = vadd.f32 0.0, %v1998
      %v2000 = vpop.f32.mrb[0].mxu0
      %2001 = vmatprep.mubr.f32.mxu0 0.0
      %2002 = vmatmul.mubr.f32.gmra.mrb[0].mxu0 %v1804
      %v2003 = vpop.f32.mrb[0].mxu0
      %v2004 = vadd.f32 0.0, %v2003
      %v2005 = vpop.f32.mrb[0].mxu0
      %2006 = vmatprep.mubr.f32.mxu0 0.0
      %2007 = vmatmul.mubr.f32.gmra.mrb[0].mxu0 %v1805
      %v2008 = vpop.f32.mrb[0].mxu0
      %v2009 = vadd.f32 0.0, %v2008
      %v2010 = vpop.f32.mrb[0].mxu0
      %2011 = vmatprep.mubr.f32.mxu0 0.0
      %2012 = vmatmul.mubr.f32.gmra.mrb[0].mxu0 %v1806
      %v2013 = vpop.f32.mrb[0].mxu0
      %v2014 = vadd.f32 0.0, %v2013
      %v2015 = vpop.f32.mrb[0].mxu0
      %2016 = vmatprep.mubr.f32.mxu0 0.0
      %2017 = vmatmul.mubr.f32.gmra.mrb[0].mxu0 %v1807
      %v2018 = vpop.f32.mrb[0].mxu0
      %v2019 = vadd.f32 0.0, %v2018
      %v2020 = vpop.f32.mrb[0].mxu0
      %2021 = vmatprep.mubr.f32.mxu0 0.0
      %2022 = vmatmul.mubr.f32.gmra.mrb[0].mxu0 %v1808
      %v2023 = vpop.f32.mrb[0].mxu0
      %v2024 = vadd.f32 0.0, %v2023
      %v2025 = vpop.f32.mrb[0].mxu0
      %2026 = vmatprep.mubr.f32.mxu0 0.0
      %2027 = vmatmul.mubr.f32.gmra.mrb[0].mxu0 %v1809
      %v2028 = vpop.f32.mrb[0].mxu0
      %v2029 = vadd.f32 0.0, %v2028
      %v2030 = vpop.f32.mrb[0].mxu0
      %2031 = vdwg.mxu0
      %v2032 = vadd.f32 %v1754, %v1894
      %v2033 = vadd.f32 %v1755, %v1899
      %v2034 = vadd.f32 %v1756, %v1904
      %v2035 = vadd.f32 %v1757, %v1909
      %v2036 = vadd.f32 %v1758, %v1914
      %v2037 = vadd.f32 %v1759, %v1919
      %v2038 = vadd.f32 %v1760, %v1924
      %v2039 = vadd.f32 %v1761, %v1929
      %v2040 = vadd.f32 %v1762, %v1934
      %v2041 = vadd.f32 %v1763, %v1939
      %v2042 = vadd.f32 %v1764, %v1944
      %v2043 = vadd.f32 %v1765, %v1949
      %v2044 = vadd.f32 %v1766, %v1954
      %v2045 = vadd.f32 %v1767, %v1959
      %v2046 = vadd.f32 %v1768, %v1964
      %v2047 = vadd.f32 %v1769, %v1969
      %v2048 = vadd.f32 %v1770, %v1974
      %v2049 = vadd.f32 %v1771, %v1979
      %v2050 = vadd.f32 %v1772, %v1984
      %v2051 = vadd.f32 %v1773, %v1989
      %v2052 = vadd.f32 %v1774, %v1994
      %v2053 = vadd.f32 %v1775, %v1999
      %v2054 = vadd.f32 %v1776, %v2004
      %v2055 = vadd.f32 %v1777, %v2009
      %v2056 = vadd.f32 %v1778, %v2014
      %v2057 = vadd.f32 %v1779, %v2019
      %v2058 = vadd.f32 %v1780, %v2024
      %v2059 = vadd.f32 %v1781, %v2029
      %v2060 = vld [vmem:[%s165 + $0x21] sm:$0xff]
      %v2061 = vld [vmem:[%s165 + $0x29] sm:$0xff]
      %v2062 = vld [vmem:[%s165 + $0x31] sm:$0xff]
      %v2063 = vld [vmem:[%s165 + $0x39] sm:$0xff]
      %v2064 = vld [vmem:[%s165 + $0x41] sm:$0xff]
      %v2065 = vld [vmem:[%s165 + $0x49] sm:$0xff]
      %v2066 = vld [vmem:[%s165 + $0x51] sm:$0xff]
      %v2067 = vld [vmem:[%s165 + $0x59] sm:$0xff]
      %v2068 = vld [vmem:[%s165 + $0x61] sm:$0xff]
      %v2069 = vld [vmem:[%s165 + $0x69] sm:$0xff]
      %v2070 = vld [vmem:[%s165 + $0x71] sm:$0xff]
      %v2071 = vld [vmem:[%s165 + $0x79] sm:$0xff]
      %v2072 = vld [vmem:[%s165 + $0x81] sm:$0xff]
      %v2073 = vld [vmem:[%s165 + $0x89] sm:$0xff]
      %v2074 = vld [vmem:[%s165 + $0x91] sm:$0xff]
      %v2075 = vld [vmem:[%s165 + $0x99] sm:$0xff]
      %v2076 = vld [vmem:[%s165 + $0xa1] sm:$0xff]
      %v2077 = vld [vmem:[%s165 + $0xa9] sm:$0xff]
      %v2078 = vld [vmem:[%s165 + $0xb1] sm:$0xff]
      %v2079 = vld [vmem:[%s165 + $0xb9] sm:$0xff]
      %v2080 = vld [vmem:[%s165 + $0xc1] sm:$0xff]
      %v2081 = vld [vmem:[%s165 + $0xc9] sm:$0xff]
      %v2082 = vld [vmem:[%s165 + $0xd1] sm:$0xff]
      %v2083 = vld [vmem:[%s165 + $0xd9] sm:$0xff]
      %v2084 = vld [vmem:[%s165 + $0xe1] sm:$0xff]
      %v2085 = vld [vmem:[%s165 + $0xe9] sm:$0xff]
      %v2086 = vld [vmem:[%s165 + $0xf1] sm:$0xff]
      %v2087 = vld [vmem:[%s165 + $0xf9] sm:$0xff]
      %s2088 = scalar_lea.vmem %s1, 896
      %v2089 = vld [vmem:[%s2088] sm:$0xff]
      %v2090 = vld [vmem:[%s2088 + $0x8] sm:$0xff]
      %v2091 = vld [vmem:[%s2088 + $0x10] sm:$0xff]
      %v2092 = vld [vmem:[%s2088 + $0x18] sm:$0xff]
      %v2093 = vld [vmem:[%s2088 + $0x20] sm:$0xff]
      %v2094 = vld [vmem:[%s2088 + $0x28] sm:$0xff]
      %v2095 = vld [vmem:[%s2088 + $0x30] sm:$0xff]
      %v2096 = vld [vmem:[%s2088 + $0x38] sm:$0xff]
      %v2097 = vld [vmem:[%s2088 + $0x40] sm:$0xff]
      %v2098 = vld [vmem:[%s2088 + $0x48] sm:$0xff]
      %v2099 = vld [vmem:[%s2088 + $0x50] sm:$0xff]
      %v2100 = vld [vmem:[%s2088 + $0x58] sm:$0xff]
      %v2101 = vld [vmem:[%s2088 + $0x60] sm:$0xff]
      %v2102 = vld [vmem:[%s2088 + $0x68] sm:$0xff]
      %v2103 = vld [vmem:[%s2088 + $0x70] sm:$0xff]
      %v2104 = vld [vmem:[%s2088 + $0x78] sm:$0xff]
      %2105 = vmatprep.subr.mxu0 0.0
      %2106 = vmatpush1.msra.mxu0 %v2089
      %2107 = vmatprep.subr.mxu0 0.0
      %2108 = vmatpush1.msra.mxu0 %v2090
      %2109 = vmatprep.subr.mxu0 0.0
      %2110 = vmatpush1.msra.mxu0 %v2091
      %2111 = vmatprep.subr.mxu0 0.0
      %2112 = vmatpush1.msra.mxu0 %v2092
      %2113 = vmatprep.subr.mxu0 0.0
      %2114 = vmatpush1.msra.mxu0 %v2093
      %2115 = vmatprep.subr.mxu0 0.0
      %2116 = vmatpush1.msra.mxu0 %v2094
      %2117 = vmatprep.subr.mxu0 0.0
      %2118 = vmatpush1.msra.mxu0 %v2095
      %2119 = vmatprep.subr.mxu0 0.0
      %2120 = vmatpush1.msra.mxu0 %v2096
      %2121 = vmatprep.subr.mxu0 0.0
      %2122 = vmatpush1.msra.mxu0 %v2097
      %2123 = vmatprep.subr.mxu0 0.0
      %2124 = vmatpush1.msra.mxu0 %v2098
      %2125 = vmatprep.subr.mxu0 0.0
      %2126 = vmatpush1.msra.mxu0 %v2099
      %2127 = vmatprep.subr.mxu0 0.0
      %2128 = vmatpush1.msra.mxu0 %v2100
      %2129 = vmatprep.subr.mxu0 0.0
      %2130 = vmatpush1.msra.mxu0 %v2101
      %2131 = vmatprep.subr.mxu0 0.0
      %2132 = vmatpush1.msra.mxu0 %v2102
      %2133 = vmatprep.subr.mxu0 0.0
      %2134 = vmatpush1.msra.mxu0 %v2103
      %2135 = vmatprep.subr.mxu0 0.0
      %2136 = vmatpush1.msra.mxu0 %v2104
      %2137 = vmatprep.subr.mxu0 0.0
      %2138 = vmatpush1.msra.mxu0 0.0
      %2139 = vmatprep.subr.mxu0 0.0
      %2140 = vmatpush1.msra.mxu0 0.0
      %2141 = vmatprep.subr.mxu0 0.0
      %2142 = vmatpush1.msra.mxu0 0.0
      %2143 = vmatprep.subr.mxu0 0.0
      %2144 = vmatpush1.msra.mxu0 0.0
      %2145 = vmatprep.subr.mxu0 0.0
      %2146 = vmatpush1.msra.mxu0 0.0
      %2147 = vmatprep.subr.mxu0 0.0
      %2148 = vmatpush1.msra.mxu0 0.0
      %2149 = vmatprep.subr.mxu0 0.0
      %2150 = vmatpush1.msra.mxu0 0.0
      %2151 = vmatprep.subr.mxu0 0.0
      %2152 = vmatpush1.msra.mxu0 0.0
      %2153 = vmatprep.subr.mxu0 0.0
      %2154 = vmatpush1.msra.mxu0 0.0
      %2155 = vmatprep.subr.mxu0 0.0
      %2156 = vmatpush1.msra.mxu0 0.0
      %2157 = vmatprep.subr.mxu0 0.0
      %2158 = vmatpush1.msra.mxu0 0.0
      %2159 = vmatprep.subr.mxu0 0.0
      %2160 = vmatpush1.msra.mxu0 0.0
      %2161 = vmatprep.subr.mxu0 0.0
      %2162 = vmatpush1.msra.mxu0 0.0
      %2163 = vmatprep.subr.mxu0 0.0
      %2164 = vmatpush1.msra.mxu0 0.0
      %2165 = vmatprep.subr.mxu0 0.0
      %2166 = vmatpush1.msra.mxu0 0.0
      %2167 = vmatprep.subr.mxu0 0.0
      %2168 = vmatpush1.msra.mxu0 0.0
      %2169 = vmatprep.mubr.f32.mxu0 0.0
      %2170 = vmatmul.mubr.f32.gmra.mrb[0].mxu0 %v2060
      %v2171 = vpop.f32.mrb[0].mxu0
      %v2172 = vadd.f32 0.0, %v2171
      %v2173 = vpop.f32.mrb[0].mxu0
      %2174 = vmatprep.mubr.f32.mxu0 0.0
      %2175 = vmatmul.mubr.f32.gmra.mrb[0].mxu0 %v2061
      %v2176 = vpop.f32.mrb[0].mxu0
      %v2177 = vadd.f32 0.0, %v2176
      %v2178 = vpop.f32.mrb[0].mxu0
      %2179 = vmatprep.mubr.f32.mxu0 0.0
      %2180 = vmatmul.mubr.f32.gmra.mrb[0].mxu0 %v2062
      %v2181 = vpop.f32.mrb[0].mxu0
      %v2182 = vadd.f32 0.0, %v2181
      %v2183 = vpop.f32.mrb[0].mxu0
      %2184 = vmatprep.mubr.f32.mxu0 0.0
      %2185 = vmatmul.mubr.f32.gmra.mrb[0].mxu0 %v2063
      %v2186 = vpop.f32.mrb[0].mxu0
      %v2187 = vadd.f32 0.0, %v2186
      %v2188 = vpop.f32.mrb[0].mxu0
      %2189 = vmatprep.mubr.f32.mxu0 0.0
      %2190 = vmatmul.mubr.f32.gmra.mrb[0].mxu0 %v2064
      %v2191 = vpop.f32.mrb[0].mxu0
      %v2192 = vadd.f32 0.0, %v2191
      %v2193 = vpop.f32.mrb[0].mxu0
      %2194 = vmatprep.mubr.f32.mxu0 0.0
      %2195 = vmatmul.mubr.f32.gmra.mrb[0].mxu0 %v2065
      %v2196 = vpop.f32.mrb[0].mxu0
      %v2197 = vadd.f32 0.0, %v2196
      %v2198 = vpop.f32.mrb[0].mxu0
      %2199 = vmatprep.mubr.f32.mxu0 0.0
      %2200 = vmatmul.mubr.f32.gmra.mrb[0].mxu0 %v2066
      %v2201 = vpop.f32.mrb[0].mxu0
      %v2202 = vadd.f32 0.0, %v2201
      %v2203 = vpop.f32.mrb[0].mxu0
      %2204 = vmatprep.mubr.f32.mxu0 0.0
      %2205 = vmatmul.mubr.f32.gmra.mrb[0].mxu0 %v2067
      %v2206 = vpop.f32.mrb[0].mxu0
      %v2207 = vadd.f32 0.0, %v2206
      %v2208 = vpop.f32.mrb[0].mxu0
      %2209 = vmatprep.mubr.f32.mxu0 0.0
      %2210 = vmatmul.mubr.f32.gmra.mrb[0].mxu0 %v2068
      %v2211 = vpop.f32.mrb[0].mxu0
      %v2212 = vadd.f32 0.0, %v2211
      %v2213 = vpop.f32.mrb[0].mxu0
      %2214 = vmatprep.mubr.f32.mxu0 0.0
      %2215 = vmatmul.mubr.f32.gmra.mrb[0].mxu0 %v2069
      %v2216 = vpop.f32.mrb[0].mxu0
      %v2217 = vadd.f32 0.0, %v2216
      %v2218 = vpop.f32.mrb[0].mxu0
      %2219 = vmatprep.mubr.f32.mxu0 0.0
      %2220 = vmatmul.mubr.f32.gmra.mrb[0].mxu0 %v2070
      %v2221 = vpop.f32.mrb[0].mxu0
      %v2222 = vadd.f32 0.0, %v2221
      %v2223 = vpop.f32.mrb[0].mxu0
      %2224 = vmatprep.mubr.f32.mxu0 0.0
      %2225 = vmatmul.mubr.f32.gmra.mrb[0].mxu0 %v2071
      %v2226 = vpop.f32.mrb[0].mxu0
      %v2227 = vadd.f32 0.0, %v2226
      %v2228 = vpop.f32.mrb[0].mxu0
      %2229 = vmatprep.mubr.f32.mxu0 0.0
      %2230 = vmatmul.mubr.f32.gmra.mrb[0].mxu0 %v2072
      %v2231 = vpop.f32.mrb[0].mxu0
      %v2232 = vadd.f32 0.0, %v2231
      %v2233 = vpop.f32.mrb[0].mxu0
      %2234 = vmatprep.mubr.f32.mxu0 0.0
      %2235 = vmatmul.mubr.f32.gmra.mrb[0].mxu0 %v2073
      %v2236 = vpop.f32.mrb[0].mxu0
      %v2237 = vadd.f32 0.0, %v2236
      %v2238 = vpop.f32.mrb[0].mxu0
      %2239 = vmatprep.mubr.f32.mxu0 0.0
      %2240 = vmatmul.mubr.f32.gmra.mrb[0].mxu0 %v2074
      %v2241 = vpop.f32.mrb[0].mxu0
      %v2242 = vadd.f32 0.0, %v2241
      %v2243 = vpop.f32.mrb[0].mxu0
      %2244 = vmatprep.mubr.f32.mxu0 0.0
      %2245 = vmatmul.mubr.f32.gmra.mrb[0].mxu0 %v2075
      %v2246 = vpop.f32.mrb[0].mxu0
      %v2247 = vadd.f32 0.0, %v2246
      %v2248 = vpop.f32.mrb[0].mxu0
      %2249 = vmatprep.mubr.f32.mxu0 0.0
      %2250 = vmatmul.mubr.f32.gmra.mrb[0].mxu0 %v2076
      %v2251 = vpop.f32.mrb[0].mxu0
      %v2252 = vadd.f32 0.0, %v2251
      %v2253 = vpop.f32.mrb[0].mxu0
      %2254 = vmatprep.mubr.f32.mxu0 0.0
      %2255 = vmatmul.mubr.f32.gmra.mrb[0].mxu0 %v2077
      %v2256 = vpop.f32.mrb[0].mxu0
      %v2257 = vadd.f32 0.0, %v2256
      %v2258 = vpop.f32.mrb[0].mxu0
      %2259 = vmatprep.mubr.f32.mxu0 0.0
      %2260 = vmatmul.mubr.f32.gmra.mrb[0].mxu0 %v2078
      %v2261 = vpop.f32.mrb[0].mxu0
      %v2262 = vadd.f32 0.0, %v2261
      %v2263 = vpop.f32.mrb[0].mxu0
      %2264 = vmatprep.mubr.f32.mxu0 0.0
      %2265 = vmatmul.mubr.f32.gmra.mrb[0].mxu0 %v2079
      %v2266 = vpop.f32.mrb[0].mxu0
      %v2267 = vadd.f32 0.0, %v2266
      %v2268 = vpop.f32.mrb[0].mxu0
      %2269 = vmatprep.mubr.f32.mxu0 0.0
      %2270 = vmatmul.mubr.f32.gmra.mrb[0].mxu0 %v2080
      %v2271 = vpop.f32.mrb[0].mxu0
      %v2272 = vadd.f32 0.0, %v2271
      %v2273 = vpop.f32.mrb[0].mxu0
      %2274 = vmatprep.mubr.f32.mxu0 0.0
      %2275 = vmatmul.mubr.f32.gmra.mrb[0].mxu0 %v2081
      %v2276 = vpop.f32.mrb[0].mxu0
      %v2277 = vadd.f32 0.0, %v2276
      %v2278 = vpop.f32.mrb[0].mxu0
      %2279 = vmatprep.mubr.f32.mxu0 0.0
      %2280 = vmatmul.mubr.f32.gmra.mrb[0].mxu0 %v2082
      %v2281 = vpop.f32.mrb[0].mxu0
      %v2282 = vadd.f32 0.0, %v2281
      %v2283 = vpop.f32.mrb[0].mxu0
      %2284 = vmatprep.mubr.f32.mxu0 0.0
      %2285 = vmatmul.mubr.f32.gmra.mrb[0].mxu0 %v2083
      %v2286 = vpop.f32.mrb[0].mxu0
      %v2287 = vadd.f32 0.0, %v2286
      %v2288 = vpop.f32.mrb[0].mxu0
      %2289 = vmatprep.mubr.f32.mxu0 0.0
      %2290 = vmatmul.mubr.f32.gmra.mrb[0].mxu0 %v2084
      %v2291 = vpop.f32.mrb[0].mxu0
      %v2292 = vadd.f32 0.0, %v2291
      %v2293 = vpop.f32.mrb[0].mxu0
      %2294 = vmatprep.mubr.f32.mxu0 0.0
      %2295 = vmatmul.mubr.f32.gmra.mrb[0].mxu0 %v2085
      %v2296 = vpop.f32.mrb[0].mxu0
      %v2297 = vadd.f32 0.0, %v2296
      %v2298 = vpop.f32.mrb[0].mxu0
      %2299 = vmatprep.mubr.f32.mxu0 0.0
      %2300 = vmatmul.mubr.f32.gmra.mrb[0].mxu0 %v2086
      %v2301 = vpop.f32.mrb[0].mxu0
      %v2302 = vadd.f32 0.0, %v2301
      %v2303 = vpop.f32.mrb[0].mxu0
      %2304 = vmatprep.mubr.f32.mxu0 0.0
      %2305 = vmatmul.mubr.f32.gmra.mrb[0].mxu0 %v2087
      %v2306 = vpop.f32.mrb[0].mxu0
      %v2307 = vadd.f32 0.0, %v2306
      %v2308 = vpop.f32.mrb[0].mxu0
      %2309 = vdwg.mxu0
      %v2310 = vadd.f32 %v2032, %v2172
      %v2311 = vadd.f32 %v2033, %v2177
      %v2312 = vadd.f32 %v2034, %v2182
      %v2313 = vadd.f32 %v2035, %v2187
      %v2314 = vadd.f32 %v2036, %v2192
      %v2315 = vadd.f32 %v2037, %v2197
      %v2316 = vadd.f32 %v2038, %v2202
      %v2317 = vadd.f32 %v2039, %v2207
      %v2318 = vadd.f32 %v2040, %v2212
      %v2319 = vadd.f32 %v2041, %v2217
      %v2320 = vadd.f32 %v2042, %v2222
      %v2321 = vadd.f32 %v2043, %v2227
      %v2322 = vadd.f32 %v2044, %v2232
      %v2323 = vadd.f32 %v2045, %v2237
      %v2324 = vadd.f32 %v2046, %v2242
      %v2325 = vadd.f32 %v2047, %v2247
      %v2326 = vadd.f32 %v2048, %v2252
      %v2327 = vadd.f32 %v2049, %v2257
      %v2328 = vadd.f32 %v2050, %v2262
      %v2329 = vadd.f32 %v2051, %v2267
      %v2330 = vadd.f32 %v2052, %v2272
      %v2331 = vadd.f32 %v2053, %v2277
      %v2332 = vadd.f32 %v2054, %v2282
      %v2333 = vadd.f32 %v2055, %v2287
      %v2334 = vadd.f32 %v2056, %v2292
      %v2335 = vadd.f32 %v2057, %v2297
      %v2336 = vadd.f32 %v2058, %v2302
      %v2337 = vadd.f32 %v2059, %v2307
      %v2338 = vld [vmem:[%s165 + $0x22] sm:$0xff]
      %v2339 = vld [vmem:[%s165 + $0x2a] sm:$0xff]
      %v2340 = vld [vmem:[%s165 + $0x32] sm:$0xff]
      %v2341 = vld [vmem:[%s165 + $0x3a] sm:$0xff]
      %v2342 = vld [vmem:[%s165 + $0x42] sm:$0xff]
      %v2343 = vld [vmem:[%s165 + $0x4a] sm:$0xff]
      %v2344 = vld [vmem:[%s165 + $0x52] sm:$0xff]
      %v2345 = vld [vmem:[%s165 + $0x5a] sm:$0xff]
      %v2346 = vld [vmem:[%s165 + $0x62] sm:$0xff]
      %v2347 = vld [vmem:[%s165 + $0x6a] sm:$0xff]
      %v2348 = vld [vmem:[%s165 + $0x72] sm:$0xff]
      %v2349 = vld [vmem:[%s165 + $0x7a] sm:$0xff]
      %v2350 = vld [vmem:[%s165 + $0x82] sm:$0xff]
      %v2351 = vld [vmem:[%s165 + $0x8a] sm:$0xff]
      %v2352 = vld [vmem:[%s165 + $0x92] sm:$0xff]
      %v2353 = vld [vmem:[%s165 + $0x9a] sm:$0xff]
      %v2354 = vld [vmem:[%s165 + $0xa2] sm:$0xff]
      %v2355 = vld [vmem:[%s165 + $0xaa] sm:$0xff]
      %v2356 = vld [vmem:[%s165 + $0xb2] sm:$0xff]
      %v2357 = vld [vmem:[%s165 + $0xba] sm:$0xff]
      %v2358 = vld [vmem:[%s165 + $0xc2] sm:$0xff]
      %v2359 = vld [vmem:[%s165 + $0xca] sm:$0xff]
      %v2360 = vld [vmem:[%s165 + $0xd2] sm:$0xff]
      %v2361 = vld [vmem:[%s165 + $0xda] sm:$0xff]
      %v2362 = vld [vmem:[%s165 + $0xe2] sm:$0xff]
      %v2363 = vld [vmem:[%s165 + $0xea] sm:$0xff]
      %v2364 = vld [vmem:[%s165 + $0xf2] sm:$0xff]
      %v2365 = vld [vmem:[%s165 + $0xfa] sm:$0xff]
      %s2366 = scalar_lea.vmem %s1, 1024
      %v2367 = vld [vmem:[%s2366] sm:$0xff]
      %v2368 = vld [vmem:[%s2366 + $0x8] sm:$0xff]
      %v2369 = vld [vmem:[%s2366 + $0x10] sm:$0xff]
      %v2370 = vld [vmem:[%s2366 + $0x18] sm:$0xff]
      %v2371 = vld [vmem:[%s2366 + $0x20] sm:$0xff]
      %v2372 = vld [vmem:[%s2366 + $0x28] sm:$0xff]
      %v2373 = vld [vmem:[%s2366 + $0x30] sm:$0xff]
      %v2374 = vld [vmem:[%s2366 + $0x38] sm:$0xff]
      %v2375 = vld [vmem:[%s2366 + $0x40] sm:$0xff]
      %v2376 = vld [vmem:[%s2366 + $0x48] sm:$0xff]
      %v2377 = vld [vmem:[%s2366 + $0x50] sm:$0xff]
      %v2378 = vld [vmem:[%s2366 + $0x58] sm:$0xff]
      %v2379 = vld [vmem:[%s2366 + $0x60] sm:$0xff]
      %v2380 = vld [vmem:[%s2366 + $0x68] sm:$0xff]
      %v2381 = vld [vmem:[%s2366 + $0x70] sm:$0xff]
      %v2382 = vld [vmem:[%s2366 + $0x78] sm:$0xff]
      %2383 = vmatprep.subr.mxu0 0.0
      %2384 = vmatpush1.msra.mxu0 %v2367
      %2385 = vmatprep.subr.mxu0 0.0
      %2386 = vmatpush1.msra.mxu0 %v2368
      %2387 = vmatprep.subr.mxu0 0.0
      %2388 = vmatpush1.msra.mxu0 %v2369
      %2389 = vmatprep.subr.mxu0 0.0
      %2390 = vmatpush1.msra.mxu0 %v2370
      %2391 = vmatprep.subr.mxu0 0.0
      %2392 = vmatpush1.msra.mxu0 %v2371
      %2393 = vmatprep.subr.mxu0 0.0
      %2394 = vmatpush1.msra.mxu0 %v2372
      %2395 = vmatprep.subr.mxu0 0.0
      %2396 = vmatpush1.msra.mxu0 %v2373
      %2397 = vmatprep.subr.mxu0 0.0
      %2398 = vmatpush1.msra.mxu0 %v2374
      %2399 = vmatprep.subr.mxu0 0.0
      %2400 = vmatpush1.msra.mxu0 %v2375
      %2401 = vmatprep.subr.mxu0 0.0
      %2402 = vmatpush1.msra.mxu0 %v2376
      %2403 = vmatprep.subr.mxu0 0.0
      %2404 = vmatpush1.msra.mxu0 %v2377
      %2405 = vmatprep.subr.mxu0 0.0
      %2406 = vmatpush1.msra.mxu0 %v2378
      %2407 = vmatprep.subr.mxu0 0.0
      %2408 = vmatpush1.msra.mxu0 %v2379
      %2409 = vmatprep.subr.mxu0 0.0
      %2410 = vmatpush1.msra.mxu0 %v2380
      %2411 = vmatprep.subr.mxu0 0.0
      %2412 = vmatpush1.msra.mxu0 %v2381
      %2413 = vmatprep.subr.mxu0 0.0
      %2414 = vmatpush1.msra.mxu0 %v2382
      %2415 = vmatprep.subr.mxu0 0.0
      %2416 = vmatpush1.msra.mxu0 0.0
      %2417 = vmatprep.subr.mxu0 0.0
      %2418 = vmatpush1.msra.mxu0 0.0
      %2419 = vmatprep.subr.mxu0 0.0
      %2420 = vmatpush1.msra.mxu0 0.0
      %2421 = vmatprep.subr.mxu0 0.0
      %2422 = vmatpush1.msra.mxu0 0.0
      %2423 = vmatprep.subr.mxu0 0.0
      %2424 = vmatpush1.msra.mxu0 0.0
      %2425 = vmatprep.subr.mxu0 0.0
      %2426 = vmatpush1.msra.mxu0 0.0
      %2427 = vmatprep.subr.mxu0 0.0
      %2428 = vmatpush1.msra.mxu0 0.0
      %2429 = vmatprep.subr.mxu0 0.0
      %2430 = vmatpush1.msra.mxu0 0.0
      %2431 = vmatprep.subr.mxu0 0.0
      %2432 = vmatpush1.msra.mxu0 0.0
      %2433 = vmatprep.subr.mxu0 0.0
      %2434 = vmatpush1.msra.mxu0 0.0
      %2435 = vmatprep.subr.mxu0 0.0
      %2436 = vmatpush1.msra.mxu0 0.0
      %2437 = vmatprep.subr.mxu0 0.0
      %2438 = vmatpush1.msra.mxu0 0.0
      %2439 = vmatprep.subr.mxu0 0.0
      %2440 = vmatpush1.msra.mxu0 0.0
      %2441 = vmatprep.subr.mxu0 0.0
      %2442 = vmatpush1.msra.mxu0 0.0
      %2443 = vmatprep.subr.mxu0 0.0
      %2444 = vmatpush1.msra.mxu0 0.0
      %2445 = vmatprep.subr.mxu0 0.0
      %2446 = vmatpush1.msra.mxu0 0.0
      %2447 = vmatprep.mubr.f32.mxu0 0.0
      %2448 = vmatmul.mubr.f32.gmra.mrb[0].mxu0 %v2338
      %v2449 = vpop.f32.mrb[0].mxu0
      %v2450 = vadd.f32 0.0, %v2449
      %v2451 = vpop.f32.mrb[0].mxu0
      %2452 = vmatprep.mubr.f32.mxu0 0.0
      %2453 = vmatmul.mubr.f32.gmra.mrb[0].mxu0 %v2339
      %v2454 = vpop.f32.mrb[0].mxu0
      %v2455 = vadd.f32 0.0, %v2454
      %v2456 = vpop.f32.mrb[0].mxu0
      %2457 = vmatprep.mubr.f32.mxu0 0.0
      %2458 = vmatmul.mubr.f32.gmra.mrb[0].mxu0 %v2340
      %v2459 = vpop.f32.mrb[0].mxu0
      %v2460 = vadd.f32 0.0, %v2459
      %v2461 = vpop.f32.mrb[0].mxu0
      %2462 = vmatprep.mubr.f32.mxu0 0.0
      %2463 = vmatmul.mubr.f32.gmra.mrb[0].mxu0 %v2341
      %v2464 = vpop.f32.mrb[0].mxu0
      %v2465 = vadd.f32 0.0, %v2464
      %v2466 = vpop.f32.mrb[0].mxu0
      %2467 = vmatprep.mubr.f32.mxu0 0.0
      %2468 = vmatmul.mubr.f32.gmra.mrb[0].mxu0 %v2342
      %v2469 = vpop.f32.mrb[0].mxu0
      %v2470 = vadd.f32 0.0, %v2469
      %v2471 = vpop.f32.mrb[0].mxu0
      %2472 = vmatprep.mubr.f32.mxu0 0.0
      %2473 = vmatmul.mubr.f32.gmra.mrb[0].mxu0 %v2343
      %v2474 = vpop.f32.mrb[0].mxu0
      %v2475 = vadd.f32 0.0, %v2474
      %v2476 = vpop.f32.mrb[0].mxu0
      %2477 = vmatprep.mubr.f32.mxu0 0.0
      %2478 = vmatmul.mubr.f32.gmra.mrb[0].mxu0 %v2344
      %v2479 = vpop.f32.mrb[0].mxu0
      %v2480 = vadd.f32 0.0, %v2479
      %v2481 = vpop.f32.mrb[0].mxu0
      %2482 = vmatprep.mubr.f32.mxu0 0.0
      %2483 = vmatmul.mubr.f32.gmra.mrb[0].mxu0 %v2345
      %v2484 = vpop.f32.mrb[0].mxu0
      %v2485 = vadd.f32 0.0, %v2484
      %v2486 = vpop.f32.mrb[0].mxu0
      %2487 = vmatprep.mubr.f32.mxu0 0.0
      %2488 = vmatmul.mubr.f32.gmra.mrb[0].mxu0 %v2346
      %v2489 = vpop.f32.mrb[0].mxu0
      %v2490 = vadd.f32 0.0, %v2489
      %v2491 = vpop.f32.mrb[0].mxu0
      %2492 = vmatprep.mubr.f32.mxu0 0.0
      %2493 = vmatmul.mubr.f32.gmra.mrb[0].mxu0 %v2347
      %v2494 = vpop.f32.mrb[0].mxu0
      %v2495 = vadd.f32 0.0, %v2494
      %v2496 = vpop.f32.mrb[0].mxu0
      %2497 = vmatprep.mubr.f32.mxu0 0.0
      %2498 = vmatmul.mubr.f32.gmra.mrb[0].mxu0 %v2348
      %v2499 = vpop.f32.mrb[0].mxu0
      %v2500 = vadd.f32 0.0, %v2499
      %v2501 = vpop.f32.mrb[0].mxu0
      %2502 = vmatprep.mubr.f32.mxu0 0.0
      %2503 = vmatmul.mubr.f32.gmra.mrb[0].mxu0 %v2349
      %v2504 = vpop.f32.mrb[0].mxu0
      %v2505 = vadd.f32 0.0, %v2504
      %v2506 = vpop.f32.mrb[0].mxu0
      %2507 = vmatprep.mubr.f32.mxu0 0.0
      %2508 = vmatmul.mubr.f32.gmra.mrb[0].mxu0 %v2350
      %v2509 = vpop.f32.mrb[0].mxu0
      %v2510 = vadd.f32 0.0, %v2509
      %v2511 = vpop.f32.mrb[0].mxu0
      %2512 = vmatprep.mubr.f32.mxu0 0.0
      %2513 = vmatmul.mubr.f32.gmra.mrb[0].mxu0 %v2351
      %v2514 = vpop.f32.mrb[0].mxu0
      %v2515 = vadd.f32 0.0, %v2514
      %v2516 = vpop.f32.mrb[0].mxu0
      %2517 = vmatprep.mubr.f32.mxu0 0.0
      %2518 = vmatmul.mubr.f32.gmra.mrb[0].mxu0 %v2352
      %v2519 = vpop.f32.mrb[0].mxu0
      %v2520 = vadd.f32 0.0, %v2519
      %v2521 = vpop.f32.mrb[0].mxu0
      %2522 = vmatprep.mubr.f32.mxu0 0.0
      %2523 = vmatmul.mubr.f32.gmra.mrb[0].mxu0 %v2353
      %v2524 = vpop.f32.mrb[0].mxu0
      %v2525 = vadd.f32 0.0, %v2524
      %v2526 = vpop.f32.mrb[0].mxu0
      %2527 = vmatprep.mubr.f32.mxu0 0.0
      %2528 = vmatmul.mubr.f32.gmra.mrb[0].mxu0 %v2354
      %v2529 = vpop.f32.mrb[0].mxu0
      %v2530 = vadd.f32 0.0, %v2529
      %v2531 = vpop.f32.mrb[0].mxu0
      %2532 = vmatprep.mubr.f32.mxu0 0.0
      %2533 = vmatmul.mubr.f32.gmra.mrb[0].mxu0 %v2355
      %v2534 = vpop.f32.mrb[0].mxu0
      %v2535 = vadd.f32 0.0, %v2534
      %v2536 = vpop.f32.mrb[0].mxu0
      %2537 = vmatprep.mubr.f32.mxu0 0.0
      %2538 = vmatmul.mubr.f32.gmra.mrb[0].mxu0 %v2356
      %v2539 = vpop.f32.mrb[0].mxu0
      %v2540 = vadd.f32 0.0, %v2539
      %v2541 = vpop.f32.mrb[0].mxu0
      %2542 = vmatprep.mubr.f32.mxu0 0.0
      %2543 = vmatmul.mubr.f32.gmra.mrb[0].mxu0 %v2357
      %v2544 = vpop.f32.mrb[0].mxu0
      %v2545 = vadd.f32 0.0, %v2544
      %v2546 = vpop.f32.mrb[0].mxu0
      %2547 = vmatprep.mubr.f32.mxu0 0.0
      %2548 = vmatmul.mubr.f32.gmra.mrb[0].mxu0 %v2358
      %v2549 = vpop.f32.mrb[0].mxu0
      %v2550 = vadd.f32 0.0, %v2549
      %v2551 = vpop.f32.mrb[0].mxu0
      %2552 = vmatprep.mubr.f32.mxu0 0.0
      %2553 = vmatmul.mubr.f32.gmra.mrb[0].mxu0 %v2359
      %v2554 = vpop.f32.mrb[0].mxu0
      %v2555 = vadd.f32 0.0, %v2554
      %v2556 = vpop.f32.mrb[0].mxu0
      %2557 = vmatprep.mubr.f32.mxu0 0.0
      %2558 = vmatmul.mubr.f32.gmra.mrb[0].mxu0 %v2360
      %v2559 = vpop.f32.mrb[0].mxu0
      %v2560 = vadd.f32 0.0, %v2559
      %v2561 = vpop.f32.mrb[0].mxu0
      %2562 = vmatprep.mubr.f32.mxu0 0.0
      %2563 = vmatmul.mubr.f32.gmra.mrb[0].mxu0 %v2361
      %v2564 = vpop.f32.mrb[0].mxu0
      %v2565 = vadd.f32 0.0, %v2564
      %v2566 = vpop.f32.mrb[0].mxu0
      %2567 = vmatprep.mubr.f32.mxu0 0.0
      %2568 = vmatmul.mubr.f32.gmra.mrb[0].mxu0 %v2362
      %v2569 = vpop.f32.mrb[0].mxu0
      %v2570 = vadd.f32 0.0, %v2569
      %v2571 = vpop.f32.mrb[0].mxu0
      %2572 = vmatprep.mubr.f32.mxu0 0.0
      %2573 = vmatmul.mubr.f32.gmra.mrb[0].mxu0 %v2363
      %v2574 = vpop.f32.mrb[0].mxu0
      %v2575 = vadd.f32 0.0, %v2574
      %v2576 = vpop.f32.mrb[0].mxu0
      %2577 = vmatprep.mubr.f32.mxu0 0.0
      %2578 = vmatmul.mubr.f32.gmra.mrb[0].mxu0 %v2364
      %v2579 = vpop.f32.mrb[0].mxu0
      %v2580 = vadd.f32 0.0, %v2579
      %v2581 = vpop.f32.mrb[0].mxu0
      %2582 = vmatprep.mubr.f32.mxu0 0.0
      %2583 = vmatmul.mubr.f32.gmra.mrb[0].mxu0 %v2365
      %v2584 = vpop.f32.mrb[0].mxu0
      %v2585 = vadd.f32 0.0, %v2584
      %v2586 = vpop.f32.mrb[0].mxu0
      %2587 = vdwg.mxu0
      %v2588 = vadd.f32 %v2310, %v2450
      %v2589 = vadd.f32 %v2311, %v2455
      %v2590 = vadd.f32 %v2312, %v2460
      %v2591 = vadd.f32 %v2313, %v2465
      %v2592 = vadd.f32 %v2314, %v2470
      %v2593 = vadd.f32 %v2315, %v2475
      %v2594 = vadd.f32 %v2316, %v2480
      %v2595 = vadd.f32 %v2317, %v2485
      %v2596 = vadd.f32 %v2318, %v2490
      %v2597 = vadd.f32 %v2319, %v2495
      %v2598 = vadd.f32 %v2320, %v2500
      %v2599 = vadd.f32 %v2321, %v2505
      %v2600 = vadd.f32 %v2322, %v2510
      %v2601 = vadd.f32 %v2323, %v2515
      %v2602 = vadd.f32 %v2324, %v2520
      %v2603 = vadd.f32 %v2325, %v2525
      %v2604 = vadd.f32 %v2326, %v2530
      %v2605 = vadd.f32 %v2327, %v2535
      %v2606 = vadd.f32 %v2328, %v2540
      %v2607 = vadd.f32 %v2329, %v2545
      %v2608 = vadd.f32 %v2330, %v2550
      %v2609 = vadd.f32 %v2331, %v2555
      %v2610 = vadd.f32 %v2332, %v2560
      %v2611 = vadd.f32 %v2333, %v2565
      %v2612 = vadd.f32 %v2334, %v2570
      %v2613 = vadd.f32 %v2335, %v2575
      %v2614 = vadd.f32 %v2336, %v2580
      %v2615 = vadd.f32 %v2337, %v2585
      %2616 = vrot.lane.b32.xlu0 %v2588, 32
      %v2617 = vpop.permute.xlu0 %2616
      %2618 = vrot.lane.b32.xlu0 %v2589, 32
      %v2619 = vpop.permute.xlu0 %2618
      %2620 = vrot.lane.b32.xlu0 %v2590, 32
      %v2621 = vpop.permute.xlu0 %2620
      %2622 = vrot.lane.b32.xlu0 %v2591, 32
      %v2623 = vpop.permute.xlu0 %2622
      %2624 = vrot.lane.b32.xlu0 %v2592, 32
      %v2625 = vpop.permute.xlu0 %2624
      %2626 = vrot.lane.b32.xlu0 %v2593, 32
      %v2627 = vpop.permute.xlu0 %2626
      %2628 = vrot.lane.b32.xlu0 %v2594, 32
      %v2629 = vpop.permute.xlu0 %2628
      %2630 = vrot.lane.b32.xlu0 %v2595, 32
      %v2631 = vpop.permute.xlu0 %2630
      %2632 = vrot.lane.b32.xlu0 %v2596, 32
      %v2633 = vpop.permute.xlu0 %2632
      %2634 = vrot.lane.b32.xlu0 %v2597, 32
      %v2635 = vpop.permute.xlu0 %2634
      %2636 = vrot.lane.b32.xlu0 %v2598, 32
      %v2637 = vpop.permute.xlu0 %2636
      %2638 = vrot.lane.b32.xlu0 %v2599, 32
      %v2639 = vpop.permute.xlu0 %2638
      %2640 = vrot.lane.b32.xlu0 %v2600, 32
      %v2641 = vpop.permute.xlu0 %2640
      %2642 = vrot.lane.b32.xlu0 %v2601, 32
      %v2643 = vpop.permute.xlu0 %2642
      %2644 = vrot.lane.b32.xlu0 %v2602, 32
      %v2645 = vpop.permute.xlu0 %2644
      %2646 = vrot.lane.b32.xlu0 %v2603, 32
      %v2647 = vpop.permute.xlu0 %2646
      %2648 = vrot.lane.b32.xlu0 %v2604, 32
      %v2649 = vpop.permute.xlu0 %2648
      %2650 = vrot.lane.b32.xlu0 %v2605, 32
      %v2651 = vpop.permute.xlu0 %2650
      %2652 = vrot.lane.b32.xlu0 %v2606, 32
      %v2653 = vpop.permute.xlu0 %2652
      %2654 = vrot.lane.b32.xlu0 %v2607, 32
      %v2655 = vpop.permute.xlu0 %2654
      %2656 = vrot.lane.b32.xlu0 %v2608, 32
      %v2657 = vpop.permute.xlu0 %2656
      %2658 = vrot.lane.b32.xlu0 %v2609, 32
      %v2659 = vpop.permute.xlu0 %2658
      %2660 = vrot.lane.b32.xlu0 %v2610, 32
      %v2661 = vpop.permute.xlu0 %2660
      %2662 = vrot.lane.b32.xlu0 %v2611, 32
      %v2663 = vpop.permute.xlu0 %2662
      %2664 = vrot.lane.b32.xlu0 %v2612, 32
      %v2665 = vpop.permute.xlu0 %2664
      %2666 = vrot.lane.b32.xlu0 %v2613, 32
      %v2667 = vpop.permute.xlu0 %2666
      %2668 = vrot.lane.b32.xlu0 %v2614, 32
      %v2669 = vpop.permute.xlu0 %2668
      %2670 = vrot.lane.b32.xlu0 %v2615, 32
      %v2671 = vpop.permute.xlu0 %2670
      %v2672 = vmax.f32 %v2588, %v2617
      %v2673 = vmax.f32 %v2589, %v2619
      %v2674 = vmax.f32 %v2590, %v2621
      %v2675 = vmax.f32 %v2591, %v2623
      %v2676 = vmax.f32 %v2592, %v2625
      %v2677 = vmax.f32 %v2593, %v2627
      %v2678 = vmax.f32 %v2594, %v2629
      %v2679 = vmax.f32 %v2595, %v2631
      %v2680 = vmax.f32 %v2596, %v2633
      %v2681 = vmax.f32 %v2597, %v2635
      %v2682 = vmax.f32 %v2598, %v2637
      %v2683 = vmax.f32 %v2599, %v2639
      %v2684 = vmax.f32 %v2600, %v2641
      %v2685 = vmax.f32 %v2601, %v2643
      %v2686 = vmax.f32 %v2602, %v2645
      %v2687 = vmax.f32 %v2603, %v2647
      %v2688 = vmax.f32 %v2604, %v2649
      %v2689 = vmax.f32 %v2605, %v2651
      %v2690 = vmax.f32 %v2606, %v2653
      %v2691 = vmax.f32 %v2607, %v2655
      %v2692 = vmax.f32 %v2608, %v2657
      %v2693 = vmax.f32 %v2609, %v2659
      %v2694 = vmax.f32 %v2610, %v2661
      %v2695 = vmax.f32 %v2611, %v2663
      %v2696 = vmax.f32 %v2612, %v2665
      %v2697 = vmax.f32 %v2613, %v2667
      %v2698 = vmax.f32 %v2614, %v2669
      %v2699 = vmax.f32 %v2615, %v2671
      %2700 = vrot.lane.b32.xlu0 %v2672, 64
      %v2701 = vpop.permute.xlu0 %2700
      %2702 = vrot.lane.b32.xlu0 %v2673, 64
      %v2703 = vpop.permute.xlu0 %2702
      %2704 = vrot.lane.b32.xlu0 %v2674, 64
      %v2705 = vpop.permute.xlu0 %2704
      %2706 = vrot.lane.b32.xlu0 %v2675, 64
      %v2707 = vpop.permute.xlu0 %2706
      %2708 = vrot.lane.b32.xlu0 %v2676, 64
      %v2709 = vpop.permute.xlu0 %2708
      %2710 = vrot.lane.b32.xlu0 %v2677, 64
      %v2711 = vpop.permute.xlu0 %2710
      %2712 = vrot.lane.b32.xlu0 %v2678, 64
      %v2713 = vpop.permute.xlu0 %2712
      %2714 = vrot.lane.b32.xlu0 %v2679, 64
      %v2715 = vpop.permute.xlu0 %2714
      %2716 = vrot.lane.b32.xlu0 %v2680, 64
      %v2717 = vpop.permute.xlu0 %2716
      %2718 = vrot.lane.b32.xlu0 %v2681, 64
      %v2719 = vpop.permute.xlu0 %2718
      %2720 = vrot.lane.b32.xlu0 %v2682, 64
      %v2721 = vpop.permute.xlu0 %2720
      %2722 = vrot.lane.b32.xlu0 %v2683, 64
      %v2723 = vpop.permute.xlu0 %2722
      %2724 = vrot.lane.b32.xlu0 %v2684, 64
      %v2725 = vpop.permute.xlu0 %2724
      %2726 = vrot.lane.b32.xlu0 %v2685, 64
      %v2727 = vpop.permute.xlu0 %2726
      %2728 = vrot.lane.b32.xlu0 %v2686, 64
      %v2729 = vpop.permute.xlu0 %2728
      %2730 = vrot.lane.b32.xlu0 %v2687, 64
      %v2731 = vpop.permute.xlu0 %2730
      %2732 = vrot.lane.b32.xlu0 %v2688, 64
      %v2733 = vpop.permute.xlu0 %2732
      %2734 = vrot.lane.b32.xlu0 %v2689, 64
      %v2735 = vpop.permute.xlu0 %2734
      %2736 = vrot.lane.b32.xlu0 %v2690, 64
      %v2737 = vpop.permute.xlu0 %2736
      %2738 = vrot.lane.b32.xlu0 %v2691, 64
      %v2739 = vpop.permute.xlu0 %2738
      %2740 = vrot.lane.b32.xlu0 %v2692, 64
      %v2741 = vpop.permute.xlu0 %2740
      %2742 = vrot.lane.b32.xlu0 %v2693, 64
      %v2743 = vpop.permute.xlu0 %2742
      %2744 = vrot.lane.b32.xlu0 %v2694, 64
      %v2745 = vpop.permute.xlu0 %2744
      %2746 = vrot.lane.b32.xlu0 %v2695, 64
      %v2747 = vpop.permute.xlu0 %2746
      %2748 = vrot.lane.b32.xlu0 %v2696, 64
      %v2749 = vpop.permute.xlu0 %2748
      %2750 = vrot.lane.b32.xlu0 %v2697, 64
      %v2751 = vpop.permute.xlu0 %2750
      %2752 = vrot.lane.b32.xlu0 %v2698, 64
      %v2753 = vpop.permute.xlu0 %2752
      %2754 = vrot.lane.b32.xlu0 %v2699, 64
      %v2755 = vpop.permute.xlu0 %2754
      %v2756 = vmax.f32 %v2672, %v2701
      %v2757 = vmax.f32 %v2673, %v2703
      %v2758 = vmax.f32 %v2674, %v2705
      %v2759 = vmax.f32 %v2675, %v2707
      %v2760 = vmax.f32 %v2676, %v2709
      %v2761 = vmax.f32 %v2677, %v2711
      %v2762 = vmax.f32 %v2678, %v2713
      %v2763 = vmax.f32 %v2679, %v2715
      %v2764 = vmax.f32 %v2680, %v2717
      %v2765 = vmax.f32 %v2681, %v2719
      %v2766 = vmax.f32 %v2682, %v2721
      %v2767 = vmax.f32 %v2683, %v2723
      %v2768 = vmax.f32 %v2684, %v2725
      %v2769 = vmax.f32 %v2685, %v2727
      %v2770 = vmax.f32 %v2686, %v2729
      %v2771 = vmax.f32 %v2687, %v2731
      %v2772 = vmax.f32 %v2688, %v2733
      %v2773 = vmax.f32 %v2689, %v2735
      %v2774 = vmax.f32 %v2690, %v2737
      %v2775 = vmax.f32 %v2691, %v2739
      %v2776 = vmax.f32 %v2692, %v2741
      %v2777 = vmax.f32 %v2693, %v2743
      %v2778 = vmax.f32 %v2694, %v2745
      %v2779 = vmax.f32 %v2695, %v2747
      %v2780 = vmax.f32 %v2696, %v2749
      %v2781 = vmax.f32 %v2697, %v2751
      %v2782 = vmax.f32 %v2698, %v2753
      %v2783 = vmax.f32 %v2699, %v2755
      %v2784 = vld [vmem:[%s2] sm:$0x1]
      %v2786 = vlaneseq
      %v2787 = vshrl.u32 %v2786, 7
      %v2788 = vsub.s32 0, %v2787
      %v2789 = vrot.slane %v2784, %v2788
      %v2791 = vadd.f32 %v2756, %v2789
      %v2792 = vadd.f32 %v2757, %v2789
      %v2793 = vadd.f32 %v2758, %v2789
      %v2794 = vadd.f32 %v2759, %v2789
      %v2795 = vadd.f32 %v2760, %v2789
      %v2796 = vadd.f32 %v2761, %v2789
      %v2797 = vadd.f32 %v2762, %v2789
      %v2798 = vadd.f32 %v2763, %v2789
      %v2799 = vadd.f32 %v2764, %v2789
      %v2800 = vadd.f32 %v2765, %v2789
      %v2801 = vadd.f32 %v2766, %v2789
      %v2802 = vadd.f32 %v2767, %v2789
      %v2803 = vadd.f32 %v2768, %v2789
      %v2804 = vadd.f32 %v2769, %v2789
      %v2805 = vadd.f32 %v2770, %v2789
      %v2806 = vadd.f32 %v2771, %v2789
      %v2807 = vadd.f32 %v2772, %v2789
      %v2808 = vadd.f32 %v2773, %v2789
      %v2809 = vadd.f32 %v2774, %v2789
      %v2810 = vadd.f32 %v2775, %v2789
      %v2811 = vadd.f32 %v2776, %v2789
      %v2812 = vadd.f32 %v2777, %v2789
      %v2813 = vadd.f32 %v2778, %v2789
      %v2814 = vadd.f32 %v2779, %v2789
      %v2815 = vadd.f32 %v2780, %v2789
      %v2816 = vadd.f32 %v2781, %v2789
      %v2817 = vadd.f32 %v2782, %v2789
      %v2818 = vadd.f32 %v2783, %v2789
      %v2819 = vmax.f32 %v2791, 0.0
      %v2820 = vmax.f32 %v2792, 0.0
      %v2821 = vmax.f32 %v2793, 0.0
      %v2822 = vmax.f32 %v2794, 0.0
      %v2823 = vmax.f32 %v2795, 0.0
      %v2824 = vmax.f32 %v2796, 0.0
      %v2825 = vmax.f32 %v2797, 0.0
      %v2826 = vmax.f32 %v2798, 0.0
      %v2827 = vmax.f32 %v2799, 0.0
      %v2828 = vmax.f32 %v2800, 0.0
      %v2829 = vmax.f32 %v2801, 0.0
      %v2830 = vmax.f32 %v2802, 0.0
      %v2831 = vmax.f32 %v2803, 0.0
      %v2832 = vmax.f32 %v2804, 0.0
      %v2833 = vmax.f32 %v2805, 0.0
      %v2834 = vmax.f32 %v2806, 0.0
      %v2835 = vmax.f32 %v2807, 0.0
      %v2836 = vmax.f32 %v2808, 0.0
      %v2837 = vmax.f32 %v2809, 0.0
      %v2838 = vmax.f32 %v2810, 0.0
      %v2839 = vmax.f32 %v2811, 0.0
      %v2840 = vmax.f32 %v2812, 0.0
      %v2841 = vmax.f32 %v2813, 0.0
      %v2842 = vmax.f32 %v2814, 0.0
      %v2843 = vmax.f32 %v2815, 0.0
      %v2844 = vmax.f32 %v2816, 0.0
      %v2845 = vmax.f32 %v2817, 0.0
      %v2846 = vmax.f32 %v2818, 0.0
      %2847 = vst [vmem:[%s170] sm:$0xff] %v2819
      %2848 = vst [vmem:[%s170 + $0x8] sm:$0xff] %v2820
      %2849 = vst [vmem:[%s170 + $0x10] sm:$0xff] %v2821
      %2850 = vst [vmem:[%s170 + $0x18] sm:$0xff] %v2822
      %2851 = vst [vmem:[%s170 + $0x20] sm:$0xff] %v2823
      %2852 = vst [vmem:[%s170 + $0x28] sm:$0xff] %v2824
      %2853 = vst [vmem:[%s170 + $0x30] sm:$0xff] %v2825
      %2854 = vst [vmem:[%s170 + $0x38] sm:$0xff] %v2826
      %2855 = vst [vmem:[%s170 + $0x40] sm:$0xff] %v2827
      %2856 = vst [vmem:[%s170 + $0x48] sm:$0xff] %v2828
      %2857 = vst [vmem:[%s170 + $0x50] sm:$0xff] %v2829
      %2858 = vst [vmem:[%s170 + $0x58] sm:$0xff] %v2830
      %2859 = vst [vmem:[%s170 + $0x60] sm:$0xff] %v2831
      %2860 = vst [vmem:[%s170 + $0x68] sm:$0xff] %v2832
      %2861 = vst [vmem:[%s170 + $0x70] sm:$0xff] %v2833
      %2862 = vst [vmem:[%s170 + $0x78] sm:$0xff] %v2834
      %2863 = vst [vmem:[%s170 + $0x80] sm:$0xff] %v2835
      %2864 = vst [vmem:[%s170 + $0x88] sm:$0xff] %v2836
      %2865 = vst [vmem:[%s170 + $0x90] sm:$0xff] %v2837
      %2866 = vst [vmem:[%s170 + $0x98] sm:$0xff] %v2838
      %2867 = vst [vmem:[%s170 + $0xa0] sm:$0xff] %v2839
      %2868 = vst [vmem:[%s170 + $0xa8] sm:$0xff] %v2840
      %2869 = vst [vmem:[%s170 + $0xb0] sm:$0xff] %v2841
      %2870 = vst [vmem:[%s170 + $0xb8] sm:$0xff] %v2842
      %2871 = vst [vmem:[%s170 + $0xc0] sm:$0xff] %v2843
      %2872 = vst [vmem:[%s170 + $0xc8] sm:$0xff] %v2844
      %2873 = vst [vmem:[%s170 + $0xd0] sm:$0xff] %v2845
      %2874 = vst [vmem:[%s170 + $0xd8] sm:$0xff] %v2846
      %p2875 = scmp.lt.s32.totalorder %s14, 1
      %s2876 = scalar_select %p2875, %s14, 1
      %s2877 = smul.addr %s2876, 28
      %s2878 = smul.addr %s2877, 8
      %s2879 = scalar_lea.vmem %s3, %s2878
      // Predicated region
      $region33: #{cnn_web_forward.3} parent=31 // pred_check
        %p2880 = pneg %p100
      $region34: #{cnn_web_forward.3} parent=31 // pred_check_branch
        %2882 = sbr.rel (%p2880) target = $region36
      $region35: #{cnn_web_forward.3} parent=31 // pred_region
        _
      $region36: #{cnn_web_forward.3} parent=31 // pred_fallthru
        _
    $region32: #{cnn_web_forward.3} parent=5 // pred_fallthru
      _
    %p2883 = scmp.le.s32.totalorder 2, %s9
    // Predicated region
    $region37: #{cnn_web_forward.3} parent=5 // pred_check
      %p2884 = pneg %p2883
    $region38: #{cnn_web_forward.3} parent=5 // pred_check_branch
      %2886 = sbr.rel (%p2884) target = $region40
    $region39: #{cnn_web_forward.3} parent=5 // pred_region
      %s2887 = ssub.s32 %s9, 2
      // Predicated region
      $region41: #{cnn_web_forward.3} parent=39 // pred_check
        %p2888 = pneg %p106
      $region42: #{cnn_web_forward.3} parent=39 // pred_check_branch
        %2890 = sbr.rel (%p2888) target = $region44
      $region43: #{cnn_web_forward.3} parent=39 // pred_region
        %p2891 = scmp.lt.s32.totalorder %s15, 1
        %s2892 = scalar_select %p2891, %s15, 1
        %s2893 = smul.addr %s2892, 28
        %s2894 = smul.addr %s2893, 8
        %s2895 = scalar_lea.vmem %s3, %s2894
      $region44: #{cnn_web_forward.3} parent=39 // pred_fallthru
        _
    $region40: #{cnn_web_forward.3} parent=5 // pred_fallthru
      _
  $region6: #{cnn_web_forward.3} parent=0 // loop_footer
    %s13 = sadd.s32 1, %s9
  $region7: #{cnn_web_forward.3} parent=0 // loop_footer_branch
    %8 = sbr.rel target = $region3
  $region8: #{cnn_web_forward.3} parent=0 // loop_exit
    _

// kernel: cnn_web_forward.5
$region0: #{cnn_web_forward.5}
  #allocation0 [shape = 'u32[]', space=smem, size = 0x4, offset = 0x4, fixed_abs, tag = 'smem constant byte address 0x4 - core index']
  #allocation1 [shape = 'u32[144,128]{1,0:T(1,128)}', space=vmem, size = 0x12000, scoped, tag = 'internal scratch']
  %s0 = inlined_call_operand.vmem [shape: f32[8,400], index: 0, kind: input, shape index: {}]
  %s1 = inlined_call_operand.vmem [shape: f32[400,128], index: 1, kind: input, shape index: {}]
  %s2 = inlined_call_operand.vmem [shape: f32[1,128], index: 2, kind: input, shape index: {}]
  %s3 = inlined_call_operand.vmem [shape: f32[128,128], index: 3, kind: input, shape index: {}]
  %s4 = inlined_call_operand.vmem [shape: f32[1,128], index: 4, kind: input, shape index: {}]
  %s5 = inlined_call_operand.vmem [shape: f32[128,128], index: 5, kind: input, shape index: {}]
  %s6 = inlined_call_operand.vmem [shape: f32[1,128], index: 6, kind: input, shape index: {}]
  %s7 = inlined_call_operand.vmem [shape: f32[8,128], index: 7, kind: output, shape index: {}]
  %s8 = sld [smem:[#allocation0]]
  $region38: #{cnn_web_forward.5} parent=0
    _
  %s10 = ssub.s32 1, %s8
  %s11 = scalar_select 0, %s10, %s8
  // Predicated region
  $region2: #{cnn_web_forward.5} parent=0 // pred_check
    _
  $region3: #{cnn_web_forward.5} parent=0 // pred_check_branch
    %13 = sbr.rel (0) target = $region5
  $region4: #{cnn_web_forward.5} parent=0 // pred_region
    _
  $region5: #{cnn_web_forward.5} parent=0 // pred_fallthru
    _
  // Predicated region
  $region6: #{cnn_web_forward.5} parent=0 // pred_check
    _
  $region7: #{cnn_web_forward.5} parent=0 // pred_check_branch
    %15 = sbr.rel (0) target = $region9
  $region8: #{cnn_web_forward.5} parent=0 // pred_region
    _
  $region9: #{cnn_web_forward.5} parent=0 // pred_fallthru
    _
  // Predicated region
  $region10: #{cnn_web_forward.5} parent=0 // pred_check
    _
  $region11: #{cnn_web_forward.5} parent=0 // pred_check_branch
    %17 = sbr.rel (0) target = $region13
  $region12: #{cnn_web_forward.5} parent=0 // pred_region
    _
  $region13: #{cnn_web_forward.5} parent=0 // pred_fallthru
    _
  // Predicated region
  $region14: #{cnn_web_forward.5} parent=0 // pred_check
    _
  $region15: #{cnn_web_forward.5} parent=0 // pred_check_branch
    %19 = sbr.rel (0) target = $region17
  $region16: #{cnn_web_forward.5} parent=0 // pred_region
    _
  $region17: #{cnn_web_forward.5} parent=0 // pred_fallthru
    _
  // Predicated region
  $region18: #{cnn_web_forward.5} parent=0 // pred_check
    _
  $region19: #{cnn_web_forward.5} parent=0 // pred_check_branch
    %21 = sbr.rel (0) target = $region21
  $region20: #{cnn_web_forward.5} parent=0 // pred_region
    _
  $region21: #{cnn_web_forward.5} parent=0 // pred_fallthru
    _
  // Predicated region
  $region22: #{cnn_web_forward.5} parent=0 // pred_check
    _
  $region23: #{cnn_web_forward.5} parent=0 // pred_check_branch
    %23 = sbr.rel (0) target = $region25
  $region24: #{cnn_web_forward.5} parent=0 // pred_region
    _
  $region25: #{cnn_web_forward.5} parent=0 // pred_fallthru
    _
  // Predicated region
  $region26: #{cnn_web_forward.5} parent=0 // pred_check
    _
  $region27: #{cnn_web_forward.5} parent=0 // pred_check_branch
    %25 = sbr.rel (0) target = $region29
  $region28: #{cnn_web_forward.5} parent=0 // pred_region
    _
  $region29: #{cnn_web_forward.5} parent=0 // pred_fallthru
    _
  %v26 = vld [vmem:[%s0] sm:$0xff]
  %v27 = vld [vmem:[%s0 + $0x8] sm:$0xff]
  %v28 = vld [vmem:[%s0 + $0x10] sm:$0xff]
  %v29 = vld [vmem:[%s0 + $0x18] sm:$0xff]
  %v30 = vld [vmem:[%s1] sm:$0xff]
  %v31 = vld [vmem:[%s1 + $0x8] sm:$0xff]
  %v32 = vld [vmem:[%s1 + $0x10] sm:$0xff]
  %v33 = vld [vmem:[%s1 + $0x18] sm:$0xff]
  %v34 = vld [vmem:[%s1 + $0x20] sm:$0xff]
  %v35 = vld [vmem:[%s1 + $0x28] sm:$0xff]
  %v36 = vld [vmem:[%s1 + $0x30] sm:$0xff]
  %v37 = vld [vmem:[%s1 + $0x38] sm:$0xff]
  %v38 = vld [vmem:[%s1 + $0x40] sm:$0xff]
  %v39 = vld [vmem:[%s1 + $0x48] sm:$0xff]
  %v40 = vld [vmem:[%s1 + $0x50] sm:$0xff]
  %v41 = vld [vmem:[%s1 + $0x58] sm:$0xff]
  %v42 = vld [vmem:[%s1 + $0x60] sm:$0xff]
  %v43 = vld [vmem:[%s1 + $0x68] sm:$0xff]
  %v44 = vld [vmem:[%s1 + $0x70] sm:$0xff]
  %v45 = vld [vmem:[%s1 + $0x78] sm:$0xff]
  %v46 = vld [vmem:[%s1 + $0x80] sm:$0xff]
  %v47 = vld [vmem:[%s1 + $0x88] sm:$0xff]
  %v48 = vld [vmem:[%s1 + $0x90] sm:$0xff]
  %v49 = vld [vmem:[%s1 + $0x98] sm:$0xff]
  %v50 = vld [vmem:[%s1 + $0xa0] sm:$0xff]
  %v51 = vld [vmem:[%s1 + $0xa8] sm:$0xff]
  %v52 = vld [vmem:[%s1 + $0xb0] sm:$0xff]
  %v53 = vld [vmem:[%s1 + $0xb8] sm:$0xff]
  %v54 = vld [vmem:[%s1 + $0xc0] sm:$0xff]
  %v55 = vld [vmem:[%s1 + $0xc8] sm:$0xff]
  %v56 = vld [vmem:[%s1 + $0xd0] sm:$0xff]
  %v57 = vld [vmem:[%s1 + $0xd8] sm:$0xff]
  %v58 = vld [vmem:[%s1 + $0xe0] sm:$0xff]
  %v59 = vld [vmem:[%s1 + $0xe8] sm:$0xff]
  %v60 = vld [vmem:[%s1 + $0xf0] sm:$0xff]
  %v61 = vld [vmem:[%s1 + $0xf8] sm:$0xff]
  %v62 = vld [vmem:[%s1 + $0x100] sm:$0xff]
  %v63 = vld [vmem:[%s1 + $0x108] sm:$0xff]
  %v64 = vld [vmem:[%s1 + $0x110] sm:$0xff]
  %v65 = vld [vmem:[%s1 + $0x118] sm:$0xff]
  %v66 = vld [vmem:[%s1 + $0x120] sm:$0xff]
  %v67 = vld [vmem:[%s1 + $0x128] sm:$0xff]
  %v68 = vld [vmem:[%s1 + $0x130] sm:$0xff]
  %v69 = vld [vmem:[%s1 + $0x138] sm:$0xff]
  %v70 = vld [vmem:[%s1 + $0x140] sm:$0xff]
  %v71 = vld [vmem:[%s1 + $0x148] sm:$0xff]
  %v72 = vld [vmem:[%s1 + $0x150] sm:$0xff]
  %v73 = vld [vmem:[%s1 + $0x158] sm:$0xff]
  %v74 = vld [vmem:[%s1 + $0x160] sm:$0xff]
  %v75 = vld [vmem:[%s1 + $0x168] sm:$0xff]
  %v76 = vld [vmem:[%s1 + $0x170] sm:$0xff]
  %v77 = vld [vmem:[%s1 + $0x178] sm:$0xff]
  %v78 = vld [vmem:[%s1 + $0x180] sm:$0xff]
  %v79 = vld [vmem:[%s1 + $0x188] sm:$0xff]
  %v80 = vld [vmem:[%s2] sm:$0x1]
  %v82 = vlaneseq
  %v83 = vshrl.u32 %v82, 7
  %v84 = vsub.s32 0, %v83
  %v85 = vrot.slane %v80, %v84
  %vm87 = vcmask 130048
  %v89 = vsel %vm87, %v29, 0
  %91 = vmatprep.subr.mxu0 0.0
  %92 = vmatpush1.msra.mxu0 %v30
  %93 = vmatprep.subr.mxu0 0.0
  %94 = vmatpush1.msra.mxu0 %v31
  %95 = vmatprep.subr.mxu0 0.0
  %96 = vmatpush1.msra.mxu0 %v32
  %97 = vmatprep.subr.mxu0 0.0
  %98 = vmatpush1.msra.mxu0 %v33
  %99 = vmatprep.subr.mxu0 0.0
  %100 = vmatpush1.msra.mxu0 %v34
  %101 = vmatprep.subr.mxu0 0.0
  %102 = vmatpush1.msra.mxu0 %v35
  %103 = vmatprep.subr.mxu0 0.0
  %104 = vmatpush1.msra.mxu0 %v36
  %105 = vmatprep.subr.mxu0 0.0
  %106 = vmatpush1.msra.mxu0 %v37
  %107 = vmatprep.subr.mxu0 0.0
  %108 = vmatpush1.msra.mxu0 %v38
  %109 = vmatprep.subr.mxu0 0.0
  %110 = vmatpush1.msra.mxu0 %v39
  %111 = vmatprep.subr.mxu0 0.0
  %112 = vmatpush1.msra.mxu0 %v40
  %113 = vmatprep.subr.mxu0 0.0
  %114 = vmatpush1.msra.mxu0 %v41
  %115 = vmatprep.subr.mxu0 0.0
  %116 = vmatpush1.msra.mxu0 %v42
  %117 = vmatprep.subr.mxu0 0.0
  %118 = vmatpush1.msra.mxu0 %v43
  %119 = vmatprep.subr.mxu0 0.0
  %120 = vmatpush1.msra.mxu0 %v44
  %121 = vmatprep.subr.mxu0 0.0
  %122 = vmatpush1.msra.mxu0 %v45
  %123 = vmatprep.subr.mxu0 0.0
  %124 = vmatpush1.msra.mxu0 %v46
  %125 = vmatprep.subr.mxu0 0.0
  %126 = vmatpush1.msra.mxu0 %v47
  %127 = vmatprep.subr.mxu0 0.0
  %128 = vmatpush1.msra.mxu0 %v48
  %129 = vmatprep.subr.mxu0 0.0
  %130 = vmatpush1.msra.mxu0 %v49
  %131 = vmatprep.subr.mxu0 0.0
  %132 = vmatpush1.msra.mxu0 %v50
  %133 = vmatprep.subr.mxu0 0.0
  %134 = vmatpush1.msra.mxu0 %v51
  %135 = vmatprep.subr.mxu0 0.0
  %136 = vmatpush1.msra.mxu0 %v52
  %137 = vmatprep.subr.mxu0 0.0
  %138 = vmatpush1.msra.mxu0 %v53
  %139 = vmatprep.subr.mxu0 0.0
  %140 = vmatpush1.msra.mxu0 %v54
  %141 = vmatprep.subr.mxu0 0.0
  %142 = vmatpush1.msra.mxu0 %v55
  %143 = vmatprep.subr.mxu0 0.0
  %144 = vmatpush1.msra.mxu0 %v56
  %145 = vmatprep.subr.mxu0 0.0
  %146 = vmatpush1.msra.mxu0 %v57
  %147 = vmatprep.subr.mxu0 0.0
  %148 = vmatpush1.msra.mxu0 %v58
  %149 = vmatprep.subr.mxu0 0.0
  %150 = vmatpush1.msra.mxu0 %v59
  %151 = vmatprep.subr.mxu0 0.0
  %152 = vmatpush1.msra.mxu0 %v60
  %153 = vmatprep.subr.mxu0 0.0
  %154 = vmatpush1.msra.mxu0 %v61
  %155 = vmatprep.mubr.f32.mxu0 %v27
  %156 = vmatmul.mubr.f32.gmra.mrb[0].mxu0 %v26
  %v157 = vpop.f32.mrb[0].mxu0
  %v158 = vadd.f32 %v85, %v157
  %v159 = vpop.f32.mrb[0].mxu0
  %160 = vdwg.mxu0
  %161 = vmatprep.subr.mxu0 0.0
  %162 = vmatpush1.msra.mxu0 %v62
  %163 = vmatprep.subr.mxu0 0.0
  %164 = vmatpush1.msra.mxu0 %v63
  %165 = vmatprep.subr.mxu0 0.0
  %166 = vmatpush1.msra.mxu0 %v64
  %167 = vmatprep.subr.mxu0 0.0
  %168 = vmatpush1.msra.mxu0 %v65
  %169 = vmatprep.subr.mxu0 0.0
  %170 = vmatpush1.msra.mxu0 %v66
  %171 = vmatprep.subr.mxu0 0.0
  %172 = vmatpush1.msra.mxu0 %v67
  %173 = vmatprep.subr.mxu0 0.0
  %174 = vmatpush1.msra.mxu0 %v68
  %175 = vmatprep.subr.mxu0 0.0
  %176 = vmatpush1.msra.mxu0 %v69
  %177 = vmatprep.subr.mxu0 0.0
  %178 = vmatpush1.msra.mxu0 %v70
  %179 = vmatprep.subr.mxu0 0.0
  %180 = vmatpush1.msra.mxu0 %v71
  %181 = vmatprep.subr.mxu0 0.0
  %182 = vmatpush1.msra.mxu0 %v72
  %183 = vmatprep.subr.mxu0 0.0
  %184 = vmatpush1.msra.mxu0 %v73
  %185 = vmatprep.subr.mxu0 0.0
  %186 = vmatpush1.msra.mxu0 %v74
  %187 = vmatprep.subr.mxu0 0.0
  %188 = vmatpush1.msra.mxu0 %v75
  %189 = vmatprep.subr.mxu0 0.0
  %190 = vmatpush1.msra.mxu0 %v76
  %191 = vmatprep.subr.mxu0 0.0
  %192 = vmatpush1.msra.mxu0 %v77
  %193 = vmatprep.subr.mxu0 0.0
  %194 = vmatpush1.msra.mxu0 %v78
  %195 = vmatprep.subr.mxu0 0.0
  %196 = vmatpush1.msra.mxu0 %v79
  %197 = vmatprep.subr.mxu0 0.0
  %198 = vmatpush1.msra.mxu0 0.0
  %199 = vmatprep.subr.mxu0 0.0
  %200 = vmatpush1.msra.mxu0 0.0
  %201 = vmatprep.subr.mxu0 0.0
  %202 = vmatpush1.msra.mxu0 0.0
  %203 = vmatprep.subr.mxu0 0.0
  %204 = vmatpush1.msra.mxu0 0.0
  %205 = vmatprep.subr.mxu0 0.0
  %206 = vmatpush1.msra.mxu0 0.0
  %207 = vmatprep.subr.mxu0 0.0
  %208 = vmatpush1.msra.mxu0 0.0
  %209 = vmatprep.subr.mxu0 0.0
  %210 = vmatpush1.msra.mxu0 0.0
  %211 = vmatprep.subr.mxu0 0.0
  %212 = vmatpush1.msra.mxu0 0.0
  %213 = vmatprep.subr.mxu0 0.0
  %214 = vmatpush1.msra.mxu0 0.0
  %215 = vmatprep.subr.mxu0 0.0
  %216 = vmatpush1.msra.mxu0 0.0
  %217 = vmatprep.subr.mxu0 0.0
  %218 = vmatpush1.msra.mxu0 0.0
  %219 = vmatprep.subr.mxu0 0.0
  %220 = vmatpush1.msra.mxu0 0.0
  %221 = vmatprep.subr.mxu0 0.0
  %222 = vmatpush1.msra.mxu0 0.0
  %223 = vmatprep.subr.mxu0 0.0
  %224 = vmatpush1.msra.mxu0 0.0
  %225 = vmatprep.mubr.f32.mxu0 %v89
  %226 = vmatmul.mubr.f32.gmra.mrb[0].mxu0 %v28
  %v227 = vpop.f32.mrb[0].mxu0
  %v228 = vadd.f32 %v158, %v227
  %v229 = vpop.f32.mrb[0].mxu0
  %230 = vdwg.mxu0
  %v231 = vmax.f32 %v228, 0.0
  %v232 = vld [vmem:[%s3] sm:$0xff]
  %v233 = vld [vmem:[%s3 + $0x8] sm:$0xff]
  %v234 = vld [vmem:[%s3 + $0x10] sm:$0xff]
  %v235 = vld [vmem:[%s3 + $0x18] sm:$0xff]
  %v236 = vld [vmem:[%s3 + $0x20] sm:$0xff]
  %v237 = vld [vmem:[%s3 + $0x28] sm:$0xff]
  %v238 = vld [vmem:[%s3 + $0x30] sm:$0xff]
  %v239 = vld [vmem:[%s3 + $0x38] sm:$0xff]
  %v240 = vld [vmem:[%s3 + $0x40] sm:$0xff]
  %v241 = vld [vmem:[%s3 + $0x48] sm:$0xff]
  %v242 = vld [vmem:[%s3 + $0x50] sm:$0xff]
  %v243 = vld [vmem:[%s3 + $0x58] sm:$0xff]
  %v244 = vld [vmem:[%s3 + $0x60] sm:$0xff]
  %v245 = vld [vmem:[%s3 + $0x68] sm:$0xff]
  %v246 = vld [vmem:[%s3 + $0x70] sm:$0xff]
  %v247 = vld [vmem:[%s3 + $0x78] sm:$0xff]
  %v248 = vld [vmem:[%s4] sm:$0x1]
  %v250 = vlaneseq
  %v251 = vshrl.u32 %v250, 7
  %v252 = vsub.s32 0, %v251
  %v253 = vrot.slane %v248, %v252
  %255 = vmatprep.subr.mxu0 0.0
  %256 = vmatpush1.msra.mxu0 %v232
  %257 = vmatprep.subr.mxu0 0.0
  %258 = vmatpush1.msra.mxu0 %v233
  %259 = vmatprep.subr.mxu0 0.0
  %260 = vmatpush1.msra.mxu0 %v234
  %261 = vmatprep.subr.mxu0 0.0
  %262 = vmatpush1.msra.mxu0 %v235
  %263 = vmatprep.subr.mxu0 0.0
  %264 = vmatpush1.msra.mxu0 %v236
  %265 = vmatprep.subr.mxu0 0.0
  %266 = vmatpush1.msra.mxu0 %v237
  %267 = vmatprep.subr.mxu0 0.0
  %268 = vmatpush1.msra.mxu0 %v238
  %269 = vmatprep.subr.mxu0 0.0
  %270 = vmatpush1.msra.mxu0 %v239
  %271 = vmatprep.subr.mxu0 0.0
  %272 = vmatpush1.msra.mxu0 %v240
  %273 = vmatprep.subr.mxu0 0.0
  %274 = vmatpush1.msra.mxu0 %v241
  %275 = vmatprep.subr.mxu0 0.0
  %276 = vmatpush1.msra.mxu0 %v242
  %277 = vmatprep.subr.mxu0 0.0
  %278 = vmatpush1.msra.mxu0 %v243
  %279 = vmatprep.subr.mxu0 0.0
  %280 = vmatpush1.msra.mxu0 %v244
  %281 = vmatprep.subr.mxu0 0.0
  %282 = vmatpush1.msra.mxu0 %v245
  %283 = vmatprep.subr.mxu0 0.0
  %284 = vmatpush1.msra.mxu0 %v246
  %285 = vmatprep.subr.mxu0 0.0
  %286 = vmatpush1.msra.mxu0 %v247
  %287 = vmatprep.subr.mxu0 0.0
  %288 = vmatpush1.msra.mxu0 0.0
  %289 = vmatprep.subr.mxu0 0.0
  %290 = vmatpush1.msra.mxu0 0.0
  %291 = vmatprep.subr.mxu0 0.0
  %292 = vmatpush1.msra.mxu0 0.0
  %293 = vmatprep.subr.mxu0 0.0
  %294 = vmatpush1.msra.mxu0 0.0
  %295 = vmatprep.subr.mxu0 0.0
  %296 = vmatpush1.msra.mxu0 0.0
  %297 = vmatprep.subr.mxu0 0.0
  %298 = vmatpush1.msra.mxu0 0.0
  %299 = vmatprep.subr.mxu0 0.0
  %300 = vmatpush1.msra.mxu0 0.0
  %301 = vmatprep.subr.mxu0 0.0
  %302 = vmatpush1.msra.mxu0 0.0
  %303 = vmatprep.subr.mxu0 0.0
  %304 = vmatpush1.msra.mxu0 0.0
  %305 = vmatprep.subr.mxu0 0.0
  %306 = vmatpush1.msra.mxu0 0.0
  %307 = vmatprep.subr.mxu0 0.0
  %308 = vmatpush1.msra.mxu0 0.0
  %309 = vmatprep.subr.mxu0 0.0
  %310 = vmatpush1.msra.mxu0 0.0
  %311 = vmatprep.subr.mxu0 0.0
  %312 = vmatpush1.msra.mxu0 0.0
  %313 = vmatprep.subr.mxu0 0.0
  %314 = vmatpush1.msra.mxu0 0.0
  %315 = vmatprep.subr.mxu0 0.0
  %316 = vmatpush1.msra.mxu0 0.0
  %317 = vmatprep.subr.mxu0 0.0
  %318 = vmatpush1.msra.mxu0 0.0
  %319 = vmatprep.mubr.f32.mxu0 0.0
  %320 = vmatmul.mubr.f32.gmra.mrb[0].mxu0 %v231
  %v321 = vpop.f32.mrb[0].mxu0
  %v322 = vadd.f32 %v253, %v321
  %v323 = vpop.f32.mrb[0].mxu0
  %324 = vdwg.mxu0
  %v325 = vmax.f32 %v322, 0.0
  %v326 = vld [vmem:[%s5] sm:$0xff]
  %v327 = vld [vmem:[%s5 + $0x8] sm:$0xff]
  %v328 = vld [vmem:[%s5 + $0x10] sm:$0xff]
  %v329 = vld [vmem:[%s5 + $0x18] sm:$0xff]
  %v330 = vld [vmem:[%s5 + $0x20] sm:$0xff]
  %v331 = vld [vmem:[%s5 + $0x28] sm:$0xff]
  %v332 = vld [vmem:[%s5 + $0x30] sm:$0xff]
  %v333 = vld [vmem:[%s5 + $0x38] sm:$0xff]
  %v334 = vld [vmem:[%s5 + $0x40] sm:$0xff]
  %v335 = vld [vmem:[%s5 + $0x48] sm:$0xff]
  %v336 = vld [vmem:[%s5 + $0x50] sm:$0xff]
  %v337 = vld [vmem:[%s5 + $0x58] sm:$0xff]
  %v338 = vld [vmem:[%s5 + $0x60] sm:$0xff]
  %v339 = vld [vmem:[%s5 + $0x68] sm:$0xff]
  %v340 = vld [vmem:[%s5 + $0x70] sm:$0xff]
  %v341 = vld [vmem:[%s5 + $0x78] sm:$0xff]
  %v342 = vld [vmem:[%s6] sm:$0x1]
  %v344 = vlaneseq
  %v345 = vshrl.u32 %v344, 7
  %v346 = vsub.s32 0, %v345
  %v347 = vrot.slane %v342, %v346
  %349 = vmatprep.subr.mxu0 0.0
  %350 = vmatpush1.msra.mxu0 %v326
  %351 = vmatprep.subr.mxu0 0.0
  %352 = vmatpush1.msra.mxu0 %v327
  %353 = vmatprep.subr.mxu0 0.0
  %354 = vmatpush1.msra.mxu0 %v328
  %355 = vmatprep.subr.mxu0 0.0
  %356 = vmatpush1.msra.mxu0 %v329
  %357 = vmatprep.subr.mxu0 0.0
  %358 = vmatpush1.msra.mxu0 %v330
  %359 = vmatprep.subr.mxu0 0.0
  %360 = vmatpush1.msra.mxu0 %v331
  %361 = vmatprep.subr.mxu0 0.0
  %362 = vmatpush1.msra.mxu0 %v332
  %363 = vmatprep.subr.mxu0 0.0
  %364 = vmatpush1.msra.mxu0 %v333
  %365 = vmatprep.subr.mxu0 0.0
  %366 = vmatpush1.msra.mxu0 %v334
  %367 = vmatprep.subr.mxu0 0.0
  %368 = vmatpush1.msra.mxu0 %v335
  %369 = vmatprep.subr.mxu0 0.0
  %370 = vmatpush1.msra.mxu0 %v336
  %371 = vmatprep.subr.mxu0 0.0
  %372 = vmatpush1.msra.mxu0 %v337
  %373 = vmatprep.subr.mxu0 0.0
  %374 = vmatpush1.msra.mxu0 %v338
  %375 = vmatprep.subr.mxu0 0.0
  %376 = vmatpush1.msra.mxu0 %v339
  %377 = vmatprep.subr.mxu0 0.0
  %378 = vmatpush1.msra.mxu0 %v340
  %379 = vmatprep.subr.mxu0 0.0
  %380 = vmatpush1.msra.mxu0 %v341
  %381 = vmatprep.subr.mxu0 0.0
  %382 = vmatpush1.msra.mxu0 0.0
  %383 = vmatprep.subr.mxu0 0.0
  %384 = vmatpush1.msra.mxu0 0.0
  %385 = vmatprep.subr.mxu0 0.0
  %386 = vmatpush1.msra.mxu0 0.0
  %387 = vmatprep.subr.mxu0 0.0
  %388 = vmatpush1.msra.mxu0 0.0
  %389 = vmatprep.subr.mxu0 0.0
  %390 = vmatpush1.msra.mxu0 0.0
  %391 = vmatprep.subr.mxu0 0.0
  %392 = vmatpush1.msra.mxu0 0.0
  %393 = vmatprep.subr.mxu0 0.0
  %394 = vmatpush1.msra.mxu0 0.0
  %395 = vmatprep.subr.mxu0 0.0
  %396 = vmatpush1.msra.mxu0 0.0
  %397 = vmatprep.subr.mxu0 0.0
  %398 = vmatpush1.msra.mxu0 0.0
  %399 = vmatprep.subr.mxu0 0.0
  %400 = vmatpush1.msra.mxu0 0.0
  %401 = vmatprep.subr.mxu0 0.0
  %402 = vmatpush1.msra.mxu0 0.0
  %403 = vmatprep.subr.mxu0 0.0
  %404 = vmatpush1.msra.mxu0 0.0
  %405 = vmatprep.subr.mxu0 0.0
  %406 = vmatpush1.msra.mxu0 0.0
  %407 = vmatprep.subr.mxu0 0.0
  %408 = vmatpush1.msra.mxu0 0.0
  %409 = vmatprep.subr.mxu0 0.0
  %410 = vmatpush1.msra.mxu0 0.0
  %411 = vmatprep.subr.mxu0 0.0
  %412 = vmatpush1.msra.mxu0 0.0
  %413 = vmatprep.mubr.f32.mxu0 0.0
  %414 = vmatmul.mubr.f32.gmra.mrb[0].mxu0 %v325
  %v415 = vpop.f32.mrb[0].mxu0
  %v416 = vadd.f32 %v347, %v415
  %v417 = vpop.f32.mrb[0].mxu0
  %418 = vdwg.mxu0
  %419 = vst [vmem:[%s7] sm:$0xff] %v416
  // Predicated region
  $region30: #{cnn_web_forward.5} parent=0 // pred_check
    _
  $region31: #{cnn_web_forward.5} parent=0 // pred_check_branch
    %421 = sbr.rel (0) target = $region33
  $region32: #{cnn_web_forward.5} parent=0 // pred_region
    _
  $region33: #{cnn_web_forward.5} parent=0 // pred_fallthru
    _
  // Predicated region
  $region34: #{cnn_web_forward.5} parent=0 // pred_check
    _
  $region35: #{cnn_web_forward.5} parent=0 // pred_check_branch
    %423 = sbr.rel (0) target = $region37
  $region36: #{cnn_web_forward.5} parent=0 // pred_region
    _
  $region37: #{cnn_web_forward.5} parent=0 // pred_fallthru
    _

// kernel: cnn_web_forward.4
$region0: #{cnn_web_forward.4}
  #allocation0 [shape = 'u32[]', space=smem, size = 0x4, offset = 0x4, fixed_abs, tag = 'smem constant byte address 0x4 - core index']
  #allocation1 [shape = 'u32[144,128]{1,0:T(1,128)}', space=vmem, size = 0x12000, scoped, tag = 'internal scratch']
  %s0 = inlined_call_operand.vmem [shape: f32[2,56,128], index: 0, kind: input, shape index: {}]
  %s1 = inlined_call_operand.vmem [shape: f32[9,128,128], index: 1, kind: input, shape index: {}]
  %s2 = inlined_call_operand.vmem [shape: f32[1,128], index: 2, kind: input, shape index: {}]
  %s3 = inlined_call_operand.vmem [shape: f32[2,40,128], index: 3, kind: output, shape index: {}]
  %s4 = sld [smem:[#allocation0]]
  $region45: #{cnn_web_forward.4} parent=0
    _
  %s6 = ssub.s32 1, %s4
  %s7 = scalar_select 0, %s6, %s4
  loop: start=0, step=1, limit=4
  $region2: #{cnn_web_forward.4} parent=0 // loop_pre_header
    _
  $region3: #{cnn_web_forward.4} parent=0 // loop_header
    %s9 = sphi 0, %s13
    %p10 = scmp.ge.s32.totalorder %s9, 4
    %s19 = sphi 0, %s21
    %s22 = sphi 0, %s19
    %s23 = sphi 0, %s22
    %s39 = sphi 0, %s23
    %s43 = sphi 0, %s43
    %s45 = sphi 0, %s43
    %s46 = sphi 0, %s45
    %s60 = sphi 0, %s46
    %s64 = sphi 0, %s64
    %s66 = sphi 0, %s64
    %s67 = sphi 0, %s66
    %s81 = sphi 0, %s67
    %s87 = sphi 0, %s89
    %s90 = sphi 0, %s87
    %s91 = sphi 0, %s90
    %s107 = sphi 0, %s91
  $region4: #{cnn_web_forward.4} parent=0 // loop_header_branch
    %12 = sbr.rel (%p10) target = $region8
  $region5: #{cnn_web_forward.4} parent=0 // loop_body
    %s14 = ssub.s32 %s9, 1
    %s15 = ssub.s32 %s9, 2
    %s16 = sadd.s32 %s9, 1
    %s17 = ssub.s32 %s9, %s16
    %p18 = scmp.eq.s32.totalorder %s17, 0
    %s20 = sadd.s32 %s19, 1
    %s21 = scalar_select %p18, %s19, %s20
    %p24 = pneg %p18
    %p25 = scmp.eq.s32.totalorder %s9, 1
    %p26 = por %p24, %p25
    %p27 = scmp.ne.s32.totalorder %s19, %s22
    %p28 = scmp.eq.s32.totalorder %s9, 0
    %p29 = por %p27, %p28
    %p30 = scmp.ne.s32.totalorder %s19, %s22
    %p31 = scmp.eq.s32.totalorder %s14, 1
    %p32 = por %p30, %p31
    %p33 = scmp.ne.s32.totalorder %s22, %s23
    %p34 = scmp.eq.s32.totalorder %s14, 0
    %p35 = por %p33, %p34
    %p36 = scmp.ne.s32.totalorder %s22, %s23
    %p37 = scmp.eq.s32.totalorder %s15, 1
    %p38 = por %p36, %p37
    %p40 = scmp.ne.s32.totalorder %s23, %s39
    %p41 = scmp.eq.s32.totalorder %s15, 0
    %p42 = por %p40, %p41
    %s44 = sadd.s32 %s43, 1
    %p47 = scmp.eq.s32.totalorder %s9, 1
    %p48 = scmp.ne.s32.totalorder %s43, %s45
    %p49 = scmp.eq.s32.totalorder %s9, 0
    %p50 = por %p48, %p49
    %p51 = scmp.ne.s32.totalorder %s43, %s45
    %p52 = scmp.eq.s32.totalorder %s14, 1
    %p53 = por %p51, %p52
    %p54 = scmp.ne.s32.totalorder %s45, %s46
    %p55 = scmp.eq.s32.totalorder %s14, 0
    %p56 = por %p54, %p55
    %p57 = scmp.ne.s32.totalorder %s45, %s46
    %p58 = scmp.eq.s32.totalorder %s15, 1
    %p59 = por %p57, %p58
    %p61 = scmp.ne.s32.totalorder %s46, %s60
    %p62 = scmp.eq.s32.totalorder %s15, 0
    %p63 = por %p61, %p62
    %s65 = sadd.s32 %s64, 1
    %p68 = scmp.eq.s32.totalorder %s9, 1
    %p69 = scmp.ne.s32.totalorder %s64, %s66
    %p70 = scmp.eq.s32.totalorder %s9, 0
    %p71 = por %p69, %p70
    %p72 = scmp.ne.s32.totalorder %s64, %s66
    %p73 = scmp.eq.s32.totalorder %s14, 1
    %p74 = por %p72, %p73
    %p75 = scmp.ne.s32.totalorder %s66, %s67
    %p76 = scmp.eq.s32.totalorder %s14, 0
    %p77 = por %p75, %p76
    %p78 = scmp.ne.s32.totalorder %s66, %s67
    %p79 = scmp.eq.s32.totalorder %s15, 1
    %p80 = por %p78, %p79
    %p82 = scmp.ne.s32.totalorder %s67, %s81
    %p83 = scmp.eq.s32.totalorder %s15, 0
    %p84 = por %p82, %p83
    %s85 = ssub.s32 %s9, %s16
    %p86 = scmp.eq.s32.totalorder %s85, 0
    %s88 = sadd.s32 %s87, 1
    %s89 = scalar_select %p86, %s87, %s88
    %p92 = pneg %p86
    %p93 = scmp.eq.s32.totalorder %s9, 1
    %p94 = por %p92, %p93
    %p95 = scmp.ne.s32.totalorder %s87, %s90
    %p96 = scmp.eq.s32.totalorder %s9, 0
    %p97 = por %p95, %p96
    %p98 = scmp.ne.s32.totalorder %s87, %s90
    %p99 = scmp.eq.s32.totalorder %s14, 1
    %p100 = por %p98, %p99
    %p101 = scmp.ne.s32.totalorder %s90, %s91
    %p102 = scmp.eq.s32.totalorder %s14, 0
    %p103 = por %p101, %p102
    %p104 = scmp.ne.s32.totalorder %s90, %s91
    %p105 = scmp.eq.s32.totalorder %s15, 1
    %p106 = por %p104, %p105
    %p108 = scmp.ne.s32.totalorder %s91, %s107
    %p109 = scmp.eq.s32.totalorder %s15, 0
    %p110 = por %p108, %p109
    %p111 = scmp.le.s32.totalorder 1, %s9
    %p112 = scmp.lt.s32.totalorder %s9, 3
    %p113 = pnand %p111, %p112
    %p114 = pneg %p113
    // Predicated region
    $region9: #{cnn_web_forward.4} parent=5 // pred_check
      _
    $region10: #{cnn_web_forward.4} parent=5 // pred_check_branch
      %116 = sbr.rel (%p113) target = $region12
    $region11: #{cnn_web_forward.4} parent=5 // pred_region
      %s117 = ssub.s32 %s9, 1
      // Predicated region
      $region13: #{cnn_web_forward.4} parent=11 // pred_check
        %p118 = pneg %p56
      $region14: #{cnn_web_forward.4} parent=11 // pred_check_branch
        %120 = sbr.rel (%p118) target = $region16
      $region15: #{cnn_web_forward.4} parent=11 // pred_region
        _
      $region16: #{cnn_web_forward.4} parent=11 // pred_fallthru
        _
      // Predicated region
      $region17: #{cnn_web_forward.4} parent=11 // pred_check
        %p121 = pneg %p77
      $region18: #{cnn_web_forward.4} parent=11 // pred_check_branch
        %123 = sbr.rel (%p121) target = $region20
      $region19: #{cnn_web_forward.4} parent=11 // pred_region
        _
      $region20: #{cnn_web_forward.4} parent=11 // pred_fallthru
        _
    $region12: #{cnn_web_forward.4} parent=5 // pred_fallthru
      _
    %p124 = scmp.lt.s32.totalorder %s9, 2
    // Predicated region
    $region21: #{cnn_web_forward.4} parent=5 // pred_check
      %p125 = pneg %p124
    $region22: #{cnn_web_forward.4} parent=5 // pred_check_branch
      %127 = sbr.rel (%p125) target = $region24
    $region23: #{cnn_web_forward.4} parent=5 // pred_region
      // Predicated region
      $region25: #{cnn_web_forward.4} parent=23 // pred_check
        %p128 = pneg %p29
      $region26: #{cnn_web_forward.4} parent=23 // pred_check_branch
        %130 = sbr.rel (%p128) target = $region28
      $region27: #{cnn_web_forward.4} parent=23 // pred_region
        %p131 = scmp.lt.s32.totalorder %s9, 1
        %s132 = scalar_select %p131, %s9, 1
        %s133 = smul.addr %s132, 7
        %s134 = smul.addr %s133, 8
        %s135 = scalar_lea.vmem %s0, %s134
      $region28: #{cnn_web_forward.4} parent=23 // pred_fallthru
        _
    $region24: #{cnn_web_forward.4} parent=5 // pred_fallthru
      _
    %p136 = scmp.le.s32.totalorder 1, %s9
    %p137 = scmp.lt.s32.totalorder %s9, 3
    %p138 = pnand %p136, %p137
    %p139 = pneg %p138
    // Predicated region
    $region29: #{cnn_web_forward.4} parent=5 // pred_check
      _
    $region30: #{cnn_web_forward.4} parent=5 // pred_check_branch
      %141 = sbr.rel (%p138) target = $region32
    $region31: #{cnn_web_forward.4} parent=5 // pred_region
      %s142 = ssub.s32 %s9, 1
      %p143 = scmp.lt.s32.totalorder %s14, 1
      %s144 = scalar_select %p143, %s14, 1
      %s145 = smul.addr %s144, 7
      %s146 = smul.addr %s145, 8
      %s147 = scalar_lea.vmem %s0, %s146
      %p148 = pneg %p35
      %p149 = pneg %p32
      %p150 = pneg %p56
      %p151 = pneg %p53
      %p152 = pneg %p77
      %p153 = pneg %p74
      %p154 = pneg %p103
      %p155 = pneg %p100
      %p156 = scmp.lt.s32.totalorder %s14, 1
      %s157 = scalar_select %p156, %s14, 1
      %s158 = smul.addr %s157, 5
      %s159 = smul.addr %s158, 8
      %s160 = scalar_lea.vmem %s3, %s159
      %p161 = scmp.lt.s32.totalorder %s14, 1
      %s162 = scalar_select %p161, %s14, 1
      %s163 = smul.addr %s162, 7
      %s164 = smul.addr %s163, 8
      %s165 = scalar_lea.vmem %s0, %s164
      %p166 = scmp.lt.s32.totalorder %s14, 1
      %s167 = scalar_select %p166, %s14, 1
      %s168 = smul.addr %s167, 5
      %s169 = smul.addr %s168, 8
      %s170 = scalar_lea.vmem %s3, %s169
      %v171 = vld [vmem:[%s165] sm:$0xff]
      %v172 = vld [vmem:[%s165 + $0x8] sm:$0xff]
      %v173 = vld [vmem:[%s165 + $0x10] sm:$0xff]
      %v174 = vld [vmem:[%s165 + $0x18] sm:$0xff]
      %v175 = vld [vmem:[%s165 + $0x20] sm:$0xff]
      %v176 = vld [vmem:[%s1] sm:$0xff]
      %v177 = vld [vmem:[%s1 + $0x8] sm:$0xff]
      %v178 = vld [vmem:[%s1 + $0x10] sm:$0xff]
      %v179 = vld [vmem:[%s1 + $0x18] sm:$0xff]
      %v180 = vld [vmem:[%s1 + $0x20] sm:$0xff]
      %v181 = vld [vmem:[%s1 + $0x28] sm:$0xff]
      %v182 = vld [vmem:[%s1 + $0x30] sm:$0xff]
      %v183 = vld [vmem:[%s1 + $0x38] sm:$0xff]
      %v184 = vld [vmem:[%s1 + $0x40] sm:$0xff]
      %v185 = vld [vmem:[%s1 + $0x48] sm:$0xff]
      %v186 = vld [vmem:[%s1 + $0x50] sm:$0xff]
      %v187 = vld [vmem:[%s1 + $0x58] sm:$0xff]
      %v188 = vld [vmem:[%s1 + $0x60] sm:$0xff]
      %v189 = vld [vmem:[%s1 + $0x68] sm:$0xff]
      %v190 = vld [vmem:[%s1 + $0x70] sm:$0xff]
      %v191 = vld [vmem:[%s1 + $0x78] sm:$0xff]
      %v192 = vld [vmem:[%s165 + $0x1] sm:$0xff]
      %v193 = vld [vmem:[%s165 + $0x9] sm:$0xff]
      %v194 = vld [vmem:[%s165 + $0x11] sm:$0xff]
      %v195 = vld [vmem:[%s165 + $0x19] sm:$0xff]
      %v196 = vld [vmem:[%s165 + $0x21] sm:$0xff]
      %s197 = scalar_lea.vmem %s1, 128
      %v198 = vld [vmem:[%s197] sm:$0xff]
      %v199 = vld [vmem:[%s197 + $0x8] sm:$0xff]
      %v200 = vld [vmem:[%s197 + $0x10] sm:$0xff]
      %v201 = vld [vmem:[%s197 + $0x18] sm:$0xff]
      %v202 = vld [vmem:[%s197 + $0x20] sm:$0xff]
      %v203 = vld [vmem:[%s197 + $0x28] sm:$0xff]
      %v204 = vld [vmem:[%s197 + $0x30] sm:$0xff]
      %v205 = vld [vmem:[%s197 + $0x38] sm:$0xff]
      %v206 = vld [vmem:[%s197 + $0x40] sm:$0xff]
      %v207 = vld [vmem:[%s197 + $0x48] sm:$0xff]
      %v208 = vld [vmem:[%s197 + $0x50] sm:$0xff]
      %v209 = vld [vmem:[%s197 + $0x58] sm:$0xff]
      %v210 = vld [vmem:[%s197 + $0x60] sm:$0xff]
      %v211 = vld [vmem:[%s197 + $0x68] sm:$0xff]
      %v212 = vld [vmem:[%s197 + $0x70] sm:$0xff]
      %v213 = vld [vmem:[%s197 + $0x78] sm:$0xff]
      %214 = vmatprep.subr.mxu0 0.0
      %215 = vmatpush1.msra.mxu0 %v198
      %216 = vmatprep.subr.mxu0 0.0
      %217 = vmatpush1.msra.mxu0 %v199
      %218 = vmatprep.subr.mxu0 0.0
      %219 = vmatpush1.msra.mxu0 %v200
      %220 = vmatprep.subr.mxu0 0.0
      %221 = vmatpush1.msra.mxu0 %v201
      %222 = vmatprep.subr.mxu0 0.0
      %223 = vmatpush1.msra.mxu0 %v202
      %224 = vmatprep.subr.mxu0 0.0
      %225 = vmatpush1.msra.mxu0 %v203
      %226 = vmatprep.subr.mxu0 0.0
      %227 = vmatpush1.msra.mxu0 %v204
      %228 = vmatprep.subr.mxu0 0.0
      %229 = vmatpush1.msra.mxu0 %v205
      %230 = vmatprep.subr.mxu0 0.0
      %231 = vmatpush1.msra.mxu0 %v206
      %232 = vmatprep.subr.mxu0 0.0
      %233 = vmatpush1.msra.mxu0 %v207
      %234 = vmatprep.subr.mxu0 0.0
      %235 = vmatpush1.msra.mxu0 %v208
      %236 = vmatprep.subr.mxu0 0.0
      %237 = vmatpush1.msra.mxu0 %v209
      %238 = vmatprep.subr.mxu0 0.0
      %239 = vmatpush1.msra.mxu0 %v210
      %240 = vmatprep.subr.mxu0 0.0
      %241 = vmatpush1.msra.mxu0 %v211
      %242 = vmatprep.subr.mxu0 0.0
      %243 = vmatpush1.msra.mxu0 %v212
      %244 = vmatprep.subr.mxu0 0.0
      %245 = vmatpush1.msra.mxu0 %v213
      %246 = vmatprep.subr.mxu0 0.0
      %247 = vmatpush1.msra.mxu0 0.0
      %248 = vmatprep.subr.mxu0 0.0
      %249 = vmatpush1.msra.mxu0 0.0
      %250 = vmatprep.subr.mxu0 0.0
      %251 = vmatpush1.msra.mxu0 0.0
      %252 = vmatprep.subr.mxu0 0.0
      %253 = vmatpush1.msra.mxu0 0.0
      %254 = vmatprep.subr.mxu0 0.0
      %255 = vmatpush1.msra.mxu0 0.0
      %256 = vmatprep.subr.mxu0 0.0
      %257 = vmatpush1.msra.mxu0 0.0
      %258 = vmatprep.subr.mxu0 0.0
      %259 = vmatpush1.msra.mxu0 0.0
      %260 = vmatprep.subr.mxu0 0.0
      %261 = vmatpush1.msra.mxu0 0.0
      %262 = vmatprep.subr.mxu0 0.0
      %263 = vmatpush1.msra.mxu0 0.0
      %264 = vmatprep.subr.mxu0 0.0
      %265 = vmatpush1.msra.mxu0 0.0
      %266 = vmatprep.subr.mxu0 0.0
      %267 = vmatpush1.msra.mxu0 0.0
      %268 = vmatprep.subr.mxu0 0.0
      %269 = vmatpush1.msra.mxu0 0.0
      %270 = vmatprep.subr.mxu0 0.0
      %271 = vmatpush1.msra.mxu0 0.0
      %272 = vmatprep.subr.mxu0 0.0
      %273 = vmatpush1.msra.mxu0 0.0
      %274 = vmatprep.subr.mxu0 0.0
      %275 = vmatpush1.msra.mxu0 0.0
      %276 = vmatprep.subr.mxu0 0.0
      %277 = vmatpush1.msra.mxu0 0.0
      %278 = vmatprep.mubr.f32.mxu0 0.0
      %279 = vmatmul.mubr.f32.gmra.mrb[0].mxu0 %v192
      %v280 = vpop.f32.mrb[0].mxu0
      %v281 = vadd.f32 0.0, %v280
      %v282 = vpop.f32.mrb[0].mxu0
      %283 = vmatprep.mubr.f32.mxu0 0.0
      %284 = vmatmul.mubr.f32.gmra.mrb[0].mxu0 %v193
      %v285 = vpop.f32.mrb[0].mxu0
      %v286 = vadd.f32 0.0, %v285
      %v287 = vpop.f32.mrb[0].mxu0
      %288 = vmatprep.mubr.f32.mxu0 0.0
      %289 = vmatmul.mubr.f32.gmra.mrb[0].mxu0 %v194
      %v290 = vpop.f32.mrb[0].mxu0
      %v291 = vadd.f32 0.0, %v290
      %v292 = vpop.f32.mrb[0].mxu0
      %293 = vmatprep.mubr.f32.mxu0 0.0
      %294 = vmatmul.mubr.f32.gmra.mrb[0].mxu0 %v195
      %v295 = vpop.f32.mrb[0].mxu0
      %v296 = vadd.f32 0.0, %v295
      %v297 = vpop.f32.mrb[0].mxu0
      %298 = vmatprep.mubr.f32.mxu0 0.0
      %299 = vmatmul.mubr.f32.gmra.mrb[0].mxu0 %v196
      %v300 = vpop.f32.mrb[0].mxu0
      %v301 = vadd.f32 0.0, %v300
      %v302 = vpop.f32.mrb[0].mxu0
      %303 = vdwg.mxu0
      %304 = vmatprep.subr.mxu0 0.0
      %305 = vmatpush1.msra.mxu0 %v176
      %306 = vmatprep.subr.mxu0 0.0
      %307 = vmatpush1.msra.mxu0 %v177
      %308 = vmatprep.subr.mxu0 0.0
      %309 = vmatpush1.msra.mxu0 %v178
      %310 = vmatprep.subr.mxu0 0.0
      %311 = vmatpush1.msra.mxu0 %v179
      %312 = vmatprep.subr.mxu0 0.0
      %313 = vmatpush1.msra.mxu0 %v180
      %314 = vmatprep.subr.mxu0 0.0
      %315 = vmatpush1.msra.mxu0 %v181
      %316 = vmatprep.subr.mxu0 0.0
      %317 = vmatpush1.msra.mxu0 %v182
      %318 = vmatprep.subr.mxu0 0.0
      %319 = vmatpush1.msra.mxu0 %v183
      %320 = vmatprep.subr.mxu0 0.0
      %321 = vmatpush1.msra.mxu0 %v184
      %322 = vmatprep.subr.mxu0 0.0
      %323 = vmatpush1.msra.mxu0 %v185
      %324 = vmatprep.subr.mxu0 0.0
      %325 = vmatpush1.msra.mxu0 %v186
      %326 = vmatprep.subr.mxu0 0.0
      %327 = vmatpush1.msra.mxu0 %v187
      %328 = vmatprep.subr.mxu0 0.0
      %329 = vmatpush1.msra.mxu0 %v188
      %330 = vmatprep.subr.mxu0 0.0
      %331 = vmatpush1.msra.mxu0 %v189
      %332 = vmatprep.subr.mxu0 0.0
      %333 = vmatpush1.msra.mxu0 %v190
      %334 = vmatprep.subr.mxu0 0.0
      %335 = vmatpush1.msra.mxu0 %v191
      %336 = vmatprep.subr.mxu0 0.0
      %337 = vmatpush1.msra.mxu0 0.0
      %338 = vmatprep.subr.mxu0 0.0
      %339 = vmatpush1.msra.mxu0 0.0
      %340 = vmatprep.subr.mxu0 0.0
      %341 = vmatpush1.msra.mxu0 0.0
      %342 = vmatprep.subr.mxu0 0.0
      %343 = vmatpush1.msra.mxu0 0.0
      %344 = vmatprep.subr.mxu0 0.0
      %345 = vmatpush1.msra.mxu0 0.0
      %346 = vmatprep.subr.mxu0 0.0
      %347 = vmatpush1.msra.mxu0 0.0
      %348 = vmatprep.subr.mxu0 0.0
      %349 = vmatpush1.msra.mxu0 0.0
      %350 = vmatprep.subr.mxu0 0.0
      %351 = vmatpush1.msra.mxu0 0.0
      %352 = vmatprep.subr.mxu0 0.0
      %353 = vmatpush1.msra.mxu0 0.0
      %354 = vmatprep.subr.mxu0 0.0
      %355 = vmatpush1.msra.mxu0 0.0
      %356 = vmatprep.subr.mxu0 0.0
      %357 = vmatpush1.msra.mxu0 0.0
      %358 = vmatprep.subr.mxu0 0.0
      %359 = vmatpush1.msra.mxu0 0.0
      %360 = vmatprep.subr.mxu0 0.0
      %361 = vmatpush1.msra.mxu0 0.0
      %362 = vmatprep.subr.mxu0 0.0
      %363 = vmatpush1.msra.mxu0 0.0
      %364 = vmatprep.subr.mxu0 0.0
      %365 = vmatpush1.msra.mxu0 0.0
      %366 = vmatprep.subr.mxu0 0.0
      %367 = vmatpush1.msra.mxu0 0.0
      %368 = vmatprep.mubr.f32.mxu0 0.0
      %369 = vmatmul.mubr.f32.gmra.mrb[0].mxu0 %v171
      %v370 = vpop.f32.mrb[0].mxu0
      %v371 = vadd.f32 %v281, %v370
      %v372 = vpop.f32.mrb[0].mxu0
      %373 = vmatprep.mubr.f32.mxu0 0.0
      %374 = vmatmul.mubr.f32.gmra.mrb[0].mxu0 %v172
      %v375 = vpop.f32.mrb[0].mxu0
      %v376 = vadd.f32 %v286, %v375
      %v377 = vpop.f32.mrb[0].mxu0
      %378 = vmatprep.mubr.f32.mxu0 0.0
      %379 = vmatmul.mubr.f32.gmra.mrb[0].mxu0 %v173
      %v380 = vpop.f32.mrb[0].mxu0
      %v381 = vadd.f32 %v291, %v380
      %v382 = vpop.f32.mrb[0].mxu0
      %383 = vmatprep.mubr.f32.mxu0 0.0
      %384 = vmatmul.mubr.f32.gmra.mrb[0].mxu0 %v174
      %v385 = vpop.f32.mrb[0].mxu0
      %v386 = vadd.f32 %v296, %v385
      %v387 = vpop.f32.mrb[0].mxu0
      %388 = vmatprep.mubr.f32.mxu0 0.0
      %389 = vmatmul.mubr.f32.gmra.mrb[0].mxu0 %v175
      %v390 = vpop.f32.mrb[0].mxu0
      %v391 = vadd.f32 %v301, %v390
      %v392 = vpop.f32.mrb[0].mxu0
      %393 = vdwg.mxu0
      %v394 = vld [vmem:[%s165 + $0x2] sm:$0xff]
      %v395 = vld [vmem:[%s165 + $0xa] sm:$0xff]
      %v396 = vld [vmem:[%s165 + $0x12] sm:$0xff]
      %v397 = vld [vmem:[%s165 + $0x1a] sm:$0xff]
      %v398 = vld [vmem:[%s165 + $0x22] sm:$0xff]
      %s399 = scalar_lea.vmem %s1, 256
      %v400 = vld [vmem:[%s399] sm:$0xff]
      %v401 = vld [vmem:[%s399 + $0x8] sm:$0xff]
      %v402 = vld [vmem:[%s399 + $0x10] sm:$0xff]
      %v403 = vld [vmem:[%s399 + $0x18] sm:$0xff]
      %v404 = vld [vmem:[%s399 + $0x20] sm:$0xff]
      %v405 = vld [vmem:[%s399 + $0x28] sm:$0xff]
      %v406 = vld [vmem:[%s399 + $0x30] sm:$0xff]
      %v407 = vld [vmem:[%s399 + $0x38] sm:$0xff]
      %v408 = vld [vmem:[%s399 + $0x40] sm:$0xff]
      %v409 = vld [vmem:[%s399 + $0x48] sm:$0xff]
      %v410 = vld [vmem:[%s399 + $0x50] sm:$0xff]
      %v411 = vld [vmem:[%s399 + $0x58] sm:$0xff]
      %v412 = vld [vmem:[%s399 + $0x60] sm:$0xff]
      %v413 = vld [vmem:[%s399 + $0x68] sm:$0xff]
      %v414 = vld [vmem:[%s399 + $0x70] sm:$0xff]
      %v415 = vld [vmem:[%s399 + $0x78] sm:$0xff]
      %416 = vmatprep.subr.mxu0 0.0
      %417 = vmatpush1.msra.mxu0 %v400
      %418 = vmatprep.subr.mxu0 0.0
      %419 = vmatpush1.msra.mxu0 %v401
      %420 = vmatprep.subr.mxu0 0.0
      %421 = vmatpush1.msra.mxu0 %v402
      %422 = vmatprep.subr.mxu0 0.0
      %423 = vmatpush1.msra.mxu0 %v403
      %424 = vmatprep.subr.mxu0 0.0
      %425 = vmatpush1.msra.mxu0 %v404
      %426 = vmatprep.subr.mxu0 0.0
      %427 = vmatpush1.msra.mxu0 %v405
      %428 = vmatprep.subr.mxu0 0.0
      %429 = vmatpush1.msra.mxu0 %v406
      %430 = vmatprep.subr.mxu0 0.0
      %431 = vmatpush1.msra.mxu0 %v407
      %432 = vmatprep.subr.mxu0 0.0
      %433 = vmatpush1.msra.mxu0 %v408
      %434 = vmatprep.subr.mxu0 0.0
      %435 = vmatpush1.msra.mxu0 %v409
      %436 = vmatprep.subr.mxu0 0.0
      %437 = vmatpush1.msra.mxu0 %v410
      %438 = vmatprep.subr.mxu0 0.0
      %439 = vmatpush1.msra.mxu0 %v411
      %440 = vmatprep.subr.mxu0 0.0
      %441 = vmatpush1.msra.mxu0 %v412
      %442 = vmatprep.subr.mxu0 0.0
      %443 = vmatpush1.msra.mxu0 %v413
      %444 = vmatprep.subr.mxu0 0.0
      %445 = vmatpush1.msra.mxu0 %v414
      %446 = vmatprep.subr.mxu0 0.0
      %447 = vmatpush1.msra.mxu0 %v415
      %448 = vmatprep.subr.mxu0 0.0
      %449 = vmatpush1.msra.mxu0 0.0
      %450 = vmatprep.subr.mxu0 0.0
      %451 = vmatpush1.msra.mxu0 0.0
      %452 = vmatprep.subr.mxu0 0.0
      %453 = vmatpush1.msra.mxu0 0.0
      %454 = vmatprep.subr.mxu0 0.0
      %455 = vmatpush1.msra.mxu0 0.0
      %456 = vmatprep.subr.mxu0 0.0
      %457 = vmatpush1.msra.mxu0 0.0
      %458 = vmatprep.subr.mxu0 0.0
      %459 = vmatpush1.msra.mxu0 0.0
      %460 = vmatprep.subr.mxu0 0.0
      %461 = vmatpush1.msra.mxu0 0.0
      %462 = vmatprep.subr.mxu0 0.0
      %463 = vmatpush1.msra.mxu0 0.0
      %464 = vmatprep.subr.mxu0 0.0
      %465 = vmatpush1.msra.mxu0 0.0
      %466 = vmatprep.subr.mxu0 0.0
      %467 = vmatpush1.msra.mxu0 0.0
      %468 = vmatprep.subr.mxu0 0.0
      %469 = vmatpush1.msra.mxu0 0.0
      %470 = vmatprep.subr.mxu0 0.0
      %471 = vmatpush1.msra.mxu0 0.0
      %472 = vmatprep.subr.mxu0 0.0
      %473 = vmatpush1.msra.mxu0 0.0
      %474 = vmatprep.subr.mxu0 0.0
      %475 = vmatpush1.msra.mxu0 0.0
      %476 = vmatprep.subr.mxu0 0.0
      %477 = vmatpush1.msra.mxu0 0.0
      %478 = vmatprep.subr.mxu0 0.0
      %479 = vmatpush1.msra.mxu0 0.0
      %480 = vmatprep.mubr.f32.mxu0 0.0
      %481 = vmatmul.mubr.f32.gmra.mrb[0].mxu0 %v394
      %v482 = vpop.f32.mrb[0].mxu0
      %v483 = vadd.f32 0.0, %v482
      %v484 = vpop.f32.mrb[0].mxu0
      %485 = vmatprep.mubr.f32.mxu0 0.0
      %486 = vmatmul.mubr.f32.gmra.mrb[0].mxu0 %v395
      %v487 = vpop.f32.mrb[0].mxu0
      %v488 = vadd.f32 0.0, %v487
      %v489 = vpop.f32.mrb[0].mxu0
      %490 = vmatprep.mubr.f32.mxu0 0.0
      %491 = vmatmul.mubr.f32.gmra.mrb[0].mxu0 %v396
      %v492 = vpop.f32.mrb[0].mxu0
      %v493 = vadd.f32 0.0, %v492
      %v494 = vpop.f32.mrb[0].mxu0
      %495 = vmatprep.mubr.f32.mxu0 0.0
      %496 = vmatmul.mubr.f32.gmra.mrb[0].mxu0 %v397
      %v497 = vpop.f32.mrb[0].mxu0
      %v498 = vadd.f32 0.0, %v497
      %v499 = vpop.f32.mrb[0].mxu0
      %500 = vmatprep.mubr.f32.mxu0 0.0
      %501 = vmatmul.mubr.f32.gmra.mrb[0].mxu0 %v398
      %v502 = vpop.f32.mrb[0].mxu0
      %v503 = vadd.f32 0.0, %v502
      %v504 = vpop.f32.mrb[0].mxu0
      %505 = vdwg.mxu0
      %v506 = vadd.f32 %v371, %v483
      %v507 = vadd.f32 %v376, %v488
      %v508 = vadd.f32 %v381, %v493
      %v509 = vadd.f32 %v386, %v498
      %v510 = vadd.f32 %v391, %v503
      %v511 = vld [vmem:[%s165 + $0x7] sm:$0xff]
      %v512 = vld [vmem:[%s165 + $0xf] sm:$0xff]
      %v513 = vld [vmem:[%s165 + $0x17] sm:$0xff]
      %v514 = vld [vmem:[%s165 + $0x1f] sm:$0xff]
      %v515 = vld [vmem:[%s165 + $0x27] sm:$0xff]
      %s516 = scalar_lea.vmem %s1, 384
      %v517 = vld [vmem:[%s516] sm:$0xff]
      %v518 = vld [vmem:[%s516 + $0x8] sm:$0xff]
      %v519 = vld [vmem:[%s516 + $0x10] sm:$0xff]
      %v520 = vld [vmem:[%s516 + $0x18] sm:$0xff]
      %v521 = vld [vmem:[%s516 + $0x20] sm:$0xff]
      %v522 = vld [vmem:[%s516 + $0x28] sm:$0xff]
      %v523 = vld [vmem:[%s516 + $0x30] sm:$0xff]
      %v524 = vld [vmem:[%s516 + $0x38] sm:$0xff]
      %v525 = vld [vmem:[%s516 + $0x40] sm:$0xff]
      %v526 = vld [vmem:[%s516 + $0x48] sm:$0xff]
      %v527 = vld [vmem:[%s516 + $0x50] sm:$0xff]
      %v528 = vld [vmem:[%s516 + $0x58] sm:$0xff]
      %v529 = vld [vmem:[%s516 + $0x60] sm:$0xff]
      %v530 = vld [vmem:[%s516 + $0x68] sm:$0xff]
      %v531 = vld [vmem:[%s516 + $0x70] sm:$0xff]
      %v532 = vld [vmem:[%s516 + $0x78] sm:$0xff]
      %533 = vmatprep.subr.mxu0 0.0
      %534 = vmatpush1.msra.mxu0 %v517
      %535 = vmatprep.subr.mxu0 0.0
      %536 = vmatpush1.msra.mxu0 %v518
      %537 = vmatprep.subr.mxu0 0.0
      %538 = vmatpush1.msra.mxu0 %v519
      %539 = vmatprep.subr.mxu0 0.0
      %540 = vmatpush1.msra.mxu0 %v520
      %541 = vmatprep.subr.mxu0 0.0
      %542 = vmatpush1.msra.mxu0 %v521
      %543 = vmatprep.subr.mxu0 0.0
      %544 = vmatpush1.msra.mxu0 %v522
      %545 = vmatprep.subr.mxu0 0.0
      %546 = vmatpush1.msra.mxu0 %v523
      %547 = vmatprep.subr.mxu0 0.0
      %548 = vmatpush1.msra.mxu0 %v524
      %549 = vmatprep.subr.mxu0 0.0
      %550 = vmatpush1.msra.mxu0 %v525
      %551 = vmatprep.subr.mxu0 0.0
      %552 = vmatpush1.msra.mxu0 %v526
      %553 = vmatprep.subr.mxu0 0.0
      %554 = vmatpush1.msra.mxu0 %v527
      %555 = vmatprep.subr.mxu0 0.0
      %556 = vmatpush1.msra.mxu0 %v528
      %557 = vmatprep.subr.mxu0 0.0
      %558 = vmatpush1.msra.mxu0 %v529
      %559 = vmatprep.subr.mxu0 0.0
      %560 = vmatpush1.msra.mxu0 %v530
      %561 = vmatprep.subr.mxu0 0.0
      %562 = vmatpush1.msra.mxu0 %v531
      %563 = vmatprep.subr.mxu0 0.0
      %564 = vmatpush1.msra.mxu0 %v532
      %565 = vmatprep.subr.mxu0 0.0
      %566 = vmatpush1.msra.mxu0 0.0
      %567 = vmatprep.subr.mxu0 0.0
      %568 = vmatpush1.msra.mxu0 0.0
      %569 = vmatprep.subr.mxu0 0.0
      %570 = vmatpush1.msra.mxu0 0.0
      %571 = vmatprep.subr.mxu0 0.0
      %572 = vmatpush1.msra.mxu0 0.0
      %573 = vmatprep.subr.mxu0 0.0
      %574 = vmatpush1.msra.mxu0 0.0
      %575 = vmatprep.subr.mxu0 0.0
      %576 = vmatpush1.msra.mxu0 0.0
      %577 = vmatprep.subr.mxu0 0.0
      %578 = vmatpush1.msra.mxu0 0.0
      %579 = vmatprep.subr.mxu0 0.0
      %580 = vmatpush1.msra.mxu0 0.0
      %581 = vmatprep.subr.mxu0 0.0
      %582 = vmatpush1.msra.mxu0 0.0
      %583 = vmatprep.subr.mxu0 0.0
      %584 = vmatpush1.msra.mxu0 0.0
      %585 = vmatprep.subr.mxu0 0.0
      %586 = vmatpush1.msra.mxu0 0.0
      %587 = vmatprep.subr.mxu0 0.0
      %588 = vmatpush1.msra.mxu0 0.0
      %589 = vmatprep.subr.mxu0 0.0
      %590 = vmatpush1.msra.mxu0 0.0
      %591 = vmatprep.subr.mxu0 0.0
      %592 = vmatpush1.msra.mxu0 0.0
      %593 = vmatprep.subr.mxu0 0.0
      %594 = vmatpush1.msra.mxu0 0.0
      %595 = vmatprep.subr.mxu0 0.0
      %596 = vmatpush1.msra.mxu0 0.0
      %597 = vmatprep.mubr.f32.mxu0 0.0
      %598 = vmatmul.mubr.f32.gmra.mrb[0].mxu0 %v511
      %v599 = vpop.f32.mrb[0].mxu0
      %v600 = vadd.f32 0.0, %v599
      %v601 = vpop.f32.mrb[0].mxu0
      %602 = vmatprep.mubr.f32.mxu0 0.0
      %603 = vmatmul.mubr.f32.gmra.mrb[0].mxu0 %v512
      %v604 = vpop.f32.mrb[0].mxu0
      %v605 = vadd.f32 0.0, %v604
      %v606 = vpop.f32.mrb[0].mxu0
      %607 = vmatprep.mubr.f32.mxu0 0.0
      %608 = vmatmul.mubr.f32.gmra.mrb[0].mxu0 %v513
      %v609 = vpop.f32.mrb[0].mxu0
      %v610 = vadd.f32 0.0, %v609
      %v611 = vpop.f32.mrb[0].mxu0
      %612 = vmatprep.mubr.f32.mxu0 0.0
      %613 = vmatmul.mubr.f32.gmra.mrb[0].mxu0 %v514
      %v614 = vpop.f32.mrb[0].mxu0
      %v615 = vadd.f32 0.0, %v614
      %v616 = vpop.f32.mrb[0].mxu0
      %617 = vmatprep.mubr.f32.mxu0 0.0
      %618 = vmatmul.mubr.f32.gmra.mrb[0].mxu0 %v515
      %v619 = vpop.f32.mrb[0].mxu0
      %v620 = vadd.f32 0.0, %v619
      %v621 = vpop.f32.mrb[0].mxu0
      %622 = vdwg.mxu0
      %v623 = vadd.f32 %v506, %v600
      %v624 = vadd.f32 %v507, %v605
      %v625 = vadd.f32 %v508, %v610
      %v626 = vadd.f32 %v509, %v615
      %v627 = vadd.f32 %v510, %v620
      %v628 = vld [vmem:[%s165 + $0x8] sm:$0xff]
      %v629 = vld [vmem:[%s165 + $0x10] sm:$0xff]
      %v630 = vld [vmem:[%s165 + $0x18] sm:$0xff]
      %v631 = vld [vmem:[%s165 + $0x20] sm:$0xff]
      %v632 = vld [vmem:[%s165 + $0x28] sm:$0xff]
      %s633 = scalar_lea.vmem %s1, 512
      %v634 = vld [vmem:[%s633] sm:$0xff]
      %v635 = vld [vmem:[%s633 + $0x8] sm:$0xff]
      %v636 = vld [vmem:[%s633 + $0x10] sm:$0xff]
      %v637 = vld [vmem:[%s633 + $0x18] sm:$0xff]
      %v638 = vld [vmem:[%s633 + $0x20] sm:$0xff]
      %v639 = vld [vmem:[%s633 + $0x28] sm:$0xff]
      %v640 = vld [vmem:[%s633 + $0x30] sm:$0xff]
      %v641 = vld [vmem:[%s633 + $0x38] sm:$0xff]
      %v642 = vld [vmem:[%s633 + $0x40] sm:$0xff]
      %v643 = vld [vmem:[%s633 + $0x48] sm:$0xff]
      %v644 = vld [vmem:[%s633 + $0x50] sm:$0xff]
      %v645 = vld [vmem:[%s633 + $0x58] sm:$0xff]
      %v646 = vld [vmem:[%s633 + $0x60] sm:$0xff]
      %v647 = vld [vmem:[%s633 + $0x68] sm:$0xff]
      %v648 = vld [vmem:[%s633 + $0x70] sm:$0xff]
      %v649 = vld [vmem:[%s633 + $0x78] sm:$0xff]
      %650 = vmatprep.subr.mxu0 0.0
      %651 = vmatpush1.msra.mxu0 %v634
      %652 = vmatprep.subr.mxu0 0.0
      %653 = vmatpush1.msra.mxu0 %v635
      %654 = vmatprep.subr.mxu0 0.0
      %655 = vmatpush1.msra.mxu0 %v636
      %656 = vmatprep.subr.mxu0 0.0
      %657 = vmatpush1.msra.mxu0 %v637
      %658 = vmatprep.subr.mxu0 0.0
      %659 = vmatpush1.msra.mxu0 %v638
      %660 = vmatprep.subr.mxu0 0.0
      %661 = vmatpush1.msra.mxu0 %v639
      %662 = vmatprep.subr.mxu0 0.0
      %663 = vmatpush1.msra.mxu0 %v640
      %664 = vmatprep.subr.mxu0 0.0
      %665 = vmatpush1.msra.mxu0 %v641
      %666 = vmatprep.subr.mxu0 0.0
      %667 = vmatpush1.msra.mxu0 %v642
      %668 = vmatprep.subr.mxu0 0.0
      %669 = vmatpush1.msra.mxu0 %v643
      %670 = vmatprep.subr.mxu0 0.0
      %671 = vmatpush1.msra.mxu0 %v644
      %672 = vmatprep.subr.mxu0 0.0
      %673 = vmatpush1.msra.mxu0 %v645
      %674 = vmatprep.subr.mxu0 0.0
      %675 = vmatpush1.msra.mxu0 %v646
      %676 = vmatprep.subr.mxu0 0.0
      %677 = vmatpush1.msra.mxu0 %v647
      %678 = vmatprep.subr.mxu0 0.0
      %679 = vmatpush1.msra.mxu0 %v648
      %680 = vmatprep.subr.mxu0 0.0
      %681 = vmatpush1.msra.mxu0 %v649
      %682 = vmatprep.subr.mxu0 0.0
      %683 = vmatpush1.msra.mxu0 0.0
      %684 = vmatprep.subr.mxu0 0.0
      %685 = vmatpush1.msra.mxu0 0.0
      %686 = vmatprep.subr.mxu0 0.0
      %687 = vmatpush1.msra.mxu0 0.0
      %688 = vmatprep.subr.mxu0 0.0
      %689 = vmatpush1.msra.mxu0 0.0
      %690 = vmatprep.subr.mxu0 0.0
      %691 = vmatpush1.msra.mxu0 0.0
      %692 = vmatprep.subr.mxu0 0.0
      %693 = vmatpush1.msra.mxu0 0.0
      %694 = vmatprep.subr.mxu0 0.0
      %695 = vmatpush1.msra.mxu0 0.0
      %696 = vmatprep.subr.mxu0 0.0
      %697 = vmatpush1.msra.mxu0 0.0
      %698 = vmatprep.subr.mxu0 0.0
      %699 = vmatpush1.msra.mxu0 0.0
      %700 = vmatprep.subr.mxu0 0.0
      %701 = vmatpush1.msra.mxu0 0.0
      %702 = vmatprep.subr.mxu0 0.0
      %703 = vmatpush1.msra.mxu0 0.0
      %704 = vmatprep.subr.mxu0 0.0
      %705 = vmatpush1.msra.mxu0 0.0
      %706 = vmatprep.subr.mxu0 0.0
      %707 = vmatpush1.msra.mxu0 0.0
      %708 = vmatprep.subr.mxu0 0.0
      %709 = vmatpush1.msra.mxu0 0.0
      %710 = vmatprep.subr.mxu0 0.0
      %711 = vmatpush1.msra.mxu0 0.0
      %712 = vmatprep.subr.mxu0 0.0
      %713 = vmatpush1.msra.mxu0 0.0
      %714 = vmatprep.mubr.f32.mxu0 0.0
      %715 = vmatmul.mubr.f32.gmra.mrb[0].mxu0 %v628
      %v716 = vpop.f32.mrb[0].mxu0
      %v717 = vadd.f32 0.0, %v716
      %v718 = vpop.f32.mrb[0].mxu0
      %719 = vmatprep.mubr.f32.mxu0 0.0
      %720 = vmatmul.mubr.f32.gmra.mrb[0].mxu0 %v629
      %v721 = vpop.f32.mrb[0].mxu0
      %v722 = vadd.f32 0.0, %v721
      %v723 = vpop.f32.mrb[0].mxu0
      %724 = vmatprep.mubr.f32.mxu0 0.0
      %725 = vmatmul.mubr.f32.gmra.mrb[0].mxu0 %v630
      %v726 = vpop.f32.mrb[0].mxu0
      %v727 = vadd.f32 0.0, %v726
      %v728 = vpop.f32.mrb[0].mxu0
      %729 = vmatprep.mubr.f32.mxu0 0.0
      %730 = vmatmul.mubr.f32.gmra.mrb[0].mxu0 %v631
      %v731 = vpop.f32.mrb[0].mxu0
      %v732 = vadd.f32 0.0, %v731
      %v733 = vpop.f32.mrb[0].mxu0
      %734 = vmatprep.mubr.f32.mxu0 0.0
      %735 = vmatmul.mubr.f32.gmra.mrb[0].mxu0 %v632
      %v736 = vpop.f32.mrb[0].mxu0
      %v737 = vadd.f32 0.0, %v736
      %v738 = vpop.f32.mrb[0].mxu0
      %739 = vdwg.mxu0
      %v740 = vadd.f32 %v623, %v717
      %v741 = vadd.f32 %v624, %v722
      %v742 = vadd.f32 %v625, %v727
      %v743 = vadd.f32 %v626, %v732
      %v744 = vadd.f32 %v627, %v737
      %v745 = vld [vmem:[%s165 + $0x9] sm:$0xff]
      %v746 = vld [vmem:[%s165 + $0x11] sm:$0xff]
      %v747 = vld [vmem:[%s165 + $0x19] sm:$0xff]
      %v748 = vld [vmem:[%s165 + $0x21] sm:$0xff]
      %v749 = vld [vmem:[%s165 + $0x29] sm:$0xff]
      %s750 = scalar_lea.vmem %s1, 640
      %v751 = vld [vmem:[%s750] sm:$0xff]
      %v752 = vld [vmem:[%s750 + $0x8] sm:$0xff]
      %v753 = vld [vmem:[%s750 + $0x10] sm:$0xff]
      %v754 = vld [vmem:[%s750 + $0x18] sm:$0xff]
      %v755 = vld [vmem:[%s750 + $0x20] sm:$0xff]
      %v756 = vld [vmem:[%s750 + $0x28] sm:$0xff]
      %v757 = vld [vmem:[%s750 + $0x30] sm:$0xff]
      %v758 = vld [vmem:[%s750 + $0x38] sm:$0xff]
      %v759 = vld [vmem:[%s750 + $0x40] sm:$0xff]
      %v760 = vld [vmem:[%s750 + $0x48] sm:$0xff]
      %v761 = vld [vmem:[%s750 + $0x50] sm:$0xff]
      %v762 = vld [vmem:[%s750 + $0x58] sm:$0xff]
      %v763 = vld [vmem:[%s750 + $0x60] sm:$0xff]
      %v764 = vld [vmem:[%s750 + $0x68] sm:$0xff]
      %v765 = vld [vmem:[%s750 + $0x70] sm:$0xff]
      %v766 = vld [vmem:[%s750 + $0x78] sm:$0xff]
      %767 = vmatprep.subr.mxu0 0.0
      %768 = vmatpush1.msra.mxu0 %v751
      %769 = vmatprep.subr.mxu0 0.0
      %770 = vmatpush1.msra.mxu0 %v752
      %771 = vmatprep.subr.mxu0 0.0
      %772 = vmatpush1.msra.mxu0 %v753
      %773 = vmatprep.subr.mxu0 0.0
      %774 = vmatpush1.msra.mxu0 %v754
      %775 = vmatprep.subr.mxu0 0.0
      %776 = vmatpush1.msra.mxu0 %v755
      %777 = vmatprep.subr.mxu0 0.0
      %778 = vmatpush1.msra.mxu0 %v756
      %779 = vmatprep.subr.mxu0 0.0
      %780 = vmatpush1.msra.mxu0 %v757
      %781 = vmatprep.subr.mxu0 0.0
      %782 = vmatpush1.msra.mxu0 %v758
      %783 = vmatprep.subr.mxu0 0.0
      %784 = vmatpush1.msra.mxu0 %v759
      %785 = vmatprep.subr.mxu0 0.0
      %786 = vmatpush1.msra.mxu0 %v760
      %787 = vmatprep.subr.mxu0 0.0
      %788 = vmatpush1.msra.mxu0 %v761
      %789 = vmatprep.subr.mxu0 0.0
      %790 = vmatpush1.msra.mxu0 %v762
      %791 = vmatprep.subr.mxu0 0.0
      %792 = vmatpush1.msra.mxu0 %v763
      %793 = vmatprep.subr.mxu0 0.0
      %794 = vmatpush1.msra.mxu0 %v764
      %795 = vmatprep.subr.mxu0 0.0
      %796 = vmatpush1.msra.mxu0 %v765
      %797 = vmatprep.subr.mxu0 0.0
      %798 = vmatpush1.msra.mxu0 %v766
      %799 = vmatprep.subr.mxu0 0.0
      %800 = vmatpush1.msra.mxu0 0.0
      %801 = vmatprep.subr.mxu0 0.0
      %802 = vmatpush1.msra.mxu0 0.0
      %803 = vmatprep.subr.mxu0 0.0
      %804 = vmatpush1.msra.mxu0 0.0
      %805 = vmatprep.subr.mxu0 0.0
      %806 = vmatpush1.msra.mxu0 0.0
      %807 = vmatprep.subr.mxu0 0.0
      %808 = vmatpush1.msra.mxu0 0.0
      %809 = vmatprep.subr.mxu0 0.0
      %810 = vmatpush1.msra.mxu0 0.0
      %811 = vmatprep.subr.mxu0 0.0
      %812 = vmatpush1.msra.mxu0 0.0
      %813 = vmatprep.subr.mxu0 0.0
      %814 = vmatpush1.msra.mxu0 0.0
      %815 = vmatprep.subr.mxu0 0.0
      %816 = vmatpush1.msra.mxu0 0.0
      %817 = vmatprep.subr.mxu0 0.0
      %818 = vmatpush1.msra.mxu0 0.0
      %819 = vmatprep.subr.mxu0 0.0
      %820 = vmatpush1.msra.mxu0 0.0
      %821 = vmatprep.subr.mxu0 0.0
      %822 = vmatpush1.msra.mxu0 0.0
      %823 = vmatprep.subr.mxu0 0.0
      %824 = vmatpush1.msra.mxu0 0.0
      %825 = vmatprep.subr.mxu0 0.0
      %826 = vmatpush1.msra.mxu0 0.0
      %827 = vmatprep.subr.mxu0 0.0
      %828 = vmatpush1.msra.mxu0 0.0
      %829 = vmatprep.subr.mxu0 0.0
      %830 = vmatpush1.msra.mxu0 0.0
      %831 = vmatprep.mubr.f32.mxu0 0.0
      %832 = vmatmul.mubr.f32.gmra.mrb[0].mxu0 %v745
      %v833 = vpop.f32.mrb[0].mxu0
      %v834 = vadd.f32 0.0, %v833
      %v835 = vpop.f32.mrb[0].mxu0
      %836 = vmatprep.mubr.f32.mxu0 0.0
      %837 = vmatmul.mubr.f32.gmra.mrb[0].mxu0 %v746
      %v838 = vpop.f32.mrb[0].mxu0
      %v839 = vadd.f32 0.0, %v838
      %v840 = vpop.f32.mrb[0].mxu0
      %841 = vmatprep.mubr.f32.mxu0 0.0
      %842 = vmatmul.mubr.f32.gmra.mrb[0].mxu0 %v747
      %v843 = vpop.f32.mrb[0].mxu0
      %v844 = vadd.f32 0.0, %v843
      %v845 = vpop.f32.mrb[0].mxu0
      %846 = vmatprep.mubr.f32.mxu0 0.0
      %847 = vmatmul.mubr.f32.gmra.mrb[0].mxu0 %v748
      %v848 = vpop.f32.mrb[0].mxu0
      %v849 = vadd.f32 0.0, %v848
      %v850 = vpop.f32.mrb[0].mxu0
      %851 = vmatprep.mubr.f32.mxu0 0.0
      %852 = vmatmul.mubr.f32.gmra.mrb[0].mxu0 %v749
      %v853 = vpop.f32.mrb[0].mxu0
      %v854 = vadd.f32 0.0, %v853
      %v855 = vpop.f32.mrb[0].mxu0
      %856 = vdwg.mxu0
      %v857 = vadd.f32 %v740, %v834
      %v858 = vadd.f32 %v741, %v839
      %v859 = vadd.f32 %v742, %v844
      %v860 = vadd.f32 %v743, %v849
      %v861 = vadd.f32 %v744, %v854
      %v862 = vld [vmem:[%s165 + $0xe] sm:$0xff]
      %v863 = vld [vmem:[%s165 + $0x16] sm:$0xff]
      %v864 = vld [vmem:[%s165 + $0x1e] sm:$0xff]
      %v865 = vld [vmem:[%s165 + $0x26] sm:$0xff]
      %v866 = vld [vmem:[%s165 + $0x2e] sm:$0xff]
      %s867 = scalar_lea.vmem %s1, 768
      %v868 = vld [vmem:[%s867] sm:$0xff]
      %v869 = vld [vmem:[%s867 + $0x8] sm:$0xff]
      %v870 = vld [vmem:[%s867 + $0x10] sm:$0xff]
      %v871 = vld [vmem:[%s867 + $0x18] sm:$0xff]
      %v872 = vld [vmem:[%s867 + $0x20] sm:$0xff]
      %v873 = vld [vmem:[%s867 + $0x28] sm:$0xff]
      %v874 = vld [vmem:[%s867 + $0x30] sm:$0xff]
      %v875 = vld [vmem:[%s867 + $0x38] sm:$0xff]
      %v876 = vld [vmem:[%s867 + $0x40] sm:$0xff]
      %v877 = vld [vmem:[%s867 + $0x48] sm:$0xff]
      %v878 = vld [vmem:[%s867 + $0x50] sm:$0xff]
      %v879 = vld [vmem:[%s867 + $0x58] sm:$0xff]
      %v880 = vld [vmem:[%s867 + $0x60] sm:$0xff]
      %v881 = vld [vmem:[%s867 + $0x68] sm:$0xff]
      %v882 = vld [vmem:[%s867 + $0x70] sm:$0xff]
      %v883 = vld [vmem:[%s867 + $0x78] sm:$0xff]
      %884 = vmatprep.subr.mxu0 0.0
      %885 = vmatpush1.msra.mxu0 %v868
      %886 = vmatprep.subr.mxu0 0.0
      %887 = vmatpush1.msra.mxu0 %v869
      %888 = vmatprep.subr.mxu0 0.0
      %889 = vmatpush1.msra.mxu0 %v870
      %890 = vmatprep.subr.mxu0 0.0
      %891 = vmatpush1.msra.mxu0 %v871
      %892 = vmatprep.subr.mxu0 0.0
      %893 = vmatpush1.msra.mxu0 %v872
      %894 = vmatprep.subr.mxu0 0.0
      %895 = vmatpush1.msra.mxu0 %v873
      %896 = vmatprep.subr.mxu0 0.0
      %897 = vmatpush1.msra.mxu0 %v874
      %898 = vmatprep.subr.mxu0 0.0
      %899 = vmatpush1.msra.mxu0 %v875
      %900 = vmatprep.subr.mxu0 0.0
      %901 = vmatpush1.msra.mxu0 %v876
      %902 = vmatprep.subr.mxu0 0.0
      %903 = vmatpush1.msra.mxu0 %v877
      %904 = vmatprep.subr.mxu0 0.0
      %905 = vmatpush1.msra.mxu0 %v878
      %906 = vmatprep.subr.mxu0 0.0
      %907 = vmatpush1.msra.mxu0 %v879
      %908 = vmatprep.subr.mxu0 0.0
      %909 = vmatpush1.msra.mxu0 %v880
      %910 = vmatprep.subr.mxu0 0.0
      %911 = vmatpush1.msra.mxu0 %v881
      %912 = vmatprep.subr.mxu0 0.0
      %913 = vmatpush1.msra.mxu0 %v882
      %914 = vmatprep.subr.mxu0 0.0
      %915 = vmatpush1.msra.mxu0 %v883
      %916 = vmatprep.subr.mxu0 0.0
      %917 = vmatpush1.msra.mxu0 0.0
      %918 = vmatprep.subr.mxu0 0.0
      %919 = vmatpush1.msra.mxu0 0.0
      %920 = vmatprep.subr.mxu0 0.0
      %921 = vmatpush1.msra.mxu0 0.0
      %922 = vmatprep.subr.mxu0 0.0
      %923 = vmatpush1.msra.mxu0 0.0
      %924 = vmatprep.subr.mxu0 0.0
      %925 = vmatpush1.msra.mxu0 0.0
      %926 = vmatprep.subr.mxu0 0.0
      %927 = vmatpush1.msra.mxu0 0.0
      %928 = vmatprep.subr.mxu0 0.0
      %929 = vmatpush1.msra.mxu0 0.0
      %930 = vmatprep.subr.mxu0 0.0
      %931 = vmatpush1.msra.mxu0 0.0
      %932 = vmatprep.subr.mxu0 0.0
      %933 = vmatpush1.msra.mxu0 0.0
      %934 = vmatprep.subr.mxu0 0.0
      %935 = vmatpush1.msra.mxu0 0.0
      %936 = vmatprep.subr.mxu0 0.0
      %937 = vmatpush1.msra.mxu0 0.0
      %938 = vmatprep.subr.mxu0 0.0
      %939 = vmatpush1.msra.mxu0 0.0
      %940 = vmatprep.subr.mxu0 0.0
      %941 = vmatpush1.msra.mxu0 0.0
      %942 = vmatprep.subr.mxu0 0.0
      %943 = vmatpush1.msra.mxu0 0.0
      %944 = vmatprep.subr.mxu0 0.0
      %945 = vmatpush1.msra.mxu0 0.0
      %946 = vmatprep.subr.mxu0 0.0
      %947 = vmatpush1.msra.mxu0 0.0
      %948 = vmatprep.mubr.f32.mxu0 0.0
      %949 = vmatmul.mubr.f32.gmra.mrb[0].mxu0 %v862
      %v950 = vpop.f32.mrb[0].mxu0
      %v951 = vadd.f32 0.0, %v950
      %v952 = vpop.f32.mrb[0].mxu0
      %953 = vmatprep.mubr.f32.mxu0 0.0
      %954 = vmatmul.mubr.f32.gmra.mrb[0].mxu0 %v863
      %v955 = vpop.f32.mrb[0].mxu0
      %v956 = vadd.f32 0.0, %v955
      %v957 = vpop.f32.mrb[0].mxu0
      %958 = vmatprep.mubr.f32.mxu0 0.0
      %959 = vmatmul.mubr.f32.gmra.mrb[0].mxu0 %v864
      %v960 = vpop.f32.mrb[0].mxu0
      %v961 = vadd.f32 0.0, %v960
      %v962 = vpop.f32.mrb[0].mxu0
      %963 = vmatprep.mubr.f32.mxu0 0.0
      %964 = vmatmul.mubr.f32.gmra.mrb[0].mxu0 %v865
      %v965 = vpop.f32.mrb[0].mxu0
      %v966 = vadd.f32 0.0, %v965
      %v967 = vpop.f32.mrb[0].mxu0
      %968 = vmatprep.mubr.f32.mxu0 0.0
      %969 = vmatmul.mubr.f32.gmra.mrb[0].mxu0 %v866
      %v970 = vpop.f32.mrb[0].mxu0
      %v971 = vadd.f32 0.0, %v970
      %v972 = vpop.f32.mrb[0].mxu0
      %973 = vdwg.mxu0
      %v974 = vadd.f32 %v857, %v951
      %v975 = vadd.f32 %v858, %v956
      %v976 = vadd.f32 %v859, %v961
      %v977 = vadd.f32 %v860, %v966
      %v978 = vadd.f32 %v861, %v971
      %v979 = vld [vmem:[%s165 + $0xf] sm:$0xff]
      %v980 = vld [vmem:[%s165 + $0x17] sm:$0xff]
      %v981 = vld [vmem:[%s165 + $0x1f] sm:$0xff]
      %v982 = vld [vmem:[%s165 + $0x27] sm:$0xff]
      %v983 = vld [vmem:[%s165 + $0x2f] sm:$0xff]
      %s984 = scalar_lea.vmem %s1, 896
      %v985 = vld [vmem:[%s984] sm:$0xff]
      %v986 = vld [vmem:[%s984 + $0x8] sm:$0xff]
      %v987 = vld [vmem:[%s984 + $0x10] sm:$0xff]
      %v988 = vld [vmem:[%s984 + $0x18] sm:$0xff]
      %v989 = vld [vmem:[%s984 + $0x20] sm:$0xff]
      %v990 = vld [vmem:[%s984 + $0x28] sm:$0xff]
      %v991 = vld [vmem:[%s984 + $0x30] sm:$0xff]
      %v992 = vld [vmem:[%s984 + $0x38] sm:$0xff]
      %v993 = vld [vmem:[%s984 + $0x40] sm:$0xff]
      %v994 = vld [vmem:[%s984 + $0x48] sm:$0xff]
      %v995 = vld [vmem:[%s984 + $0x50] sm:$0xff]
      %v996 = vld [vmem:[%s984 + $0x58] sm:$0xff]
      %v997 = vld [vmem:[%s984 + $0x60] sm:$0xff]
      %v998 = vld [vmem:[%s984 + $0x68] sm:$0xff]
      %v999 = vld [vmem:[%s984 + $0x70] sm:$0xff]
      %v1000 = vld [vmem:[%s984 + $0x78] sm:$0xff]
      %1001 = vmatprep.subr.mxu0 0.0
      %1002 = vmatpush1.msra.mxu0 %v985
      %1003 = vmatprep.subr.mxu0 0.0
      %1004 = vmatpush1.msra.mxu0 %v986
      %1005 = vmatprep.subr.mxu0 0.0
      %1006 = vmatpush1.msra.mxu0 %v987
      %1007 = vmatprep.subr.mxu0 0.0
      %1008 = vmatpush1.msra.mxu0 %v988
      %1009 = vmatprep.subr.mxu0 0.0
      %1010 = vmatpush1.msra.mxu0 %v989
      %1011 = vmatprep.subr.mxu0 0.0
      %1012 = vmatpush1.msra.mxu0 %v990
      %1013 = vmatprep.subr.mxu0 0.0
      %1014 = vmatpush1.msra.mxu0 %v991
      %1015 = vmatprep.subr.mxu0 0.0
      %1016 = vmatpush1.msra.mxu0 %v992
      %1017 = vmatprep.subr.mxu0 0.0
      %1018 = vmatpush1.msra.mxu0 %v993
      %1019 = vmatprep.subr.mxu0 0.0
      %1020 = vmatpush1.msra.mxu0 %v994
      %1021 = vmatprep.subr.mxu0 0.0
      %1022 = vmatpush1.msra.mxu0 %v995
      %1023 = vmatprep.subr.mxu0 0.0
      %1024 = vmatpush1.msra.mxu0 %v996
      %1025 = vmatprep.subr.mxu0 0.0
      %1026 = vmatpush1.msra.mxu0 %v997
      %1027 = vmatprep.subr.mxu0 0.0
      %1028 = vmatpush1.msra.mxu0 %v998
      %1029 = vmatprep.subr.mxu0 0.0
      %1030 = vmatpush1.msra.mxu0 %v999
      %1031 = vmatprep.subr.mxu0 0.0
      %1032 = vmatpush1.msra.mxu0 %v1000
      %1033 = vmatprep.subr.mxu0 0.0
      %1034 = vmatpush1.msra.mxu0 0.0
      %1035 = vmatprep.subr.mxu0 0.0
      %1036 = vmatpush1.msra.mxu0 0.0
      %1037 = vmatprep.subr.mxu0 0.0
      %1038 = vmatpush1.msra.mxu0 0.0
      %1039 = vmatprep.subr.mxu0 0.0
      %1040 = vmatpush1.msra.mxu0 0.0
      %1041 = vmatprep.subr.mxu0 0.0
      %1042 = vmatpush1.msra.mxu0 0.0
      %1043 = vmatprep.subr.mxu0 0.0
      %1044 = vmatpush1.msra.mxu0 0.0
      %1045 = vmatprep.subr.mxu0 0.0
      %1046 = vmatpush1.msra.mxu0 0.0
      %1047 = vmatprep.subr.mxu0 0.0
      %1048 = vmatpush1.msra.mxu0 0.0
      %1049 = vmatprep.subr.mxu0 0.0
      %1050 = vmatpush1.msra.mxu0 0.0
      %1051 = vmatprep.subr.mxu0 0.0
      %1052 = vmatpush1.msra.mxu0 0.0
      %1053 = vmatprep.subr.mxu0 0.0
      %1054 = vmatpush1.msra.mxu0 0.0
      %1055 = vmatprep.subr.mxu0 0.0
      %1056 = vmatpush1.msra.mxu0 0.0
      %1057 = vmatprep.subr.mxu0 0.0
      %1058 = vmatpush1.msra.mxu0 0.0
      %1059 = vmatprep.subr.mxu0 0.0
      %1060 = vmatpush1.msra.mxu0 0.0
      %1061 = vmatprep.subr.mxu0 0.0
      %1062 = vmatpush1.msra.mxu0 0.0
      %1063 = vmatprep.subr.mxu0 0.0
      %1064 = vmatpush1.msra.mxu0 0.0
      %1065 = vmatprep.mubr.f32.mxu0 0.0
      %1066 = vmatmul.mubr.f32.gmra.mrb[0].mxu0 %v979
      %v1067 = vpop.f32.mrb[0].mxu0
      %v1068 = vadd.f32 0.0, %v1067
      %v1069 = vpop.f32.mrb[0].mxu0
      %1070 = vmatprep.mubr.f32.mxu0 0.0
      %1071 = vmatmul.mubr.f32.gmra.mrb[0].mxu0 %v980
      %v1072 = vpop.f32.mrb[0].mxu0
      %v1073 = vadd.f32 0.0, %v1072
      %v1074 = vpop.f32.mrb[0].mxu0
      %1075 = vmatprep.mubr.f32.mxu0 0.0
      %1076 = vmatmul.mubr.f32.gmra.mrb[0].mxu0 %v981
      %v1077 = vpop.f32.mrb[0].mxu0
      %v1078 = vadd.f32 0.0, %v1077
      %v1079 = vpop.f32.mrb[0].mxu0
      %1080 = vmatprep.mubr.f32.mxu0 0.0
      %1081 = vmatmul.mubr.f32.gmra.mrb[0].mxu0 %v982
      %v1082 = vpop.f32.mrb[0].mxu0
      %v1083 = vadd.f32 0.0, %v1082
      %v1084 = vpop.f32.mrb[0].mxu0
      %1085 = vmatprep.mubr.f32.mxu0 0.0
      %1086 = vmatmul.mubr.f32.gmra.mrb[0].mxu0 %v983
      %v1087 = vpop.f32.mrb[0].mxu0
      %v1088 = vadd.f32 0.0, %v1087
      %v1089 = vpop.f32.mrb[0].mxu0
      %1090 = vdwg.mxu0
      %v1091 = vadd.f32 %v974, %v1068
      %v1092 = vadd.f32 %v975, %v1073
      %v1093 = vadd.f32 %v976, %v1078
      %v1094 = vadd.f32 %v977, %v1083
      %v1095 = vadd.f32 %v978, %v1088
      %v1096 = vld [vmem:[%s165 + $0x10] sm:$0xff]
      %v1097 = vld [vmem:[%s165 + $0x18] sm:$0xff]
      %v1098 = vld [vmem:[%s165 + $0x20] sm:$0xff]
      %v1099 = vld [vmem:[%s165 + $0x28] sm:$0xff]
      %v1100 = vld [vmem:[%s165 + $0x30] sm:$0xff]
      %s1101 = scalar_lea.vmem %s1, 1024
      %v1102 = vld [vmem:[%s1101] sm:$0xff]
      %v1103 = vld [vmem:[%s1101 + $0x8] sm:$0xff]
      %v1104 = vld [vmem:[%s1101 + $0x10] sm:$0xff]
      %v1105 = vld [vmem:[%s1101 + $0x18] sm:$0xff]
      %v1106 = vld [vmem:[%s1101 + $0x20] sm:$0xff]
      %v1107 = vld [vmem:[%s1101 + $0x28] sm:$0xff]
      %v1108 = vld [vmem:[%s1101 + $0x30] sm:$0xff]
      %v1109 = vld [vmem:[%s1101 + $0x38] sm:$0xff]
      %v1110 = vld [vmem:[%s1101 + $0x40] sm:$0xff]
      %v1111 = vld [vmem:[%s1101 + $0x48] sm:$0xff]
      %v1112 = vld [vmem:[%s1101 + $0x50] sm:$0xff]
      %v1113 = vld [vmem:[%s1101 + $0x58] sm:$0xff]
      %v1114 = vld [vmem:[%s1101 + $0x60] sm:$0xff]
      %v1115 = vld [vmem:[%s1101 + $0x68] sm:$0xff]
      %v1116 = vld [vmem:[%s1101 + $0x70] sm:$0xff]
      %v1117 = vld [vmem:[%s1101 + $0x78] sm:$0xff]
      %1118 = vmatprep.subr.mxu0 0.0
      %1119 = vmatpush1.msra.mxu0 %v1102
      %1120 = vmatprep.subr.mxu0 0.0
      %1121 = vmatpush1.msra.mxu0 %v1103
      %1122 = vmatprep.subr.mxu0 0.0
      %1123 = vmatpush1.msra.mxu0 %v1104
      %1124 = vmatprep.subr.mxu0 0.0
      %1125 = vmatpush1.msra.mxu0 %v1105
      %1126 = vmatprep.subr.mxu0 0.0
      %1127 = vmatpush1.msra.mxu0 %v1106
      %1128 = vmatprep.subr.mxu0 0.0
      %1129 = vmatpush1.msra.mxu0 %v1107
      %1130 = vmatprep.subr.mxu0 0.0
      %1131 = vmatpush1.msra.mxu0 %v1108
      %1132 = vmatprep.subr.mxu0 0.0
      %1133 = vmatpush1.msra.mxu0 %v1109
      %1134 = vmatprep.subr.mxu0 0.0
      %1135 = vmatpush1.msra.mxu0 %v1110
      %1136 = vmatprep.subr.mxu0 0.0
      %1137 = vmatpush1.msra.mxu0 %v1111
      %1138 = vmatprep.subr.mxu0 0.0
      %1139 = vmatpush1.msra.mxu0 %v1112
      %1140 = vmatprep.subr.mxu0 0.0
      %1141 = vmatpush1.msra.mxu0 %v1113
      %1142 = vmatprep.subr.mxu0 0.0
      %1143 = vmatpush1.msra.mxu0 %v1114
      %1144 = vmatprep.subr.mxu0 0.0
      %1145 = vmatpush1.msra.mxu0 %v1115
      %1146 = vmatprep.subr.mxu0 0.0
      %1147 = vmatpush1.msra.mxu0 %v1116
      %1148 = vmatprep.subr.mxu0 0.0
      %1149 = vmatpush1.msra.mxu0 %v1117
      %1150 = vmatprep.subr.mxu0 0.0
      %1151 = vmatpush1.msra.mxu0 0.0
      %1152 = vmatprep.subr.mxu0 0.0
      %1153 = vmatpush1.msra.mxu0 0.0
      %1154 = vmatprep.subr.mxu0 0.0
      %1155 = vmatpush1.msra.mxu0 0.0
      %1156 = vmatprep.subr.mxu0 0.0
      %1157 = vmatpush1.msra.mxu0 0.0
      %1158 = vmatprep.subr.mxu0 0.0
      %1159 = vmatpush1.msra.mxu0 0.0
      %1160 = vmatprep.subr.mxu0 0.0
      %1161 = vmatpush1.msra.mxu0 0.0
      %1162 = vmatprep.subr.mxu0 0.0
      %1163 = vmatpush1.msra.mxu0 0.0
      %1164 = vmatprep.subr.mxu0 0.0
      %1165 = vmatpush1.msra.mxu0 0.0
      %1166 = vmatprep.subr.mxu0 0.0
      %1167 = vmatpush1.msra.mxu0 0.0
      %1168 = vmatprep.subr.mxu0 0.0
      %1169 = vmatpush1.msra.mxu0 0.0
      %1170 = vmatprep.subr.mxu0 0.0
      %1171 = vmatpush1.msra.mxu0 0.0
      %1172 = vmatprep.subr.mxu0 0.0
      %1173 = vmatpush1.msra.mxu0 0.0
      %1174 = vmatprep.subr.mxu0 0.0
      %1175 = vmatpush1.msra.mxu0 0.0
      %1176 = vmatprep.subr.mxu0 0.0
      %1177 = vmatpush1.msra.mxu0 0.0
      %1178 = vmatprep.subr.mxu0 0.0
      %1179 = vmatpush1.msra.mxu0 0.0
      %1180 = vmatprep.subr.mxu0 0.0
      %1181 = vmatpush1.msra.mxu0 0.0
      %1182 = vmatprep.mubr.f32.mxu0 0.0
      %1183 = vmatmul.mubr.f32.gmra.mrb[0].mxu0 %v1096
      %v1184 = vpop.f32.mrb[0].mxu0
      %v1185 = vadd.f32 0.0, %v1184
      %v1186 = vpop.f32.mrb[0].mxu0
      %1187 = vmatprep.mubr.f32.mxu0 0.0
      %1188 = vmatmul.mubr.f32.gmra.mrb[0].mxu0 %v1097
      %v1189 = vpop.f32.mrb[0].mxu0
      %v1190 = vadd.f32 0.0, %v1189
      %v1191 = vpop.f32.mrb[0].mxu0
      %1192 = vmatprep.mubr.f32.mxu0 0.0
      %1193 = vmatmul.mubr.f32.gmra.mrb[0].mxu0 %v1098
      %v1194 = vpop.f32.mrb[0].mxu0
      %v1195 = vadd.f32 0.0, %v1194
      %v1196 = vpop.f32.mrb[0].mxu0
      %1197 = vmatprep.mubr.f32.mxu0 0.0
      %1198 = vmatmul.mubr.f32.gmra.mrb[0].mxu0 %v1099
      %v1199 = vpop.f32.mrb[0].mxu0
      %v1200 = vadd.f32 0.0, %v1199
      %v1201 = vpop.f32.mrb[0].mxu0
      %1202 = vmatprep.mubr.f32.mxu0 0.0
      %1203 = vmatmul.mubr.f32.gmra.mrb[0].mxu0 %v1100
      %v1204 = vpop.f32.mrb[0].mxu0
      %v1205 = vadd.f32 0.0, %v1204
      %v1206 = vpop.f32.mrb[0].mxu0
      %1207 = vdwg.mxu0
      %v1208 = vadd.f32 %v1091, %v1185
      %v1209 = vadd.f32 %v1092, %v1190
      %v1210 = vadd.f32 %v1093, %v1195
      %v1211 = vadd.f32 %v1094, %v1200
      %v1212 = vadd.f32 %v1095, %v1205
      %1213 = vrot.lane.b32.xlu0 %v1208, 32
      %v1214 = vpop.permute.xlu0 %1213
      %1215 = vrot.lane.b32.xlu0 %v1209, 32
      %v1216 = vpop.permute.xlu0 %1215
      %1217 = vrot.lane.b32.xlu0 %v1210, 32
      %v1218 = vpop.permute.xlu0 %1217
      %1219 = vrot.lane.b32.xlu0 %v1211, 32
      %v1220 = vpop.permute.xlu0 %1219
      %1221 = vrot.lane.b32.xlu0 %v1212, 32
      %v1222 = vpop.permute.xlu0 %1221
      %v1223 = vmax.f32 %v1208, %v1214
      %v1224 = vmax.f32 %v1209, %v1216
      %v1225 = vmax.f32 %v1210, %v1218
      %v1226 = vmax.f32 %v1211, %v1220
      %v1227 = vmax.f32 %v1212, %v1222
      %1228 = vrot.lane.b32.xlu0 %v1223, 64
      %v1229 = vpop.permute.xlu0 %1228
      %1230 = vrot.lane.b32.xlu0 %v1224, 64
      %v1231 = vpop.permute.xlu0 %1230
      %1232 = vrot.lane.b32.xlu0 %v1225, 64
      %v1233 = vpop.permute.xlu0 %1232
      %1234 = vrot.lane.b32.xlu0 %v1226, 64
      %v1235 = vpop.permute.xlu0 %1234
      %1236 = vrot.lane.b32.xlu0 %v1227, 64
      %v1237 = vpop.permute.xlu0 %1236
      %v1238 = vmax.f32 %v1223, %v1229
      %v1239 = vmax.f32 %v1224, %v1231
      %v1240 = vmax.f32 %v1225, %v1233
      %v1241 = vmax.f32 %v1226, %v1235
      %v1242 = vmax.f32 %v1227, %v1237
      %v1243 = vld [vmem:[%s2] sm:$0x1]
      %v1245 = vlaneseq
      %v1246 = vshrl.u32 %v1245, 7
      %v1247 = vsub.s32 0, %v1246
      %v1248 = vrot.slane %v1243, %v1247
      %v1250 = vadd.f32 %v1238, %v1248
      %v1251 = vadd.f32 %v1239, %v1248
      %v1252 = vadd.f32 %v1240, %v1248
      %v1253 = vadd.f32 %v1241, %v1248
      %v1254 = vadd.f32 %v1242, %v1248
      %v1255 = vmax.f32 %v1250, 0.0
      %v1256 = vmax.f32 %v1251, 0.0
      %v1257 = vmax.f32 %v1252, 0.0
      %v1258 = vmax.f32 %v1253, 0.0
      %v1259 = vmax.f32 %v1254, 0.0
      %1260 = vst [vmem:[%s170] sm:$0xff] %v1255
      %1261 = vst [vmem:[%s170 + $0x8] sm:$0xff] %v1256
      %1262 = vst [vmem:[%s170 + $0x10] sm:$0xff] %v1257
      %1263 = vst [vmem:[%s170 + $0x18] sm:$0xff] %v1258
      %1264 = vst [vmem:[%s170 + $0x20] sm:$0xff] %v1259
      %p1265 = scmp.lt.s32.totalorder %s14, 1
      %s1266 = scalar_select %p1265, %s14, 1
      %s1267 = smul.addr %s1266, 5
      %s1268 = smul.addr %s1267, 8
      %s1269 = scalar_lea.vmem %s3, %s1268
      // Predicated region
      $region33: #{cnn_web_forward.4} parent=31 // pred_check
        %p1270 = pneg %p100
      $region34: #{cnn_web_forward.4} parent=31 // pred_check_branch
        %1272 = sbr.rel (%p1270) target = $region36
      $region35: #{cnn_web_forward.4} parent=31 // pred_region
        _
      $region36: #{cnn_web_forward.4} parent=31 // pred_fallthru
        _
    $region32: #{cnn_web_forward.4} parent=5 // pred_fallthru
      _
    %p1273 = scmp.le.s32.totalorder 2, %s9
    // Predicated region
    $region37: #{cnn_web_forward.4} parent=5 // pred_check
      %p1274 = pneg %p1273
    $region38: #{cnn_web_forward.4} parent=5 // pred_check_branch
      %1276 = sbr.rel (%p1274) target = $region40
    $region39: #{cnn_web_forward.4} parent=5 // pred_region
      %s1277 = ssub.s32 %s9, 2
      // Predicated region
      $region41: #{cnn_web_forward.4} parent=39 // pred_check
        %p1278 = pneg %p106
      $region42: #{cnn_web_forward.4} parent=39 // pred_check_branch
        %1280 = sbr.rel (%p1278) target = $region44
      $region43: #{cnn_web_forward.4} parent=39 // pred_region
        %p1281 = scmp.lt.s32.totalorder %s15, 1
        %s1282 = scalar_select %p1281, %s15, 1
        %s1283 = smul.addr %s1282, 5
        %s1284 = smul.addr %s1283, 8
        %s1285 = scalar_lea.vmem %s3, %s1284
      $region44: #{cnn_web_forward.4} parent=39 // pred_fallthru
        _
    $region40: #{cnn_web_forward.4} parent=5 // pred_fallthru
      _
  $region6: #{cnn_web_forward.4} parent=0 // loop_footer
    %s13 = sadd.s32 1, %s9
  $region7: #{cnn_web_forward.4} parent=0 // loop_footer_branch
    %8 = sbr.rel target = $region3
  $region8: #{cnn_web_forward.4} parent=0 // loop_exit
    _

</llo_original>
